<compile_context>
chip_gen: v7x
topology: tpu7x:2x2x1
jax: 0.10.0
libtpu: 0.0.40
codegen_flags: <defaults>
</compile_context>

<pallas_src>
import functools

import jax
import jax.numpy as jnp
from jax.experimental import pallas as pl
from jax.experimental.pallas import tpu as pltpu

HIDDEN = 768          # BERT hidden size
W2V_DIM = 300         # w2v feature dim (module default)
W2V_PAD = 384         # 300 padded up to 3*128 lanes
FC1_OUT = 512
NUM_CLASSES = 2
OUT_PAD = 128         # 2 padded up to a full lane vreg
TB_MAX = 512          # max batch tile (rows) per grid step
NEG_BIG = -1e30


def _round_up(x, m):
    return ((x + m - 1) // m) * m


@functools.lru_cache(maxsize=1)
def _tanh_in_bf16():
    """bf16 EUP path exists on v6e/v7x; keep f32 elementwise on v5e & unknown."""
    try:
        kind = jax.devices()[0].device_kind.lower()
    except Exception:
        return False
    return ("v6" in kind) or ("v7" in kind)


def bert_arch_kernel(pooled_ref, w2v_ref,
                     wp_ref, bp_ref,
                     w1a_ref, w1b_ref, b1_ref,
                     w2_ref, b2_ref,
                     out_ref, *, tanh_bf16):
    """Fused BERT pooler + classification head (one batch tile per grid step).

    pooled_ref : (TB, 768)       bf16  mean-pooled token embeddings
    w2v_ref    : (TB, 384)       bf16  w2v features (zero-padded 300->384)
    wp_ref     : (768, 768)      bf16  pooler weight,  bp_ref: (1, 768) f32
    w1a_ref    : (768, 512)      bf16  fc1 rows for the BERT half of concat
    w1b_ref    : (384, 512)      bf16  fc1 rows for the w2v half (zero-padded)
    b1_ref     : (1, 512)        f32
    w2_ref     : (512, 128)      bf16  fc2 weight (cols 2..127 zero)
    b2_ref     : (1, 128)        f32   fc2 bias (cols 2..127 = -1e30, mask baked in)
    out_ref    : (TB, 128)       f32   log-softmax (only cols 0..1 meaningful)
    """
    # ---- BERT pooler: tanh(dense(sequence summary)) -> cls_hs -----------
    pre = (jnp.dot(pooled_ref[...], wp_ref[...],
                   preferred_element_type=jnp.float32)
           + bp_ref[...])
    if tanh_bf16:
        cls_hs = jnp.tanh(pre.astype(jnp.bfloat16))        # bf16 EUP (v6e/v7x)
    else:
        cls_hs = jnp.tanh(pre).astype(jnp.bfloat16)        # f32 EUP (v5e)

    # ---- fc1 on concat([cls_hs, w2v], axis=1) as split matmul ------------
    #   concat(a, b) @ W1 == a @ W1[:768] + b @ W1[768:]
    # (zero-padded w2v columns hit zero-padded w1b rows -> exact.)
    h = (jnp.dot(cls_hs, w1a_ref[...], preferred_element_type=jnp.float32)
         + jnp.dot(w2v_ref[...], w1b_ref[...],
                   preferred_element_type=jnp.float32)
         + b1_ref[...])

    # ReLU
    h = jnp.maximum(h, 0.0)

    # Dropout(p=0.1): identity in eval/inference mode (no RNG applied).

    # ---- fc2 (lane-dense, 128-wide padded output) ------------------------
    # Padded matmul columns are exactly 0 (zero weight cols, h >= 0); the
    # -1e30 baked into b2's padded columns masks them for the logsumexp.
    logits = (jnp.dot(h.astype(jnp.bfloat16), w2_ref[...],
                      preferred_element_type=jnp.float32)
              + b2_ref[...])

    # LogSoftmax over dim=1 (f32 epilogue)
    m = jnp.max(logits, axis=1, keepdims=True)
    lse = m + jnp.log(jnp.sum(jnp.exp(logits - m), axis=1, keepdims=True))
    out_ref[...] = logits - lse


@jax.jit
def bert_arch_forward(sent_id, mask, w2v_features, params):
    """Full BERT_Arch.forward: encoder stand-in (glue) + Pallas head kernel."""
    emb_table = params["emb_table"]                            # (V, 768) bf16

    # ---- plain-JAX glue: encoder stand-in (bf16 streams, f32 accumulation) --
    tok_emb = jnp.take(emb_table, sent_id, axis=0)             # (B, S, 768) bf16
    mask_bf = mask.astype(jnp.bfloat16)                        # (B, S)
    summed = jnp.einsum("bsd,bs->bd", tok_emb, mask_bf,
                        preferred_element_type=jnp.float32)    # (B, 768) f32
    counts = jnp.maximum(mask.astype(jnp.float32).sum(axis=1, keepdims=True), 1.0)
    pooled = (summed / counts).astype(jnp.bfloat16)            # (B, 768) bf16

    w2v = jnp.pad(w2v_features.astype(jnp.bfloat16),
                  ((0, 0), (0, W2V_PAD - W2V_DIM)))            # (B, 384) bf16

    # ---- batch tiling: >= 2 grid steps so "parallel" shards both v7x TCs ----
    B = pooled.shape[0]
    B8 = _round_up(B, 8)
    if B8 <= 2 * TB_MAX:
        TB = max(8, _round_up(pl.cdiv(B8, 2), 8))
    else:
        TB = TB_MAX
    n_steps = max(2, pl.cdiv(B, TB))
    Bp = n_steps * TB
    pad = Bp - B
    pooled_p = jnp.pad(pooled, ((0, pad), (0, 0)))
    w2v_p = jnp.pad(w2v, ((0, pad), (0, 0)))

    # ---- specs: activations batch-blocked, weights pinned whole in VMEM -----
    resident = pl.BlockSpec(memory_space=pltpu.MemorySpace.VMEM)
    in_specs = [
        pl.BlockSpec((TB, HIDDEN), lambda i: (i, 0)),          # pooled (bf16)
        pl.BlockSpec((TB, W2V_PAD), lambda i: (i, 0)),         # w2v    (bf16)
        resident,                                              # wp
        resident,                                              # bp
        resident,                                              # w1a
        resident,                                              # w1b
        resident,                                              # b1
        resident,                                              # w2
        resident,                                              # b2
    ]
    out_specs = pl.BlockSpec((TB, OUT_PAD), lambda i: (i, 0))

    flops = 2 * Bp * (HIDDEN * HIDDEN + HIDDEN * FC1_OUT
                      + W2V_PAD * FC1_OUT + FC1_OUT * OUT_PAD)
    weight_bytes = 2 * (HIDDEN * HIDDEN + HIDDEN * FC1_OUT
                        + W2V_PAD * FC1_OUT + FC1_OUT * OUT_PAD) \
        + 4 * (HIDDEN + FC1_OUT + OUT_PAD)
    act_bytes = Bp * (2 * HIDDEN + 2 * W2V_PAD + 4 * OUT_PAD)
    cost = pl.CostEstimate(
        flops=flops,
        transcendentals=Bp * (HIDDEN + OUT_PAD + 1),   # tanh + exp + log per row
        bytes_accessed=weight_bytes + act_bytes)

    kernel = functools.partial(bert_arch_kernel, tanh_bf16=_tanh_in_bf16())

    out_p = pl.pallas_call(
        kernel,
        out_shape=jax.ShapeDtypeStruct((Bp, OUT_PAD), jnp.float32),
        grid=(n_steps,),
        in_specs=in_specs,
        out_specs=out_specs,
        compiler_params=pltpu.CompilerParams(
            dimension_semantics=("parallel",),
            vmem_limit_bytes=32 << 20,
        ),
        cost_estimate=cost,
    )(pooled_p, w2v_p,
      params["wp"], params["bp"],
      params["w1a"], params["w1b"], params["b1"],
      params["w2"], params["b2"])

    return out_p[:B, :NUM_CLASSES]


def init_params(key, vocab_size):
    """Deterministic synthetic parameter init (shapes from BERT_Arch.__init__)."""
    ks = jax.random.split(key, 6)
    scale = 0.02

    emb_table = (scale * jax.random.normal(ks[0], (vocab_size, HIDDEN),
                                           jnp.float32)).astype(jnp.bfloat16)

    wp = (scale * jax.random.normal(ks[1], (HIDDEN, HIDDEN),
                                    jnp.float32)).astype(jnp.bfloat16)
    bp = jnp.zeros((1, HIDDEN), jnp.float32)

    w1 = scale * jax.random.normal(ks[2], (HIDDEN + W2V_DIM, FC1_OUT),
                                   jnp.float32)
    w1a = w1[:HIDDEN].astype(jnp.bfloat16)                       # (768, 512)
    w1b = jnp.pad(w1[HIDDEN:],                                   # (384, 512)
                  ((0, W2V_PAD - W2V_DIM), (0, 0))).astype(jnp.bfloat16)
    b1 = scale * jax.random.normal(ks[3], (1, FC1_OUT), jnp.float32)

    w2 = scale * jax.random.normal(ks[4], (FC1_OUT, NUM_CLASSES), jnp.float32)
    w2p = jnp.pad(w2, ((0, 0), (0, OUT_PAD - NUM_CLASSES))).astype(jnp.bfloat16)
    b2 = scale * jax.random.normal(ks[5], (1, NUM_CLASSES), jnp.float32)
    # Bake the pad-column mask into the bias: padded matmul cols are exactly 0,
    # so a -1e30 bias removes them from the logsumexp with zero in-kernel work.
    b2p = jnp.concatenate(
        [b2, jnp.full((1, OUT_PAD - NUM_CLASSES), NEG_BIG, jnp.float32)], axis=1)

    return {
        "emb_table": emb_table,
        "wp": wp, "bp": bp,
        "w1a": w1a, "w1b": w1b, "b1": b1,
        "w2": w2p, "b2": b2p,
    }


if __name__ == "__main__":
    key = jax.random.PRNGKey(0)
    k_par, k_tok, k_w2v = jax.random.split(key, 3)

    batch, seq, vocab = 2, 8, 64
    params = init_params(k_par, vocab)

    sent_id = jax.random.randint(k_tok, (batch, seq), 0, vocab, dtype=jnp.int32)
    mask = jnp.ones((batch, seq), jnp.int32).at[:, seq - 2:].set(0)  # last 2 = pad
    w2v_features = jax.random.normal(k_w2v, (batch, W2V_DIM), jnp.float32)

    out = bert_arch_forward(sent_id, mask, w2v_features, params)
    out = jax.block_until_ready(out)

    assert out.shape == (batch, NUM_CLASSES)
    # log_softmax rows must exponentiate-and-sum to 1
    assert jnp.allclose(jnp.exp(out).sum(axis=1), 1.0, atol=1e-5)

    print("KERNEL_OK")
</pallas_src>

<mosaic_0001>
module attributes {stable_mosaic.version = 11 : i64} {
  func.func @bert_arch_kernel(%arg0: i32, %arg1: memref<8x768xbf16, #tpu.memory_space<vmem>>, %arg2: memref<8x384xbf16, #tpu.memory_space<vmem>>, %arg3: memref<768x768xbf16, #tpu.memory_space<vmem>>, %arg4: memref<1x768xf32, #tpu.memory_space<vmem>>, %arg5: memref<768x512xbf16, #tpu.memory_space<vmem>>, %arg6: memref<384x512xbf16, #tpu.memory_space<vmem>>, %arg7: memref<1x512xf32, #tpu.memory_space<vmem>>, %arg8: memref<512x128xbf16, #tpu.memory_space<vmem>>, %arg9: memref<1x128xf32, #tpu.memory_space<vmem>>, %arg10: memref<8x128xf32, #tpu.memory_space<vmem>>) attributes {dimension_semantics = [#tpu.dimension_semantics<parallel>], iteration_bounds = array<i64: 2>, scalar_prefetch = 0 : i64, scratch_operands = 0 : i64, tpu.core_type = #tpu.core_type<tc>, window_params = [{transform_indices = @transform_0, window_bounds = array<i64: 8, 768>}, {transform_indices = @transform_1, window_bounds = array<i64: 8, 384>}, {pipeline_mode = #tpu.pipeline_mode<synchronous>, transform_indices = @transform_2, window_bounds = array<i64: 768, 768>}, {pipeline_mode = #tpu.pipeline_mode<synchronous>, transform_indices = @transform_3, window_bounds = array<i64: 1, 768>}, {pipeline_mode = #tpu.pipeline_mode<synchronous>, transform_indices = @transform_4, window_bounds = array<i64: 768, 512>}, {pipeline_mode = #tpu.pipeline_mode<synchronous>, transform_indices = @transform_5, window_bounds = array<i64: 384, 512>}, {pipeline_mode = #tpu.pipeline_mode<synchronous>, transform_indices = @transform_6, window_bounds = array<i64: 1, 512>}, {pipeline_mode = #tpu.pipeline_mode<synchronous>, transform_indices = @transform_7, window_bounds = array<i64: 512, 128>}, {pipeline_mode = #tpu.pipeline_mode<synchronous>, transform_indices = @transform_8, window_bounds = array<i64: 1, 128>}, {transform_indices = @transform_9, window_bounds = array<i64: 8, 128>}]} {
    %c0 = arith.constant 0 : index
    %c0_0 = arith.constant 0 : index
    %0 = vector.load %arg1[%c0, %c0_0] : memref<8x768xbf16, #tpu.memory_space<vmem>>, vector<8x768xbf16>
    %c0_1 = arith.constant 0 : index
    %c0_2 = arith.constant 0 : index
    %1 = vector.load %arg3[%c0_1, %c0_2] : memref<768x768xbf16, #tpu.memory_space<vmem>>, vector<768x768xbf16>
    %cst = arith.constant dense<0.000000e+00> : vector<8x768xf32>
    %2 = tpu.matmul %0, %1, %cst {dimension_numbers = #tpu.dot_dimension_numbers<[1], [0], [0], [1], [0, 0, 1, 1], [], []>} : vector<8x768xbf16>, vector<768x768xbf16>, vector<8x768xf32> -> vector<8x768xf32>
    %c0_3 = arith.constant 0 : index
    %c0_4 = arith.constant 0 : index
    %3 = vector.load %arg4[%c0_3, %c0_4] : memref<1x768xf32, #tpu.memory_space<vmem>>, vector<1x768xf32>
    %4 = vector.broadcast %3 : vector<1x768xf32> to vector<8x768xf32>
    %5 = arith.addf %2, %4 : vector<8x768xf32>
    %6 = math.tanh %5 : vector<8x768xf32>
    %7 = arith.truncf %6 : vector<8x768xf32> to vector<8x768xbf16>
    %c0_5 = arith.constant 0 : index
    %c0_6 = arith.constant 0 : index
    %8 = vector.load %arg5[%c0_5, %c0_6] : memref<768x512xbf16, #tpu.memory_space<vmem>>, vector<768x512xbf16>
    %cst_7 = arith.constant dense<0.000000e+00> : vector<8x512xf32>
    %9 = tpu.matmul %7, %8, %cst_7 {dimension_numbers = #tpu.dot_dimension_numbers<[1], [0], [0], [1], [0, 0, 1, 1], [], []>} : vector<8x768xbf16>, vector<768x512xbf16>, vector<8x512xf32> -> vector<8x512xf32>
    %c0_8 = arith.constant 0 : index
    %c0_9 = arith.constant 0 : index
    %10 = vector.load %arg2[%c0_8, %c0_9] : memref<8x384xbf16, #tpu.memory_space<vmem>>, vector<8x384xbf16>
    %c0_10 = arith.constant 0 : index
    %c0_11 = arith.constant 0 : index
    %11 = vector.load %arg6[%c0_10, %c0_11] : memref<384x512xbf16, #tpu.memory_space<vmem>>, vector<384x512xbf16>
    %cst_12 = arith.constant dense<0.000000e+00> : vector<8x512xf32>
    %12 = tpu.matmul %10, %11, %cst_12 {dimension_numbers = #tpu.dot_dimension_numbers<[1], [0], [0], [1], [0, 0, 1, 1], [], []>} : vector<8x384xbf16>, vector<384x512xbf16>, vector<8x512xf32> -> vector<8x512xf32>
    %13 = arith.addf %9, %12 : vector<8x512xf32>
    %c0_13 = arith.constant 0 : index
    %c0_14 = arith.constant 0 : index
    %14 = vector.load %arg7[%c0_13, %c0_14] : memref<1x512xf32, #tpu.memory_space<vmem>>, vector<1x512xf32>
    %15 = vector.broadcast %14 : vector<1x512xf32> to vector<8x512xf32>
    %16 = arith.addf %13, %15 : vector<8x512xf32>
    %cst_15 = arith.constant 0.000000e+00 : f32
    %17 = vector.broadcast %cst_15 : f32 to vector<8x512xf32>
    %18 = arith.maximumf %16, %17 : vector<8x512xf32>
    %19 = arith.truncf %18 : vector<8x512xf32> to vector<8x512xbf16>
    %c0_16 = arith.constant 0 : index
    %c0_17 = arith.constant 0 : index
    %20 = vector.load %arg8[%c0_16, %c0_17] : memref<512x128xbf16, #tpu.memory_space<vmem>>, vector<512x128xbf16>
    %cst_18 = arith.constant dense<0.000000e+00> : vector<8x128xf32>
    %21 = tpu.matmul %19, %20, %cst_18 {dimension_numbers = #tpu.dot_dimension_numbers<[1], [0], [0], [1], [0, 0, 1, 1], [], []>} : vector<8x512xbf16>, vector<512x128xbf16>, vector<8x128xf32> -> vector<8x128xf32>
    %c0_19 = arith.constant 0 : index
    %c0_20 = arith.constant 0 : index
    %22 = vector.load %arg9[%c0_19, %c0_20] : memref<1x128xf32, #tpu.memory_space<vmem>>, vector<1x128xf32>
    %23 = vector.broadcast %22 : vector<1x128xf32> to vector<8x128xf32>
    %24 = arith.addf %21, %23 : vector<8x128xf32>
    %cst_21 = arith.constant dense<0xFF800000> : vector<8xf32>
    %25 = vector.multi_reduction <maximumf>, %24, %cst_21 [1] : vector<8x128xf32> to vector<8xf32>
    %26 = vector.shape_cast %25 : vector<8xf32> to vector<8x1xf32>
    %27 = vector.broadcast %26 : vector<8x1xf32> to vector<8x128xf32>
    %28 = arith.subf %24, %27 : vector<8x128xf32>
    %29 = math.exp %28 : vector<8x128xf32>
    %cst_22 = arith.constant dense<0.000000e+00> : vector<8xf32>
    %30 = vector.multi_reduction <add>, %29, %cst_22 [1] : vector<8x128xf32> to vector<8xf32>
    %31 = vector.shape_cast %30 : vector<8xf32> to vector<8x1xf32>
    %32 = math.log %31 : vector<8x1xf32>
    %33 = arith.addf %26, %32 : vector<8x1xf32>
    %34 = vector.broadcast %33 : vector<8x1xf32> to vector<8x128xf32>
    %35 = arith.subf %24, %34 : vector<8x128xf32>
    %c0_23 = arith.constant 0 : index
    %c0_24 = arith.constant 0 : index
    %36 = vector.load %arg10[%c0_23, %c0_24] : memref<8x128xf32, #tpu.memory_space<vmem>>, vector<8x128xf32>
    tpu.vector_store %arg10[%c0_23, %c0_24], %35 {strides = array<i32>} : memref<8x128xf32, #tpu.memory_space<vmem>>, vector<8x128xf32>,
    return
  }
  func.func @transform_0(%arg0: i32) -> (i32, i32) {
    %c0_i32 = arith.constant 0 : i32
    %c0_i32_0 = arith.constant 0 : i32
    return %arg0, %c0_i32 : i32, i32
  }
  func.func @transform_1(%arg0: i32) -> (i32, i32) {
    %c0_i32 = arith.constant 0 : i32
    %c0_i32_0 = arith.constant 0 : i32
    return %arg0, %c0_i32 : i32, i32
  }
  func.func @transform_2(%arg0: i32) -> (i32, i32) {
    %c0_i32 = arith.constant 0 : i32
    %c0_i32_0 = arith.constant 0 : i32
    %c0_i32_1 = arith.constant 0 : i32
    return %c0_i32, %c0_i32_0 : i32, i32
  }
  func.func @transform_3(%arg0: i32) -> (i32, i32) {
    %c0_i32 = arith.constant 0 : i32
    %c0_i32_0 = arith.constant 0 : i32
    %c0_i32_1 = arith.constant 0 : i32
    return %c0_i32, %c0_i32_0 : i32, i32
  }
  func.func @transform_4(%arg0: i32) -> (i32, i32) {
    %c0_i32 = arith.constant 0 : i32
    %c0_i32_0 = arith.constant 0 : i32
    %c0_i32_1 = arith.constant 0 : i32
    return %c0_i32, %c0_i32_0 : i32, i32
  }
  func.func @transform_5(%arg0: i32) -> (i32, i32) {
    %c0_i32 = arith.constant 0 : i32
    %c0_i32_0 = arith.constant 0 : i32
    %c0_i32_1 = arith.constant 0 : i32
    return %c0_i32, %c0_i32_0 : i32, i32
  }
  func.func @transform_6(%arg0: i32) -> (i32, i32) {
    %c0_i32 = arith.constant 0 : i32
    %c0_i32_0 = arith.constant 0 : i32
    %c0_i32_1 = arith.constant 0 : i32
    return %c0_i32, %c0_i32_0 : i32, i32
  }
  func.func @transform_7(%arg0: i32) -> (i32, i32) {
    %c0_i32 = arith.constant 0 : i32
    %c0_i32_0 = arith.constant 0 : i32
    %c0_i32_1 = arith.constant 0 : i32
    return %c0_i32, %c0_i32_0 : i32, i32
  }
  func.func @transform_8(%arg0: i32) -> (i32, i32) {
    %c0_i32 = arith.constant 0 : i32
    %c0_i32_0 = arith.constant 0 : i32
    %c0_i32_1 = arith.constant 0 : i32
    return %c0_i32, %c0_i32_0 : i32, i32
  }
  func.func @transform_9(%arg0: i32) -> (i32, i32) {
    %c0_i32 = arith.constant 0 : i32
    %c0_i32_0 = arith.constant 0 : i32
    return %arg0, %c0_i32 : i32, i32
  }
}

</mosaic_0001>

<llo_original>
// kernel: bert_arch_forward.1
$region0: #{bert_arch_forward.1}
  #allocation0 [shape = 'u32[]', space=smem, size = 0x4, offset = 0x4, fixed_abs, tag = 'smem constant byte address 0x4 - core index']
  #allocation1 [shape = 'u32[144,128]{1,0:T(1,128)}', space=vmem, size = 0x12000, scoped, tag = 'internal scratch']
  %s0 = inlined_call_operand.vmem [shape: bf16[16,768], index: 0, kind: input, shape index: {}]
  %s1 = inlined_call_operand.vmem [shape: bf16[16,384], index: 1, kind: input, shape index: {}]
  %s2 = inlined_call_operand.hbm [shape: bf16[768,768], index: 2, kind: input, shape index: {}]
  %s3 = inlined_call_operand.hbm [shape: f32[1,768], index: 3, kind: input, shape index: {}]
  %s4 = inlined_call_operand.hbm [shape: bf16[768,512], index: 4, kind: input, shape index: {}]
  %s5 = inlined_call_operand.hbm [shape: bf16[384,512], index: 5, kind: input, shape index: {}]
  %s6 = inlined_call_operand.hbm [shape: f32[1,512], index: 6, kind: input, shape index: {}]
  %s7 = inlined_call_operand.hbm [shape: bf16[512,128], index: 7, kind: input, shape index: {}]
  %s8 = inlined_call_operand.hbm [shape: f32[1,128], index: 8, kind: input, shape index: {}]
  %s9 = inlined_call_operand.vmem [shape: f32[16,128], index: 9, kind: output, shape index: {}]
  %s10 = sld [smem:[#allocation0]]
  $region97: #{bert_arch_forward.1} parent=0
    _
  %s12 = ssub.s32 1, %s10
  %s13 = scalar_select 0, %s12, %s10
  $region1: #{bert_arch_forward.1} parent=0
    #allocation2 [shape = 'u8[1179648]{0}', space=vmem, size = 0x120000, scoped, tag = 'input window, operand 2, single buffered']
    #allocation3 [shape = 's32[2]{0}', space=sflag, size = 0x8, scoped, tag = 'scoped memory for bert_arch_forward.1']
    #allocation4 [shape = 'u8[3072]{0}', space=vmem, size = 0xc00, scoped, tag = 'input window, operand 3, single buffered']
    #allocation5 [shape = 's32[1]{0}', space=sflag, size = 0x4, scoped, tag = 'scoped memory for bert_arch_forward.1']
    #allocation6 [shape = 'u8[786432]{0}', space=vmem, size = 0xc0000, scoped, tag = 'input window, operand 4, single buffered']
    #allocation7 [shape = 'u8[393216]{0}', space=vmem, size = 0x60000, scoped, tag = 'input window, operand 5, single buffered']
    #allocation8 [shape = 's32[1]{0}', space=sflag, size = 0x4, scoped, tag = 'scoped memory for bert_arch_forward.1']
    #allocation9 [shape = 'u8[2048]{0}', space=vmem, size = 0x800, scoped, tag = 'input window, operand 6, single buffered']
    #allocation10 [shape = 'u8[131072]{0}', space=vmem, size = 0x20000, scoped, tag = 'input window, operand 7, single buffered']
    #allocation11 [shape = 's32[1]{0}', space=sflag, size = 0x4, scoped, tag = 'scoped memory for bert_arch_forward.1']
    #allocation12 [shape = 'u8[512]{0}', space=vmem, size = 0x400, scoped, tag = 'input window, operand 8, single buffered']
    %14 = vsyncpa [#allocation3], 0
    %15 = vsyncpa [#allocation5], 0
    %16 = vsyncpa [#allocation8], 0
    %17 = vsyncpa [#allocation11], 0
    loop: start=0, step=1, limit=4
    $region2: #{bert_arch_forward.1} parent=1 // loop_pre_header
      _
    $region3: #{bert_arch_forward.1} parent=1 // loop_header
      %s19 = sphi 0, %s23
      %p20 = scmp.ge.s32.totalorder %s19, 4
      %s29 = sphi 0, %s31
      %s32 = sphi 0, %s29
      %s33 = sphi 0, %s32
      %s49 = sphi 0, %s33
      %s55 = sphi 0, %s57
      %s58 = sphi 0, %s55
      %s59 = sphi 0, %s58
      %s75 = sphi 0, %s59
      %s79 = sphi 0, %s79
      %s81 = sphi 0, %s79
      %s82 = sphi 0, %s81
      %s96 = sphi 0, %s82
      %s100 = sphi 0, %s100
      %s102 = sphi 0, %s100
      %s103 = sphi 0, %s102
      %s117 = sphi 0, %s103
      %s121 = sphi 0, %s121
      %s123 = sphi 0, %s121
      %s124 = sphi 0, %s123
      %s138 = sphi 0, %s124
      %s142 = sphi 0, %s142
      %s144 = sphi 0, %s142
      %s145 = sphi 0, %s144
      %s159 = sphi 0, %s145
      %s163 = sphi 0, %s163
      %s165 = sphi 0, %s163
      %s166 = sphi 0, %s165
      %s180 = sphi 0, %s166
      %s184 = sphi 0, %s184
      %s186 = sphi 0, %s184
      %s187 = sphi 0, %s186
      %s201 = sphi 0, %s187
      %s205 = sphi 0, %s205
      %s207 = sphi 0, %s205
      %s208 = sphi 0, %s207
      %s222 = sphi 0, %s208
      %s228 = sphi 0, %s230
      %s231 = sphi 0, %s228
      %s232 = sphi 0, %s231
      %s248 = sphi 0, %s232
    $region4: #{bert_arch_forward.1} parent=1 // loop_header_branch
      %22 = sbr.rel (%p20) target = $region8
    $region5: #{bert_arch_forward.1} parent=1 // loop_body
      %s24 = ssub.s32 %s19, 1
      %s25 = ssub.s32 %s19, 2
      %s26 = sadd.s32 %s19, 1
      %s27 = ssub.s32 %s19, %s26
      %p28 = scmp.eq.s32.totalorder %s27, 0
      %s30 = sadd.s32 %s29, 1
      %s31 = scalar_select %p28, %s29, %s30
      %p34 = pneg %p28
      %p35 = scmp.eq.s32.totalorder %s19, 1
      %p36 = por %p34, %p35
      %p37 = scmp.ne.s32.totalorder %s29, %s32
      %p38 = scmp.eq.s32.totalorder %s19, 0
      %p39 = por %p37, %p38
      %p40 = scmp.ne.s32.totalorder %s29, %s32
      %p41 = scmp.eq.s32.totalorder %s24, 1
      %p42 = por %p40, %p41
      %p43 = scmp.ne.s32.totalorder %s32, %s33
      %p44 = scmp.eq.s32.totalorder %s24, 0
      %p45 = por %p43, %p44
      %p46 = scmp.ne.s32.totalorder %s32, %s33
      %p47 = scmp.eq.s32.totalorder %s25, 1
      %p48 = por %p46, %p47
      %p50 = scmp.ne.s32.totalorder %s33, %s49
      %p51 = scmp.eq.s32.totalorder %s25, 0
      %p52 = por %p50, %p51
      %s53 = ssub.s32 %s19, %s26
      %p54 = scmp.eq.s32.totalorder %s53, 0
      %s56 = sadd.s32 %s55, 1
      %s57 = scalar_select %p54, %s55, %s56
      %p60 = pneg %p54
      %p61 = scmp.eq.s32.totalorder %s19, 1
      %p62 = por %p60, %p61
      %p63 = scmp.ne.s32.totalorder %s55, %s58
      %p64 = scmp.eq.s32.totalorder %s19, 0
      %p65 = por %p63, %p64
      %p66 = scmp.ne.s32.totalorder %s55, %s58
      %p67 = scmp.eq.s32.totalorder %s24, 1
      %p68 = por %p66, %p67
      %p69 = scmp.ne.s32.totalorder %s58, %s59
      %p70 = scmp.eq.s32.totalorder %s24, 0
      %p71 = por %p69, %p70
      %p72 = scmp.ne.s32.totalorder %s58, %s59
      %p73 = scmp.eq.s32.totalorder %s25, 1
      %p74 = por %p72, %p73
      %p76 = scmp.ne.s32.totalorder %s59, %s75
      %p77 = scmp.eq.s32.totalorder %s25, 0
      %p78 = por %p76, %p77
      %s80 = sadd.s32 %s79, 1
      %p83 = scmp.eq.s32.totalorder %s19, 1
      %p84 = scmp.ne.s32.totalorder %s79, %s81
      %p85 = scmp.eq.s32.totalorder %s19, 0
      %p86 = por %p84, %p85
      %p87 = scmp.ne.s32.totalorder %s79, %s81
      %p88 = scmp.eq.s32.totalorder %s24, 1
      %p89 = por %p87, %p88
      %p90 = scmp.ne.s32.totalorder %s81, %s82
      %p91 = scmp.eq.s32.totalorder %s24, 0
      %p92 = por %p90, %p91
      %p93 = scmp.ne.s32.totalorder %s81, %s82
      %p94 = scmp.eq.s32.totalorder %s25, 1
      %p95 = por %p93, %p94
      %p97 = scmp.ne.s32.totalorder %s82, %s96
      %p98 = scmp.eq.s32.totalorder %s25, 0
      %p99 = por %p97, %p98
      %s101 = sadd.s32 %s100, 1
      %p104 = scmp.eq.s32.totalorder %s19, 1
      %p105 = scmp.ne.s32.totalorder %s100, %s102
      %p106 = scmp.eq.s32.totalorder %s19, 0
      %p107 = por %p105, %p106
      %p108 = scmp.ne.s32.totalorder %s100, %s102
      %p109 = scmp.eq.s32.totalorder %s24, 1
      %p110 = por %p108, %p109
      %p111 = scmp.ne.s32.totalorder %s102, %s103
      %p112 = scmp.eq.s32.totalorder %s24, 0
      %p113 = por %p111, %p112
      %p114 = scmp.ne.s32.totalorder %s102, %s103
      %p115 = scmp.eq.s32.totalorder %s25, 1
      %p116 = por %p114, %p115
      %p118 = scmp.ne.s32.totalorder %s103, %s117
      %p119 = scmp.eq.s32.totalorder %s25, 0
      %p120 = por %p118, %p119
      %s122 = sadd.s32 %s121, 1
      %p125 = scmp.eq.s32.totalorder %s19, 1
      %p126 = scmp.ne.s32.totalorder %s121, %s123
      %p127 = scmp.eq.s32.totalorder %s19, 0
      %p128 = por %p126, %p127
      %p129 = scmp.ne.s32.totalorder %s121, %s123
      %p130 = scmp.eq.s32.totalorder %s24, 1
      %p131 = por %p129, %p130
      %p132 = scmp.ne.s32.totalorder %s123, %s124
      %p133 = scmp.eq.s32.totalorder %s24, 0
      %p134 = por %p132, %p133
      %p135 = scmp.ne.s32.totalorder %s123, %s124
      %p136 = scmp.eq.s32.totalorder %s25, 1
      %p137 = por %p135, %p136
      %p139 = scmp.ne.s32.totalorder %s124, %s138
      %p140 = scmp.eq.s32.totalorder %s25, 0
      %p141 = por %p139, %p140
      %s143 = sadd.s32 %s142, 1
      %p146 = scmp.eq.s32.totalorder %s19, 1
      %p147 = scmp.ne.s32.totalorder %s142, %s144
      %p148 = scmp.eq.s32.totalorder %s19, 0
      %p149 = por %p147, %p148
      %p150 = scmp.ne.s32.totalorder %s142, %s144
      %p151 = scmp.eq.s32.totalorder %s24, 1
      %p152 = por %p150, %p151
      %p153 = scmp.ne.s32.totalorder %s144, %s145
      %p154 = scmp.eq.s32.totalorder %s24, 0
      %p155 = por %p153, %p154
      %p156 = scmp.ne.s32.totalorder %s144, %s145
      %p157 = scmp.eq.s32.totalorder %s25, 1
      %p158 = por %p156, %p157
      %p160 = scmp.ne.s32.totalorder %s145, %s159
      %p161 = scmp.eq.s32.totalorder %s25, 0
      %p162 = por %p160, %p161
      %s164 = sadd.s32 %s163, 1
      %p167 = scmp.eq.s32.totalorder %s19, 1
      %p168 = scmp.ne.s32.totalorder %s163, %s165
      %p169 = scmp.eq.s32.totalorder %s19, 0
      %p170 = por %p168, %p169
      %p171 = scmp.ne.s32.totalorder %s163, %s165
      %p172 = scmp.eq.s32.totalorder %s24, 1
      %p173 = por %p171, %p172
      %p174 = scmp.ne.s32.totalorder %s165, %s166
      %p175 = scmp.eq.s32.totalorder %s24, 0
      %p176 = por %p174, %p175
      %p177 = scmp.ne.s32.totalorder %s165, %s166
      %p178 = scmp.eq.s32.totalorder %s25, 1
      %p179 = por %p177, %p178
      %p181 = scmp.ne.s32.totalorder %s166, %s180
      %p182 = scmp.eq.s32.totalorder %s25, 0
      %p183 = por %p181, %p182
      %s185 = sadd.s32 %s184, 1
      %p188 = scmp.eq.s32.totalorder %s19, 1
      %p189 = scmp.ne.s32.totalorder %s184, %s186
      %p190 = scmp.eq.s32.totalorder %s19, 0
      %p191 = por %p189, %p190
      %p192 = scmp.ne.s32.totalorder %s184, %s186
      %p193 = scmp.eq.s32.totalorder %s24, 1
      %p194 = por %p192, %p193
      %p195 = scmp.ne.s32.totalorder %s186, %s187
      %p196 = scmp.eq.s32.totalorder %s24, 0
      %p197 = por %p195, %p196
      %p198 = scmp.ne.s32.totalorder %s186, %s187
      %p199 = scmp.eq.s32.totalorder %s25, 1
      %p200 = por %p198, %p199
      %p202 = scmp.ne.s32.totalorder %s187, %s201
      %p203 = scmp.eq.s32.totalorder %s25, 0
      %p204 = por %p202, %p203
      %s206 = sadd.s32 %s205, 1
      %p209 = scmp.eq.s32.totalorder %s19, 1
      %p210 = scmp.ne.s32.totalorder %s205, %s207
      %p211 = scmp.eq.s32.totalorder %s19, 0
      %p212 = por %p210, %p211
      %p213 = scmp.ne.s32.totalorder %s205, %s207
      %p214 = scmp.eq.s32.totalorder %s24, 1
      %p215 = por %p213, %p214
      %p216 = scmp.ne.s32.totalorder %s207, %s208
      %p217 = scmp.eq.s32.totalorder %s24, 0
      %p218 = por %p216, %p217
      %p219 = scmp.ne.s32.totalorder %s207, %s208
      %p220 = scmp.eq.s32.totalorder %s25, 1
      %p221 = por %p219, %p220
      %p223 = scmp.ne.s32.totalorder %s208, %s222
      %p224 = scmp.eq.s32.totalorder %s25, 0
      %p225 = por %p223, %p224
      %s226 = ssub.s32 %s19, %s26
      %p227 = scmp.eq.s32.totalorder %s226, 0
      %s229 = sadd.s32 %s228, 1
      %s230 = scalar_select %p227, %s228, %s229
      %p233 = pneg %p227
      %p234 = scmp.eq.s32.totalorder %s19, 1
      %p235 = por %p233, %p234
      %p236 = scmp.ne.s32.totalorder %s228, %s231
      %p237 = scmp.eq.s32.totalorder %s19, 0
      %p238 = por %p236, %p237
      %p239 = scmp.ne.s32.totalorder %s228, %s231
      %p240 = scmp.eq.s32.totalorder %s24, 1
      %p241 = por %p239, %p240
      %p242 = scmp.ne.s32.totalorder %s231, %s232
      %p243 = scmp.eq.s32.totalorder %s24, 0
      %p244 = por %p242, %p243
      %p245 = scmp.ne.s32.totalorder %s231, %s232
      %p246 = scmp.eq.s32.totalorder %s25, 1
      %p247 = por %p245, %p246
      %p249 = scmp.ne.s32.totalorder %s232, %s248
      %p250 = scmp.eq.s32.totalorder %s25, 0
      %p251 = por %p249, %p250
      %p252 = scmp.le.s32.totalorder 1, %s19
      %p253 = scmp.lt.s32.totalorder %s19, 3
      %p254 = pnand %p252, %p253
      %p255 = pneg %p254
      // Predicated region
      $region9: #{bert_arch_forward.1} parent=5 // pred_check
        _
      $region10: #{bert_arch_forward.1} parent=5 // pred_check_branch
        %257 = sbr.rel (%p254) target = $region12
      $region11: #{bert_arch_forward.1} parent=5 // pred_region
        %s258 = ssub.s32 %s19, 1
        // Predicated region
        $region13: #{bert_arch_forward.1} parent=11 // pred_check
          %p259 = pneg %p92
        $region14: #{bert_arch_forward.1} parent=11 // pred_check_branch
          %261 = sbr.rel (%p259) target = $region16
        $region15: #{bert_arch_forward.1} parent=11 // pred_region
          %s263 = ssub.s32 36864, 36864
          %264 = vsyncadd [#allocation3], %s263
          %s265 = sshll.u32 [#allocation2], 4
          %s266 = int_to_ptr.vmem [resolvable:$true] %s265
          %271 = dma.hbm_to_vmem [thread:$0]  %s2, 36864, %s266, [#allocation3], 384, 384, 24
        $region16: #{bert_arch_forward.1} parent=11 // pred_fallthru
          _
        // Predicated region
        $region17: #{bert_arch_forward.1} parent=11 // pred_check
          %p272 = pneg %p113
        $region18: #{bert_arch_forward.1} parent=11 // pred_check_branch
          %274 = sbr.rel (%p272) target = $region20
        $region19: #{bert_arch_forward.1} parent=11 // pred_region
          %s276 = ssub.s32 96, 96
          %277 = vsyncadd [#allocation5], %s276
          %s279 = sshll.u32 [#allocation4], 4
          %s280 = int_to_ptr.vmem [resolvable:$true] %s279
          %282 = dma.hbm_to_vmem [thread:$0]  %s3, 96, %s280, [#allocation5]
        $region20: #{bert_arch_forward.1} parent=11 // pred_fallthru
          _
        // Predicated region
        $region21: #{bert_arch_forward.1} parent=11 // pred_check
          %p283 = pneg %p134
        $region22: #{bert_arch_forward.1} parent=11 // pred_check_branch
          %285 = sbr.rel (%p283) target = $region24
        $region23: #{bert_arch_forward.1} parent=11 // pred_region
          %s287 = ssub.s32 24576, 24576
          %288 = vsyncadd [#allocation5], %s287
          %s289 = sshll.u32 [#allocation6], 4
          %s290 = int_to_ptr.vmem [resolvable:$true] %s289
          %295 = dma.hbm_to_vmem [thread:$0]  %s4, 24576, %s290, [#allocation5], 256, 256, 16
        $region24: #{bert_arch_forward.1} parent=11 // pred_fallthru
          _
        // Predicated region
        $region25: #{bert_arch_forward.1} parent=11 // pred_check
          %p296 = pneg %p155
        $region26: #{bert_arch_forward.1} parent=11 // pred_check_branch
          %298 = sbr.rel (%p296) target = $region28
        $region27: #{bert_arch_forward.1} parent=11 // pred_region
          %s300 = ssub.s32 12288, 12288
          %301 = vsyncadd [#allocation8], %s300
          %s302 = sshll.u32 [#allocation7], 4
          %s303 = int_to_ptr.vmem [resolvable:$true] %s302
          %308 = dma.hbm_to_vmem [thread:$0]  %s5, 12288, %s303, [#allocation8], 256, 256, 16
        $region28: #{bert_arch_forward.1} parent=11 // pred_fallthru
          _
        // Predicated region
        $region29: #{bert_arch_forward.1} parent=11 // pred_check
          %p309 = pneg %p176
        $region30: #{bert_arch_forward.1} parent=11 // pred_check_branch
          %311 = sbr.rel (%p309) target = $region32
        $region31: #{bert_arch_forward.1} parent=11 // pred_region
          %s313 = ssub.s32 64, 64
          %314 = vsyncadd [#allocation8], %s313
          %s316 = sshll.u32 [#allocation9], 4
          %s317 = int_to_ptr.vmem [resolvable:$true] %s316
          %319 = dma.hbm_to_vmem [thread:$0]  %s6, 64, %s317, [#allocation8]
        $region32: #{bert_arch_forward.1} parent=11 // pred_fallthru
          _
        // Predicated region
        $region33: #{bert_arch_forward.1} parent=11 // pred_check
          %p320 = pneg %p197
        $region34: #{bert_arch_forward.1} parent=11 // pred_check_branch
          %322 = sbr.rel (%p320) target = $region36
        $region35: #{bert_arch_forward.1} parent=11 // pred_region
          %s324 = ssub.s32 4096, 4096
          %325 = vsyncadd [#allocation11], %s324
          %s326 = sshll.u32 [#allocation10], 4
          %s327 = int_to_ptr.vmem [resolvable:$true] %s326
          %332 = dma.hbm_to_vmem [thread:$0]  %s7, 4096, %s327, [#allocation11], 64, 64, 4
        $region36: #{bert_arch_forward.1} parent=11 // pred_fallthru
          _
        // Predicated region
        $region37: #{bert_arch_forward.1} parent=11 // pred_check
          %p333 = pneg %p218
        $region38: #{bert_arch_forward.1} parent=11 // pred_check_branch
          %335 = sbr.rel (%p333) target = $region40
        $region39: #{bert_arch_forward.1} parent=11 // pred_region
          %s337 = ssub.s32 16, 16
          %338 = vsyncadd [#allocation11], %s337
          %s340 = sshll.u32 [#allocation12], 4
          %s341 = int_to_ptr.vmem [resolvable:$true] %s340
          %343 = dma.hbm_to_vmem [thread:$0]  %s8, 16, %s341, [#allocation11]
        $region40: #{bert_arch_forward.1} parent=11 // pred_fallthru
          _
      $region12: #{bert_arch_forward.1} parent=5 // pred_fallthru
        _
      %p344 = scmp.lt.s32.totalorder %s19, 2
      // Predicated region
      $region41: #{bert_arch_forward.1} parent=5 // pred_check
        %p345 = pneg %p344
      $region42: #{bert_arch_forward.1} parent=5 // pred_check_branch
        %347 = sbr.rel (%p345) target = $region44
      $region43: #{bert_arch_forward.1} parent=5 // pred_region
        // Predicated region
        $region45: #{bert_arch_forward.1} parent=43 // pred_check
          %p348 = pneg %p39
        $region46: #{bert_arch_forward.1} parent=43 // pred_check_branch
          %350 = sbr.rel (%p348) target = $region48
        $region47: #{bert_arch_forward.1} parent=43 // pred_region
          %p351 = scmp.lt.s32.totalorder %s19, 1
          %s352 = scalar_select %p351, %s19, 1
          %s353 = smul.addr %s352, 6
          %s354 = smul.addr %s353, 4
          %s355 = scalar_lea.vmem %s0, %s354
        $region48: #{bert_arch_forward.1} parent=43 // pred_fallthru
          _
        // Predicated region
        $region49: #{bert_arch_forward.1} parent=43 // pred_check
          %p356 = pneg %p65
        $region50: #{bert_arch_forward.1} parent=43 // pred_check_branch
          %358 = sbr.rel (%p356) target = $region52
        $region51: #{bert_arch_forward.1} parent=43 // pred_region
          %p359 = scmp.lt.s32.totalorder %s19, 1
          %s360 = scalar_select %p359, %s19, 1
          %s361 = smul.addr %s360, 3
          %s362 = smul.addr %s361, 4
          %s363 = scalar_lea.vmem %s1, %s362
        $region52: #{bert_arch_forward.1} parent=43 // pred_fallthru
          _
      $region44: #{bert_arch_forward.1} parent=5 // pred_fallthru
        _
      %p364 = scmp.le.s32.totalorder 1, %s19
      %p365 = scmp.lt.s32.totalorder %s19, 3
      %p366 = pnand %p364, %p365
      %p367 = pneg %p366
      // Predicated region
      $region53: #{bert_arch_forward.1} parent=5 // pred_check
        _
      $region54: #{bert_arch_forward.1} parent=5 // pred_check_branch
        %369 = sbr.rel (%p366) target = $region56
      $region55: #{bert_arch_forward.1} parent=5 // pred_region
        %s370 = ssub.s32 %s19, 1
        // Predicated region
        $region57: #{bert_arch_forward.1} parent=55 // pred_check
          %p371 = pneg %p92
        $region58: #{bert_arch_forward.1} parent=55 // pred_check_branch
          %373 = sbr.rel (%p371) target = $region60
        $region59: #{bert_arch_forward.1} parent=55 // pred_region
          %374 = dma.done [#allocation3], 36864
        $region60: #{bert_arch_forward.1} parent=55 // pred_fallthru
          _
        // Predicated region
        $region61: #{bert_arch_forward.1} parent=55 // pred_check
          %p375 = pneg %p113
        $region62: #{bert_arch_forward.1} parent=55 // pred_check_branch
          %377 = sbr.rel (%p375) target = $region64
        $region63: #{bert_arch_forward.1} parent=55 // pred_region
          %378 = dma.done [#allocation5], 96
        $region64: #{bert_arch_forward.1} parent=55 // pred_fallthru
          _
        // Predicated region
        $region65: #{bert_arch_forward.1} parent=55 // pred_check
          %p379 = pneg %p134
        $region66: #{bert_arch_forward.1} parent=55 // pred_check_branch
          %381 = sbr.rel (%p379) target = $region68
        $region67: #{bert_arch_forward.1} parent=55 // pred_region
          %382 = dma.done [#allocation5], 24576
        $region68: #{bert_arch_forward.1} parent=55 // pred_fallthru
          _
        // Predicated region
        $region69: #{bert_arch_forward.1} parent=55 // pred_check
          %p383 = pneg %p155
        $region70: #{bert_arch_forward.1} parent=55 // pred_check_branch
          %385 = sbr.rel (%p383) target = $region72
        $region71: #{bert_arch_forward.1} parent=55 // pred_region
          %386 = dma.done [#allocation8], 12288
        $region72: #{bert_arch_forward.1} parent=55 // pred_fallthru
          _
        // Predicated region
        $region73: #{bert_arch_forward.1} parent=55 // pred_check
          %p387 = pneg %p176
        $region74: #{bert_arch_forward.1} parent=55 // pred_check_branch
          %389 = sbr.rel (%p387) target = $region76
        $region75: #{bert_arch_forward.1} parent=55 // pred_region
          %390 = dma.done [#allocation8], 64
        $region76: #{bert_arch_forward.1} parent=55 // pred_fallthru
          _
        // Predicated region
        $region77: #{bert_arch_forward.1} parent=55 // pred_check
          %p391 = pneg %p197
        $region78: #{bert_arch_forward.1} parent=55 // pred_check_branch
          %393 = sbr.rel (%p391) target = $region80
        $region79: #{bert_arch_forward.1} parent=55 // pred_region
          %394 = dma.done [#allocation11], 4096
        $region80: #{bert_arch_forward.1} parent=55 // pred_fallthru
          _
        // Predicated region
        $region81: #{bert_arch_forward.1} parent=55 // pred_check
          %p395 = pneg %p218
        $region82: #{bert_arch_forward.1} parent=55 // pred_check_branch
          %397 = sbr.rel (%p395) target = $region84
        $region83: #{bert_arch_forward.1} parent=55 // pred_region
          %398 = dma.done [#allocation11], 16
        $region84: #{bert_arch_forward.1} parent=55 // pred_fallthru
          _
        %p399 = scmp.lt.s32.totalorder %s24, 1
        %s400 = scalar_select %p399, %s24, 1
        %s401 = smul.addr %s400, 6
        %s402 = smul.addr %s401, 4
        %s403 = scalar_lea.vmem %s0, %s402
        %p404 = pneg %p45
        %p405 = pneg %p42
        %p406 = scmp.lt.s32.totalorder %s24, 1
        %s407 = scalar_select %p406, %s24, 1
        %s408 = smul.addr %s407, 3
        %s409 = smul.addr %s408, 4
        %s410 = scalar_lea.vmem %s1, %s409
        %p411 = pneg %p71
        %p412 = pneg %p68
        %p413 = pneg %p92
        %p414 = pneg %p89
        %p415 = pneg %p113
        %p416 = pneg %p110
        %p417 = pneg %p134
        %p418 = pneg %p131
        %p419 = pneg %p155
        %p420 = pneg %p152
        %p421 = pneg %p176
        %p422 = pneg %p173
        %p423 = pneg %p197
        %p424 = pneg %p194
        %p425 = pneg %p218
        %p426 = pneg %p215
        %p427 = pneg %p244
        %p428 = pneg %p241
        %p429 = scmp.lt.s32.totalorder %s24, 1
        %s430 = scalar_select %p429, %s24, 1
        %s431 = smul.addr %s430, 8
        %s432 = scalar_lea.vmem %s9, %s431
        %p433 = scmp.lt.s32.totalorder %s24, 1
        %s434 = scalar_select %p433, %s24, 1
        %s435 = smul.addr %s434, 6
        %s436 = smul.addr %s435, 4
        %s437 = scalar_lea.vmem %s0, %s436
        %p438 = scmp.lt.s32.totalorder %s24, 1
        %s439 = scalar_select %p438, %s24, 1
        %s440 = smul.addr %s439, 3
        %s441 = smul.addr %s440, 4
        %s442 = scalar_lea.vmem %s1, %s441
        %p443 = scmp.lt.s32.totalorder %s24, 1
        %s444 = scalar_select %p443, %s24, 1
        %s445 = smul.addr %s444, 8
        %s446 = scalar_lea.vmem %s9, %s445
        %v448 = vld [vmem:[%s437] sm:$0xff]
        %v449 = vld [vmem:[%s437 + $0x8] sm:$0xff]
        %v450 = vld [vmem:[%s437 + $0x10] sm:$0xff]
        %v451 = vld [vmem:[#allocation2] sm:$0xff]
        %v452 = vld [vmem:[#allocation2 + $0x8] sm:$0xff]
        %v453 = vld [vmem:[#allocation2 + $0x10] sm:$0xff]
        %v454 = vld [vmem:[#allocation2 + $0x18] sm:$0xff]
        %v455 = vld [vmem:[#allocation2 + $0x20] sm:$0xff]
        %v456 = vld [vmem:[#allocation2 + $0x28] sm:$0xff]
        %v457 = vld [vmem:[#allocation2 + $0x30] sm:$0xff]
        %v458 = vld [vmem:[#allocation2 + $0x38] sm:$0xff]
        %v459 = vld [vmem:[#allocation2 + $0x40] sm:$0xff]
        %v460 = vld [vmem:[#allocation2 + $0x48] sm:$0xff]
        %v461 = vld [vmem:[#allocation2 + $0x50] sm:$0xff]
        %v462 = vld [vmem:[#allocation2 + $0x58] sm:$0xff]
        %v463 = vld [vmem:[#allocation2 + $0x60] sm:$0xff]
        %v464 = vld [vmem:[#allocation2 + $0x68] sm:$0xff]
        %v465 = vld [vmem:[#allocation2 + $0x70] sm:$0xff]
        %v466 = vld [vmem:[#allocation2 + $0x78] sm:$0xff]
        %v467 = vld [vmem:[#allocation2 + $0x80] sm:$0xff]
        %v468 = vld [vmem:[#allocation2 + $0x88] sm:$0xff]
        %v469 = vld [vmem:[#allocation2 + $0x90] sm:$0xff]
        %v470 = vld [vmem:[#allocation2 + $0x98] sm:$0xff]
        %v471 = vld [vmem:[#allocation2 + $0xa0] sm:$0xff]
        %v472 = vld [vmem:[#allocation2 + $0xa8] sm:$0xff]
        %v473 = vld [vmem:[#allocation2 + $0xb0] sm:$0xff]
        %v474 = vld [vmem:[#allocation2 + $0xb8] sm:$0xff]
        %v475 = vld [vmem:[#allocation2 + $0xc0] sm:$0xff]
        %v476 = vld [vmem:[#allocation2 + $0xc8] sm:$0xff]
        %v477 = vld [vmem:[#allocation2 + $0xd0] sm:$0xff]
        %v478 = vld [vmem:[#allocation2 + $0xd8] sm:$0xff]
        %v479 = vld [vmem:[#allocation2 + $0xe0] sm:$0xff]
        %v480 = vld [vmem:[#allocation2 + $0xe8] sm:$0xff]
        %v481 = vld [vmem:[#allocation2 + $0xf0] sm:$0xff]
        %v482 = vld [vmem:[#allocation2 + $0xf8] sm:$0xff]
        %v483 = vld [vmem:[#allocation2 + $0x100] sm:$0xff]
        %v484 = vld [vmem:[#allocation2 + $0x108] sm:$0xff]
        %v485 = vld [vmem:[#allocation2 + $0x110] sm:$0xff]
        %v486 = vld [vmem:[#allocation2 + $0x118] sm:$0xff]
        %v487 = vld [vmem:[#allocation2 + $0x120] sm:$0xff]
        %v488 = vld [vmem:[#allocation2 + $0x128] sm:$0xff]
        %v489 = vld [vmem:[#allocation2 + $0x130] sm:$0xff]
        %v490 = vld [vmem:[#allocation2 + $0x138] sm:$0xff]
        %v491 = vld [vmem:[#allocation2 + $0x140] sm:$0xff]
        %v492 = vld [vmem:[#allocation2 + $0x148] sm:$0xff]
        %v493 = vld [vmem:[#allocation2 + $0x150] sm:$0xff]
        %v494 = vld [vmem:[#allocation2 + $0x158] sm:$0xff]
        %v495 = vld [vmem:[#allocation2 + $0x160] sm:$0xff]
        %v496 = vld [vmem:[#allocation2 + $0x168] sm:$0xff]
        %v497 = vld [vmem:[#allocation2 + $0x170] sm:$0xff]
        %v498 = vld [vmem:[#allocation2 + $0x178] sm:$0xff]
        %v499 = vld [vmem:[#allocation2 + $0x180] sm:$0xff]
        %v500 = vld [vmem:[#allocation2 + $0x188] sm:$0xff]
        %v501 = vld [vmem:[#allocation2 + $0x190] sm:$0xff]
        %v502 = vld [vmem:[#allocation2 + $0x198] sm:$0xff]
        %v503 = vld [vmem:[#allocation2 + $0x1a0] sm:$0xff]
        %v504 = vld [vmem:[#allocation2 + $0x1a8] sm:$0xff]
        %v505 = vld [vmem:[#allocation2 + $0x1b0] sm:$0xff]
        %v506 = vld [vmem:[#allocation2 + $0x1b8] sm:$0xff]
        %v507 = vld [vmem:[#allocation2 + $0x1c0] sm:$0xff]
        %v508 = vld [vmem:[#allocation2 + $0x1c8] sm:$0xff]
        %v509 = vld [vmem:[#allocation2 + $0x1d0] sm:$0xff]
        %v510 = vld [vmem:[#allocation2 + $0x1d8] sm:$0xff]
        %v511 = vld [vmem:[#allocation2 + $0x1e0] sm:$0xff]
        %v512 = vld [vmem:[#allocation2 + $0x1e8] sm:$0xff]
        %v513 = vld [vmem:[#allocation2 + $0x1f0] sm:$0xff]
        %v514 = vld [vmem:[#allocation2 + $0x1f8] sm:$0xff]
        %v515 = vld [vmem:[#allocation2 + $0x200] sm:$0xff]
        %v516 = vld [vmem:[#allocation2 + $0x208] sm:$0xff]
        %v517 = vld [vmem:[#allocation2 + $0x210] sm:$0xff]
        %v518 = vld [vmem:[#allocation2 + $0x218] sm:$0xff]
        %v519 = vld [vmem:[#allocation2 + $0x220] sm:$0xff]
        %v520 = vld [vmem:[#allocation2 + $0x228] sm:$0xff]
        %v521 = vld [vmem:[#allocation2 + $0x230] sm:$0xff]
        %v522 = vld [vmem:[#allocation2 + $0x238] sm:$0xff]
        %v523 = vld [vmem:[#allocation2 + $0x240] sm:$0xff]
        %v524 = vld [vmem:[#allocation2 + $0x248] sm:$0xff]
        %v525 = vld [vmem:[#allocation2 + $0x250] sm:$0xff]
        %v526 = vld [vmem:[#allocation2 + $0x258] sm:$0xff]
        %v527 = vld [vmem:[#allocation2 + $0x260] sm:$0xff]
        %v528 = vld [vmem:[#allocation2 + $0x268] sm:$0xff]
        %v529 = vld [vmem:[#allocation2 + $0x270] sm:$0xff]
        %v530 = vld [vmem:[#allocation2 + $0x278] sm:$0xff]
        %v531 = vld [vmem:[#allocation2 + $0x280] sm:$0xff]
        %v532 = vld [vmem:[#allocation2 + $0x288] sm:$0xff]
        %v533 = vld [vmem:[#allocation2 + $0x290] sm:$0xff]
        %v534 = vld [vmem:[#allocation2 + $0x298] sm:$0xff]
        %v535 = vld [vmem:[#allocation2 + $0x2a0] sm:$0xff]
        %v536 = vld [vmem:[#allocation2 + $0x2a8] sm:$0xff]
        %v537 = vld [vmem:[#allocation2 + $0x2b0] sm:$0xff]
        %v538 = vld [vmem:[#allocation2 + $0x2b8] sm:$0xff]
        %v539 = vld [vmem:[#allocation2 + $0x2c0] sm:$0xff]
        %v540 = vld [vmem:[#allocation2 + $0x2c8] sm:$0xff]
        %v541 = vld [vmem:[#allocation2 + $0x2d0] sm:$0xff]
        %v542 = vld [vmem:[#allocation2 + $0x2d8] sm:$0xff]
        %v543 = vld [vmem:[#allocation2 + $0x2e0] sm:$0xff]
        %v544 = vld [vmem:[#allocation2 + $0x2e8] sm:$0xff]
        %v545 = vld [vmem:[#allocation2 + $0x2f0] sm:$0xff]
        %v546 = vld [vmem:[#allocation2 + $0x2f8] sm:$0xff]
        %v547 = vld [vmem:[#allocation2 + $0x300] sm:$0xff]
        %v548 = vld [vmem:[#allocation2 + $0x308] sm:$0xff]
        %v549 = vld [vmem:[#allocation2 + $0x310] sm:$0xff]
        %v550 = vld [vmem:[#allocation2 + $0x318] sm:$0xff]
        %v551 = vld [vmem:[#allocation2 + $0x320] sm:$0xff]
        %v552 = vld [vmem:[#allocation2 + $0x328] sm:$0xff]
        %v553 = vld [vmem:[#allocation2 + $0x330] sm:$0xff]
        %v554 = vld [vmem:[#allocation2 + $0x338] sm:$0xff]
        %v555 = vld [vmem:[#allocation2 + $0x340] sm:$0xff]
        %v556 = vld [vmem:[#allocation2 + $0x348] sm:$0xff]
        %v557 = vld [vmem:[#allocation2 + $0x350] sm:$0xff]
        %v558 = vld [vmem:[#allocation2 + $0x358] sm:$0xff]
        %v559 = vld [vmem:[#allocation2 + $0x360] sm:$0xff]
        %v560 = vld [vmem:[#allocation2 + $0x368] sm:$0xff]
        %v561 = vld [vmem:[#allocation2 + $0x370] sm:$0xff]
        %v562 = vld [vmem:[#allocation2 + $0x378] sm:$0xff]
        %v563 = vld [vmem:[#allocation2 + $0x380] sm:$0xff]
        %v564 = vld [vmem:[#allocation2 + $0x388] sm:$0xff]
        %v565 = vld [vmem:[#allocation2 + $0x390] sm:$0xff]
        %v566 = vld [vmem:[#allocation2 + $0x398] sm:$0xff]
        %v567 = vld [vmem:[#allocation2 + $0x3a0] sm:$0xff]
        %v568 = vld [vmem:[#allocation2 + $0x3a8] sm:$0xff]
        %v569 = vld [vmem:[#allocation2 + $0x3b0] sm:$0xff]
        %v570 = vld [vmem:[#allocation2 + $0x3b8] sm:$0xff]
        %v571 = vld [vmem:[#allocation2 + $0x3c0] sm:$0xff]
        %v572 = vld [vmem:[#allocation2 + $0x3c8] sm:$0xff]
        %v573 = vld [vmem:[#allocation2 + $0x3d0] sm:$0xff]
        %v574 = vld [vmem:[#allocation2 + $0x3d8] sm:$0xff]
        %v575 = vld [vmem:[#allocation2 + $0x3e0] sm:$0xff]
        %v576 = vld [vmem:[#allocation2 + $0x3e8] sm:$0xff]
        %v577 = vld [vmem:[#allocation2 + $0x3f0] sm:$0xff]
        %v578 = vld [vmem:[#allocation2 + $0x3f8] sm:$0xff]
        %v579 = vld [vmem:[#allocation2 + $0x400] sm:$0xff]
        %v580 = vld [vmem:[#allocation2 + $0x408] sm:$0xff]
        %v581 = vld [vmem:[#allocation2 + $0x410] sm:$0xff]
        %v582 = vld [vmem:[#allocation2 + $0x418] sm:$0xff]
        %v583 = vld [vmem:[#allocation2 + $0x420] sm:$0xff]
        %v584 = vld [vmem:[#allocation2 + $0x428] sm:$0xff]
        %v585 = vld [vmem:[#allocation2 + $0x430] sm:$0xff]
        %v586 = vld [vmem:[#allocation2 + $0x438] sm:$0xff]
        %v587 = vld [vmem:[#allocation2 + $0x440] sm:$0xff]
        %v588 = vld [vmem:[#allocation2 + $0x448] sm:$0xff]
        %v589 = vld [vmem:[#allocation2 + $0x450] sm:$0xff]
        %v590 = vld [vmem:[#allocation2 + $0x458] sm:$0xff]
        %v591 = vld [vmem:[#allocation2 + $0x460] sm:$0xff]
        %v592 = vld [vmem:[#allocation2 + $0x468] sm:$0xff]
        %v593 = vld [vmem:[#allocation2 + $0x470] sm:$0xff]
        %v594 = vld [vmem:[#allocation2 + $0x478] sm:$0xff]
        %v595 = vld [vmem:[#allocation2 + $0x480] sm:$0xff]
        %v596 = vld [vmem:[#allocation2 + $0x488] sm:$0xff]
        %v597 = vld [vmem:[#allocation2 + $0x490] sm:$0xff]
        %v598 = vld [vmem:[#allocation2 + $0x498] sm:$0xff]
        %v599 = vld [vmem:[#allocation2 + $0x4a0] sm:$0xff]
        %v600 = vld [vmem:[#allocation2 + $0x4a8] sm:$0xff]
        %v601 = vld [vmem:[#allocation2 + $0x4b0] sm:$0xff]
        %v602 = vld [vmem:[#allocation2 + $0x4b8] sm:$0xff]
        %v603 = vld [vmem:[#allocation2 + $0x4c0] sm:$0xff]
        %v604 = vld [vmem:[#allocation2 + $0x4c8] sm:$0xff]
        %v605 = vld [vmem:[#allocation2 + $0x4d0] sm:$0xff]
        %v606 = vld [vmem:[#allocation2 + $0x4d8] sm:$0xff]
        %v607 = vld [vmem:[#allocation2 + $0x4e0] sm:$0xff]
        %v608 = vld [vmem:[#allocation2 + $0x4e8] sm:$0xff]
        %v609 = vld [vmem:[#allocation2 + $0x4f0] sm:$0xff]
        %v610 = vld [vmem:[#allocation2 + $0x4f8] sm:$0xff]
        %v611 = vld [vmem:[#allocation2 + $0x500] sm:$0xff]
        %v612 = vld [vmem:[#allocation2 + $0x508] sm:$0xff]
        %v613 = vld [vmem:[#allocation2 + $0x510] sm:$0xff]
        %v614 = vld [vmem:[#allocation2 + $0x518] sm:$0xff]
        %v615 = vld [vmem:[#allocation2 + $0x520] sm:$0xff]
        %v616 = vld [vmem:[#allocation2 + $0x528] sm:$0xff]
        %v617 = vld [vmem:[#allocation2 + $0x530] sm:$0xff]
        %v618 = vld [vmem:[#allocation2 + $0x538] sm:$0xff]
        %v619 = vld [vmem:[#allocation2 + $0x540] sm:$0xff]
        %v620 = vld [vmem:[#allocation2 + $0x548] sm:$0xff]
        %v621 = vld [vmem:[#allocation2 + $0x550] sm:$0xff]
        %v622 = vld [vmem:[#allocation2 + $0x558] sm:$0xff]
        %v623 = vld [vmem:[#allocation2 + $0x560] sm:$0xff]
        %v624 = vld [vmem:[#allocation2 + $0x568] sm:$0xff]
        %v625 = vld [vmem:[#allocation2 + $0x570] sm:$0xff]
        %v626 = vld [vmem:[#allocation2 + $0x578] sm:$0xff]
        %v627 = vld [vmem:[#allocation2 + $0x580] sm:$0xff]
        %v628 = vld [vmem:[#allocation2 + $0x588] sm:$0xff]
        %v629 = vld [vmem:[#allocation2 + $0x590] sm:$0xff]
        %v630 = vld [vmem:[#allocation2 + $0x598] sm:$0xff]
        %v631 = vld [vmem:[#allocation2 + $0x5a0] sm:$0xff]
        %v632 = vld [vmem:[#allocation2 + $0x5a8] sm:$0xff]
        %v633 = vld [vmem:[#allocation2 + $0x5b0] sm:$0xff]
        %v634 = vld [vmem:[#allocation2 + $0x5b8] sm:$0xff]
        %v635 = vld [vmem:[#allocation2 + $0x5c0] sm:$0xff]
        %v636 = vld [vmem:[#allocation2 + $0x5c8] sm:$0xff]
        %v637 = vld [vmem:[#allocation2 + $0x5d0] sm:$0xff]
        %v638 = vld [vmem:[#allocation2 + $0x5d8] sm:$0xff]
        %v639 = vld [vmem:[#allocation2 + $0x5e0] sm:$0xff]
        %v640 = vld [vmem:[#allocation2 + $0x5e8] sm:$0xff]
        %v641 = vld [vmem:[#allocation2 + $0x5f0] sm:$0xff]
        %v642 = vld [vmem:[#allocation2 + $0x5f8] sm:$0xff]
        %v643 = vld [vmem:[#allocation2 + $0x600] sm:$0xff]
        %v644 = vld [vmem:[#allocation2 + $0x608] sm:$0xff]
        %v645 = vld [vmem:[#allocation2 + $0x610] sm:$0xff]
        %v646 = vld [vmem:[#allocation2 + $0x618] sm:$0xff]
        %v647 = vld [vmem:[#allocation2 + $0x620] sm:$0xff]
        %v648 = vld [vmem:[#allocation2 + $0x628] sm:$0xff]
        %v649 = vld [vmem:[#allocation2 + $0x630] sm:$0xff]
        %v650 = vld [vmem:[#allocation2 + $0x638] sm:$0xff]
        %v651 = vld [vmem:[#allocation2 + $0x640] sm:$0xff]
        %v652 = vld [vmem:[#allocation2 + $0x648] sm:$0xff]
        %v653 = vld [vmem:[#allocation2 + $0x650] sm:$0xff]
        %v654 = vld [vmem:[#allocation2 + $0x658] sm:$0xff]
        %v655 = vld [vmem:[#allocation2 + $0x660] sm:$0xff]
        %v656 = vld [vmem:[#allocation2 + $0x668] sm:$0xff]
        %v657 = vld [vmem:[#allocation2 + $0x670] sm:$0xff]
        %v658 = vld [vmem:[#allocation2 + $0x678] sm:$0xff]
        %v659 = vld [vmem:[#allocation2 + $0x680] sm:$0xff]
        %v660 = vld [vmem:[#allocation2 + $0x688] sm:$0xff]
        %v661 = vld [vmem:[#allocation2 + $0x690] sm:$0xff]
        %v662 = vld [vmem:[#allocation2 + $0x698] sm:$0xff]
        %v663 = vld [vmem:[#allocation2 + $0x6a0] sm:$0xff]
        %v664 = vld [vmem:[#allocation2 + $0x6a8] sm:$0xff]
        %v665 = vld [vmem:[#allocation2 + $0x6b0] sm:$0xff]
        %v666 = vld [vmem:[#allocation2 + $0x6b8] sm:$0xff]
        %v667 = vld [vmem:[#allocation2 + $0x6c0] sm:$0xff]
        %v668 = vld [vmem:[#allocation2 + $0x6c8] sm:$0xff]
        %v669 = vld [vmem:[#allocation2 + $0x6d0] sm:$0xff]
        %v670 = vld [vmem:[#allocation2 + $0x6d8] sm:$0xff]
        %v671 = vld [vmem:[#allocation2 + $0x6e0] sm:$0xff]
        %v672 = vld [vmem:[#allocation2 + $0x6e8] sm:$0xff]
        %v673 = vld [vmem:[#allocation2 + $0x6f0] sm:$0xff]
        %v674 = vld [vmem:[#allocation2 + $0x6f8] sm:$0xff]
        %v675 = vld [vmem:[#allocation2 + $0x700] sm:$0xff]
        %v676 = vld [vmem:[#allocation2 + $0x708] sm:$0xff]
        %v677 = vld [vmem:[#allocation2 + $0x710] sm:$0xff]
        %v678 = vld [vmem:[#allocation2 + $0x718] sm:$0xff]
        %v679 = vld [vmem:[#allocation2 + $0x720] sm:$0xff]
        %v680 = vld [vmem:[#allocation2 + $0x728] sm:$0xff]
        %v681 = vld [vmem:[#allocation2 + $0x730] sm:$0xff]
        %v682 = vld [vmem:[#allocation2 + $0x738] sm:$0xff]
        %v683 = vld [vmem:[#allocation2 + $0x740] sm:$0xff]
        %v684 = vld [vmem:[#allocation2 + $0x748] sm:$0xff]
        %v685 = vld [vmem:[#allocation2 + $0x750] sm:$0xff]
        %v686 = vld [vmem:[#allocation2 + $0x758] sm:$0xff]
        %v687 = vld [vmem:[#allocation2 + $0x760] sm:$0xff]
        %v688 = vld [vmem:[#allocation2 + $0x768] sm:$0xff]
        %v689 = vld [vmem:[#allocation2 + $0x770] sm:$0xff]
        %v690 = vld [vmem:[#allocation2 + $0x778] sm:$0xff]
        %v691 = vld [vmem:[#allocation2 + $0x780] sm:$0xff]
        %v692 = vld [vmem:[#allocation2 + $0x788] sm:$0xff]
        %v693 = vld [vmem:[#allocation2 + $0x790] sm:$0xff]
        %v694 = vld [vmem:[#allocation2 + $0x798] sm:$0xff]
        %v695 = vld [vmem:[#allocation2 + $0x7a0] sm:$0xff]
        %v696 = vld [vmem:[#allocation2 + $0x7a8] sm:$0xff]
        %v697 = vld [vmem:[#allocation2 + $0x7b0] sm:$0xff]
        %v698 = vld [vmem:[#allocation2 + $0x7b8] sm:$0xff]
        %v699 = vld [vmem:[#allocation2 + $0x7c0] sm:$0xff]
        %v700 = vld [vmem:[#allocation2 + $0x7c8] sm:$0xff]
        %v701 = vld [vmem:[#allocation2 + $0x7d0] sm:$0xff]
        %v702 = vld [vmem:[#allocation2 + $0x7d8] sm:$0xff]
        %v703 = vld [vmem:[#allocation2 + $0x7e0] sm:$0xff]
        %v704 = vld [vmem:[#allocation2 + $0x7e8] sm:$0xff]
        %v705 = vld [vmem:[#allocation2 + $0x7f0] sm:$0xff]
        %v706 = vld [vmem:[#allocation2 + $0x7f8] sm:$0xff]
        %v707 = vld [vmem:[#allocation2 + $0x800] sm:$0xff]
        %v708 = vld [vmem:[#allocation2 + $0x808] sm:$0xff]
        %v709 = vld [vmem:[#allocation2 + $0x810] sm:$0xff]
        %v710 = vld [vmem:[#allocation2 + $0x818] sm:$0xff]
        %v711 = vld [vmem:[#allocation2 + $0x820] sm:$0xff]
        %v712 = vld [vmem:[#allocation2 + $0x828] sm:$0xff]
        %v713 = vld [vmem:[#allocation2 + $0x830] sm:$0xff]
        %v714 = vld [vmem:[#allocation2 + $0x838] sm:$0xff]
        %v715 = vld [vmem:[#allocation2 + $0x840] sm:$0xff]
        %v716 = vld [vmem:[#allocation2 + $0x848] sm:$0xff]
        %v717 = vld [vmem:[#allocation2 + $0x850] sm:$0xff]
        %v718 = vld [vmem:[#allocation2 + $0x858] sm:$0xff]
        %v719 = vld [vmem:[#allocation2 + $0x860] sm:$0xff]
        %v720 = vld [vmem:[#allocation2 + $0x868] sm:$0xff]
        %v721 = vld [vmem:[#allocation2 + $0x870] sm:$0xff]
        %v722 = vld [vmem:[#allocation2 + $0x878] sm:$0xff]
        %v723 = vld [vmem:[#allocation2 + $0x880] sm:$0xff]
        %v724 = vld [vmem:[#allocation2 + $0x888] sm:$0xff]
        %v725 = vld [vmem:[#allocation2 + $0x890] sm:$0xff]
        %v726 = vld [vmem:[#allocation2 + $0x898] sm:$0xff]
        %v727 = vld [vmem:[#allocation2 + $0x8a0] sm:$0xff]
        %v728 = vld [vmem:[#allocation2 + $0x8a8] sm:$0xff]
        %v729 = vld [vmem:[#allocation2 + $0x8b0] sm:$0xff]
        %v730 = vld [vmem:[#allocation2 + $0x8b8] sm:$0xff]
        %v731 = vld [vmem:[#allocation2 + $0x8c0] sm:$0xff]
        %v732 = vld [vmem:[#allocation2 + $0x8c8] sm:$0xff]
        %v733 = vld [vmem:[#allocation2 + $0x8d0] sm:$0xff]
        %v734 = vld [vmem:[#allocation2 + $0x8d8] sm:$0xff]
        %v735 = vld [vmem:[#allocation2 + $0x8e0] sm:$0xff]
        %v736 = vld [vmem:[#allocation2 + $0x8e8] sm:$0xff]
        %v737 = vld [vmem:[#allocation2 + $0x8f0] sm:$0xff]
        %v738 = vld [vmem:[#allocation2 + $0x8f8] sm:$0xff]
        %v739 = vld [vmem:[#allocation4] sm:$0x3f]
        %v741 = vlaneseq
        %v742 = vshrl.u32 %v741, 7
        %v743 = vsub.s32 0, %v742
        %v744 = vrot.slane %v739, %v743
        %v745 = vlaneseq
        %v746 = vshrl.u32 %v745, 7
        %v747 = vsub.s32 1, %v746
        %v748 = vrot.slane %v739, %v747
        %v749 = vlaneseq
        %v750 = vshrl.u32 %v749, 7
        %v751 = vsub.s32 2, %v750
        %v752 = vrot.slane %v739, %v751
        %v753 = vlaneseq
        %v754 = vshrl.u32 %v753, 7
        %v755 = vsub.s32 3, %v754
        %v756 = vrot.slane %v739, %v755
        %v757 = vlaneseq
        %v758 = vshrl.u32 %v757, 7
        %v759 = vsub.s32 4, %v758
        %v760 = vrot.slane %v739, %v759
        %v761 = vlaneseq
        %v762 = vshrl.u32 %v761, 7
        %v763 = vsub.s32 5, %v762
        %v764 = vrot.slane %v739, %v763
        %v774 = vunpack.c.l.b16 %v448
        %v775 = vunpack.c.h.b16 %v448
        %v776 = vunpack.c.l.b16 %v449
        %v777 = vunpack.c.h.b16 %v449
        %v778 = vunpack.c.l.b16 %v450
        %v779 = vunpack.c.h.b16 %v450
        %v780 = vpack.c.b16 %v774, %v774
        %v781 = vpack.c.b16 %v775, %v775
        %v782 = vpack.c.b16 %v776, %v776
        %v783 = vpack.c.b16 %v777, %v777
        %v784 = vpack.c.b16 %v778, %v778
        %v785 = vpack.c.b16 %v779, %v779
        %v1080 = vunpack.c.l.b16 %v451
        %v1081 = vunpack.c.h.b16 %v451
        %v1082 = vunpack.c.l.b16 %v452
        %v1083 = vunpack.c.h.b16 %v452
        %v1084 = vunpack.c.l.b16 %v453
        %v1085 = vunpack.c.h.b16 %v453
        %v1086 = vunpack.c.l.b16 %v454
        %v1087 = vunpack.c.h.b16 %v454
        %v1088 = vunpack.c.l.b16 %v455
        %v1089 = vunpack.c.h.b16 %v455
        %v1090 = vunpack.c.l.b16 %v456
        %v1091 = vunpack.c.h.b16 %v456
        %v1092 = vunpack.c.l.b16 %v457
        %v1093 = vunpack.c.h.b16 %v457
        %v1094 = vunpack.c.l.b16 %v458
        %v1095 = vunpack.c.h.b16 %v458
        %v1096 = vunpack.c.l.b16 %v459
        %v1097 = vunpack.c.h.b16 %v459
        %v1098 = vunpack.c.l.b16 %v460
        %v1099 = vunpack.c.h.b16 %v460
        %v1100 = vunpack.c.l.b16 %v461
        %v1101 = vunpack.c.h.b16 %v461
        %v1102 = vunpack.c.l.b16 %v462
        %v1103 = vunpack.c.h.b16 %v462
        %v1104 = vunpack.c.l.b16 %v463
        %v1105 = vunpack.c.h.b16 %v463
        %v1106 = vunpack.c.l.b16 %v464
        %v1107 = vunpack.c.h.b16 %v464
        %v1108 = vunpack.c.l.b16 %v465
        %v1109 = vunpack.c.h.b16 %v465
        %v1110 = vunpack.c.l.b16 %v466
        %v1111 = vunpack.c.h.b16 %v466
        %v1112 = vunpack.c.l.b16 %v467
        %v1113 = vunpack.c.h.b16 %v467
        %v1114 = vunpack.c.l.b16 %v468
        %v1115 = vunpack.c.h.b16 %v468
        %v1116 = vunpack.c.l.b16 %v469
        %v1117 = vunpack.c.h.b16 %v469
        %v1118 = vunpack.c.l.b16 %v470
        %v1119 = vunpack.c.h.b16 %v470
        %v1120 = vunpack.c.l.b16 %v471
        %v1121 = vunpack.c.h.b16 %v471
        %v1122 = vunpack.c.l.b16 %v472
        %v1123 = vunpack.c.h.b16 %v472
        %v1124 = vunpack.c.l.b16 %v473
        %v1125 = vunpack.c.h.b16 %v473
        %v1126 = vunpack.c.l.b16 %v474
        %v1127 = vunpack.c.h.b16 %v474
        %v1128 = vunpack.c.l.b16 %v475
        %v1129 = vunpack.c.h.b16 %v475
        %v1130 = vunpack.c.l.b16 %v476
        %v1131 = vunpack.c.h.b16 %v476
        %v1132 = vunpack.c.l.b16 %v477
        %v1133 = vunpack.c.h.b16 %v477
        %v1134 = vunpack.c.l.b16 %v478
        %v1135 = vunpack.c.h.b16 %v478
        %v1136 = vunpack.c.l.b16 %v479
        %v1137 = vunpack.c.h.b16 %v479
        %v1138 = vunpack.c.l.b16 %v480
        %v1139 = vunpack.c.h.b16 %v480
        %v1140 = vunpack.c.l.b16 %v481
        %v1141 = vunpack.c.h.b16 %v481
        %v1142 = vunpack.c.l.b16 %v482
        %v1143 = vunpack.c.h.b16 %v482
        %v1144 = vunpack.c.l.b16 %v483
        %v1145 = vunpack.c.h.b16 %v483
        %v1146 = vunpack.c.l.b16 %v484
        %v1147 = vunpack.c.h.b16 %v484
        %v1148 = vunpack.c.l.b16 %v485
        %v1149 = vunpack.c.h.b16 %v485
        %v1150 = vunpack.c.l.b16 %v486
        %v1151 = vunpack.c.h.b16 %v486
        %v1152 = vunpack.c.l.b16 %v487
        %v1153 = vunpack.c.h.b16 %v487
        %v1154 = vunpack.c.l.b16 %v488
        %v1155 = vunpack.c.h.b16 %v488
        %v1156 = vunpack.c.l.b16 %v489
        %v1157 = vunpack.c.h.b16 %v489
        %v1158 = vunpack.c.l.b16 %v490
        %v1159 = vunpack.c.h.b16 %v490
        %v1160 = vunpack.c.l.b16 %v491
        %v1161 = vunpack.c.h.b16 %v491
        %v1162 = vunpack.c.l.b16 %v492
        %v1163 = vunpack.c.h.b16 %v492
        %v1164 = vunpack.c.l.b16 %v493
        %v1165 = vunpack.c.h.b16 %v493
        %v1166 = vunpack.c.l.b16 %v494
        %v1167 = vunpack.c.h.b16 %v494
        %v1168 = vunpack.c.l.b16 %v495
        %v1169 = vunpack.c.h.b16 %v495
        %v1170 = vunpack.c.l.b16 %v496
        %v1171 = vunpack.c.h.b16 %v496
        %v1172 = vunpack.c.l.b16 %v497
        %v1173 = vunpack.c.h.b16 %v497
        %v1174 = vunpack.c.l.b16 %v498
        %v1175 = vunpack.c.h.b16 %v498
        %v1176 = vunpack.c.l.b16 %v499
        %v1177 = vunpack.c.h.b16 %v499
        %v1178 = vunpack.c.l.b16 %v500
        %v1179 = vunpack.c.h.b16 %v500
        %v1180 = vunpack.c.l.b16 %v501
        %v1181 = vunpack.c.h.b16 %v501
        %v1182 = vunpack.c.l.b16 %v502
        %v1183 = vunpack.c.h.b16 %v502
        %v1184 = vunpack.c.l.b16 %v503
        %v1185 = vunpack.c.h.b16 %v503
        %v1186 = vunpack.c.l.b16 %v504
        %v1187 = vunpack.c.h.b16 %v504
        %v1188 = vunpack.c.l.b16 %v505
        %v1189 = vunpack.c.h.b16 %v505
        %v1190 = vunpack.c.l.b16 %v506
        %v1191 = vunpack.c.h.b16 %v506
        %v1192 = vunpack.c.l.b16 %v507
        %v1193 = vunpack.c.h.b16 %v507
        %v1194 = vunpack.c.l.b16 %v508
        %v1195 = vunpack.c.h.b16 %v508
        %v1196 = vunpack.c.l.b16 %v509
        %v1197 = vunpack.c.h.b16 %v509
        %v1198 = vunpack.c.l.b16 %v510
        %v1199 = vunpack.c.h.b16 %v510
        %v1200 = vunpack.c.l.b16 %v511
        %v1201 = vunpack.c.h.b16 %v511
        %v1202 = vunpack.c.l.b16 %v512
        %v1203 = vunpack.c.h.b16 %v512
        %v1204 = vunpack.c.l.b16 %v513
        %v1205 = vunpack.c.h.b16 %v513
        %v1206 = vunpack.c.l.b16 %v514
        %v1207 = vunpack.c.h.b16 %v514
        %v1208 = vunpack.c.l.b16 %v515
        %v1209 = vunpack.c.h.b16 %v515
        %v1210 = vunpack.c.l.b16 %v516
        %v1211 = vunpack.c.h.b16 %v516
        %v1212 = vunpack.c.l.b16 %v517
        %v1213 = vunpack.c.h.b16 %v517
        %v1214 = vunpack.c.l.b16 %v518
        %v1215 = vunpack.c.h.b16 %v518
        %v1216 = vunpack.c.l.b16 %v519
        %v1217 = vunpack.c.h.b16 %v519
        %v1218 = vunpack.c.l.b16 %v520
        %v1219 = vunpack.c.h.b16 %v520
        %v1220 = vunpack.c.l.b16 %v521
        %v1221 = vunpack.c.h.b16 %v521
        %v1222 = vunpack.c.l.b16 %v522
        %v1223 = vunpack.c.h.b16 %v522
        %v1224 = vunpack.c.l.b16 %v523
        %v1225 = vunpack.c.h.b16 %v523
        %v1226 = vunpack.c.l.b16 %v524
        %v1227 = vunpack.c.h.b16 %v524
        %v1228 = vunpack.c.l.b16 %v525
        %v1229 = vunpack.c.h.b16 %v525
        %v1230 = vunpack.c.l.b16 %v526
        %v1231 = vunpack.c.h.b16 %v526
        %v1232 = vunpack.c.l.b16 %v527
        %v1233 = vunpack.c.h.b16 %v527
        %v1234 = vunpack.c.l.b16 %v528
        %v1235 = vunpack.c.h.b16 %v528
        %v1236 = vunpack.c.l.b16 %v529
        %v1237 = vunpack.c.h.b16 %v529
        %v1238 = vunpack.c.l.b16 %v530
        %v1239 = vunpack.c.h.b16 %v530
        %v1240 = vunpack.c.l.b16 %v531
        %v1241 = vunpack.c.h.b16 %v531
        %v1242 = vunpack.c.l.b16 %v532
        %v1243 = vunpack.c.h.b16 %v532
        %v1244 = vunpack.c.l.b16 %v533
        %v1245 = vunpack.c.h.b16 %v533
        %v1246 = vunpack.c.l.b16 %v534
        %v1247 = vunpack.c.h.b16 %v534
        %v1248 = vunpack.c.l.b16 %v535
        %v1249 = vunpack.c.h.b16 %v535
        %v1250 = vunpack.c.l.b16 %v536
        %v1251 = vunpack.c.h.b16 %v536
        %v1252 = vunpack.c.l.b16 %v537
        %v1253 = vunpack.c.h.b16 %v537
        %v1254 = vunpack.c.l.b16 %v538
        %v1255 = vunpack.c.h.b16 %v538
        %v1256 = vunpack.c.l.b16 %v539
        %v1257 = vunpack.c.h.b16 %v539
        %v1258 = vunpack.c.l.b16 %v540
        %v1259 = vunpack.c.h.b16 %v540
        %v1260 = vunpack.c.l.b16 %v541
        %v1261 = vunpack.c.h.b16 %v541
        %v1262 = vunpack.c.l.b16 %v542
        %v1263 = vunpack.c.h.b16 %v542
        %v1264 = vunpack.c.l.b16 %v543
        %v1265 = vunpack.c.h.b16 %v543
        %v1266 = vunpack.c.l.b16 %v544
        %v1267 = vunpack.c.h.b16 %v544
        %v1268 = vunpack.c.l.b16 %v545
        %v1269 = vunpack.c.h.b16 %v545
        %v1270 = vunpack.c.l.b16 %v546
        %v1271 = vunpack.c.h.b16 %v546
        %v1272 = vunpack.c.l.b16 %v547
        %v1273 = vunpack.c.h.b16 %v547
        %v1274 = vunpack.c.l.b16 %v548
        %v1275 = vunpack.c.h.b16 %v548
        %v1276 = vunpack.c.l.b16 %v549
        %v1277 = vunpack.c.h.b16 %v549
        %v1278 = vunpack.c.l.b16 %v550
        %v1279 = vunpack.c.h.b16 %v550
        %v1280 = vunpack.c.l.b16 %v551
        %v1281 = vunpack.c.h.b16 %v551
        %v1282 = vunpack.c.l.b16 %v552
        %v1283 = vunpack.c.h.b16 %v552
        %v1284 = vunpack.c.l.b16 %v553
        %v1285 = vunpack.c.h.b16 %v553
        %v1286 = vunpack.c.l.b16 %v554
        %v1287 = vunpack.c.h.b16 %v554
        %v1288 = vunpack.c.l.b16 %v555
        %v1289 = vunpack.c.h.b16 %v555
        %v1290 = vunpack.c.l.b16 %v556
        %v1291 = vunpack.c.h.b16 %v556
        %v1292 = vunpack.c.l.b16 %v557
        %v1293 = vunpack.c.h.b16 %v557
        %v1294 = vunpack.c.l.b16 %v558
        %v1295 = vunpack.c.h.b16 %v558
        %v1296 = vunpack.c.l.b16 %v559
        %v1297 = vunpack.c.h.b16 %v559
        %v1298 = vunpack.c.l.b16 %v560
        %v1299 = vunpack.c.h.b16 %v560
        %v1300 = vunpack.c.l.b16 %v561
        %v1301 = vunpack.c.h.b16 %v561
        %v1302 = vunpack.c.l.b16 %v562
        %v1303 = vunpack.c.h.b16 %v562
        %v1304 = vunpack.c.l.b16 %v563
        %v1305 = vunpack.c.h.b16 %v563
        %v1306 = vunpack.c.l.b16 %v564
        %v1307 = vunpack.c.h.b16 %v564
        %v1308 = vunpack.c.l.b16 %v565
        %v1309 = vunpack.c.h.b16 %v565
        %v1310 = vunpack.c.l.b16 %v566
        %v1311 = vunpack.c.h.b16 %v566
        %v1312 = vunpack.c.l.b16 %v567
        %v1313 = vunpack.c.h.b16 %v567
        %v1314 = vunpack.c.l.b16 %v568
        %v1315 = vunpack.c.h.b16 %v568
        %v1316 = vunpack.c.l.b16 %v569
        %v1317 = vunpack.c.h.b16 %v569
        %v1318 = vunpack.c.l.b16 %v570
        %v1319 = vunpack.c.h.b16 %v570
        %v1320 = vunpack.c.l.b16 %v571
        %v1321 = vunpack.c.h.b16 %v571
        %v1322 = vunpack.c.l.b16 %v572
        %v1323 = vunpack.c.h.b16 %v572
        %v1324 = vunpack.c.l.b16 %v573
        %v1325 = vunpack.c.h.b16 %v573
        %v1326 = vunpack.c.l.b16 %v574
        %v1327 = vunpack.c.h.b16 %v574
        %v1328 = vunpack.c.l.b16 %v575
        %v1329 = vunpack.c.h.b16 %v575
        %v1330 = vunpack.c.l.b16 %v576
        %v1331 = vunpack.c.h.b16 %v576
        %v1332 = vunpack.c.l.b16 %v577
        %v1333 = vunpack.c.h.b16 %v577
        %v1334 = vunpack.c.l.b16 %v578
        %v1335 = vunpack.c.h.b16 %v578
        %v1336 = vunpack.c.l.b16 %v579
        %v1337 = vunpack.c.h.b16 %v579
        %v1338 = vunpack.c.l.b16 %v580
        %v1339 = vunpack.c.h.b16 %v580
        %v1340 = vunpack.c.l.b16 %v581
        %v1341 = vunpack.c.h.b16 %v581
        %v1342 = vunpack.c.l.b16 %v582
        %v1343 = vunpack.c.h.b16 %v582
        %v1344 = vunpack.c.l.b16 %v583
        %v1345 = vunpack.c.h.b16 %v583
        %v1346 = vunpack.c.l.b16 %v584
        %v1347 = vunpack.c.h.b16 %v584
        %v1348 = vunpack.c.l.b16 %v585
        %v1349 = vunpack.c.h.b16 %v585
        %v1350 = vunpack.c.l.b16 %v586
        %v1351 = vunpack.c.h.b16 %v586
        %v1352 = vunpack.c.l.b16 %v587
        %v1353 = vunpack.c.h.b16 %v587
        %v1354 = vunpack.c.l.b16 %v588
        %v1355 = vunpack.c.h.b16 %v588
        %v1356 = vunpack.c.l.b16 %v589
        %v1357 = vunpack.c.h.b16 %v589
        %v1358 = vunpack.c.l.b16 %v590
        %v1359 = vunpack.c.h.b16 %v590
        %v1360 = vunpack.c.l.b16 %v591
        %v1361 = vunpack.c.h.b16 %v591
        %v1362 = vunpack.c.l.b16 %v592
        %v1363 = vunpack.c.h.b16 %v592
        %v1364 = vunpack.c.l.b16 %v593
        %v1365 = vunpack.c.h.b16 %v593
        %v1366 = vunpack.c.l.b16 %v594
        %v1367 = vunpack.c.h.b16 %v594
        %v1368 = vunpack.c.l.b16 %v595
        %v1369 = vunpack.c.h.b16 %v595
        %v1370 = vunpack.c.l.b16 %v596
        %v1371 = vunpack.c.h.b16 %v596
        %v1372 = vunpack.c.l.b16 %v597
        %v1373 = vunpack.c.h.b16 %v597
        %v1374 = vunpack.c.l.b16 %v598
        %v1375 = vunpack.c.h.b16 %v598
        %v1376 = vunpack.c.l.b16 %v599
        %v1377 = vunpack.c.h.b16 %v599
        %v1378 = vunpack.c.l.b16 %v600
        %v1379 = vunpack.c.h.b16 %v600
        %v1380 = vunpack.c.l.b16 %v601
        %v1381 = vunpack.c.h.b16 %v601
        %v1382 = vunpack.c.l.b16 %v602
        %v1383 = vunpack.c.h.b16 %v602
        %v1384 = vunpack.c.l.b16 %v603
        %v1385 = vunpack.c.h.b16 %v603
        %v1386 = vunpack.c.l.b16 %v604
        %v1387 = vunpack.c.h.b16 %v604
        %v1388 = vunpack.c.l.b16 %v605
        %v1389 = vunpack.c.h.b16 %v605
        %v1390 = vunpack.c.l.b16 %v606
        %v1391 = vunpack.c.h.b16 %v606
        %v1392 = vunpack.c.l.b16 %v607
        %v1393 = vunpack.c.h.b16 %v607
        %v1394 = vunpack.c.l.b16 %v608
        %v1395 = vunpack.c.h.b16 %v608
        %v1396 = vunpack.c.l.b16 %v609
        %v1397 = vunpack.c.h.b16 %v609
        %v1398 = vunpack.c.l.b16 %v610
        %v1399 = vunpack.c.h.b16 %v610
        %v1400 = vunpack.c.l.b16 %v611
        %v1401 = vunpack.c.h.b16 %v611
        %v1402 = vunpack.c.l.b16 %v612
        %v1403 = vunpack.c.h.b16 %v612
        %v1404 = vunpack.c.l.b16 %v613
        %v1405 = vunpack.c.h.b16 %v613
        %v1406 = vunpack.c.l.b16 %v614
        %v1407 = vunpack.c.h.b16 %v614
        %v1408 = vunpack.c.l.b16 %v615
        %v1409 = vunpack.c.h.b16 %v615
        %v1410 = vunpack.c.l.b16 %v616
        %v1411 = vunpack.c.h.b16 %v616
        %v1412 = vunpack.c.l.b16 %v617
        %v1413 = vunpack.c.h.b16 %v617
        %v1414 = vunpack.c.l.b16 %v618
        %v1415 = vunpack.c.h.b16 %v618
        %v1416 = vunpack.c.l.b16 %v619
        %v1417 = vunpack.c.h.b16 %v619
        %v1418 = vunpack.c.l.b16 %v620
        %v1419 = vunpack.c.h.b16 %v620
        %v1420 = vunpack.c.l.b16 %v621
        %v1421 = vunpack.c.h.b16 %v621
        %v1422 = vunpack.c.l.b16 %v622
        %v1423 = vunpack.c.h.b16 %v622
        %v1424 = vunpack.c.l.b16 %v623
        %v1425 = vunpack.c.h.b16 %v623
        %v1426 = vunpack.c.l.b16 %v624
        %v1427 = vunpack.c.h.b16 %v624
        %v1428 = vunpack.c.l.b16 %v625
        %v1429 = vunpack.c.h.b16 %v625
        %v1430 = vunpack.c.l.b16 %v626
        %v1431 = vunpack.c.h.b16 %v626
        %v1432 = vunpack.c.l.b16 %v627
        %v1433 = vunpack.c.h.b16 %v627
        %v1434 = vunpack.c.l.b16 %v628
        %v1435 = vunpack.c.h.b16 %v628
        %v1436 = vunpack.c.l.b16 %v629
        %v1437 = vunpack.c.h.b16 %v629
        %v1438 = vunpack.c.l.b16 %v630
        %v1439 = vunpack.c.h.b16 %v630
        %v1440 = vunpack.c.l.b16 %v631
        %v1441 = vunpack.c.h.b16 %v631
        %v1442 = vunpack.c.l.b16 %v632
        %v1443 = vunpack.c.h.b16 %v632
        %v1444 = vunpack.c.l.b16 %v633
        %v1445 = vunpack.c.h.b16 %v633
        %v1446 = vunpack.c.l.b16 %v634
        %v1447 = vunpack.c.h.b16 %v634
        %v1448 = vunpack.c.l.b16 %v635
        %v1449 = vunpack.c.h.b16 %v635
        %v1450 = vunpack.c.l.b16 %v636
        %v1451 = vunpack.c.h.b16 %v636
        %v1452 = vunpack.c.l.b16 %v637
        %v1453 = vunpack.c.h.b16 %v637
        %v1454 = vunpack.c.l.b16 %v638
        %v1455 = vunpack.c.h.b16 %v638
        %v1456 = vunpack.c.l.b16 %v639
        %v1457 = vunpack.c.h.b16 %v639
        %v1458 = vunpack.c.l.b16 %v640
        %v1459 = vunpack.c.h.b16 %v640
        %v1460 = vunpack.c.l.b16 %v641
        %v1461 = vunpack.c.h.b16 %v641
        %v1462 = vunpack.c.l.b16 %v642
        %v1463 = vunpack.c.h.b16 %v642
        %v1464 = vunpack.c.l.b16 %v643
        %v1465 = vunpack.c.h.b16 %v643
        %v1466 = vunpack.c.l.b16 %v644
        %v1467 = vunpack.c.h.b16 %v644
        %v1468 = vunpack.c.l.b16 %v645
        %v1469 = vunpack.c.h.b16 %v645
        %v1470 = vunpack.c.l.b16 %v646
        %v1471 = vunpack.c.h.b16 %v646
        %v1472 = vunpack.c.l.b16 %v647
        %v1473 = vunpack.c.h.b16 %v647
        %v1474 = vunpack.c.l.b16 %v648
        %v1475 = vunpack.c.h.b16 %v648
        %v1476 = vunpack.c.l.b16 %v649
        %v1477 = vunpack.c.h.b16 %v649
        %v1478 = vunpack.c.l.b16 %v650
        %v1479 = vunpack.c.h.b16 %v650
        %v1480 = vunpack.c.l.b16 %v651
        %v1481 = vunpack.c.h.b16 %v651
        %v1482 = vunpack.c.l.b16 %v652
        %v1483 = vunpack.c.h.b16 %v652
        %v1484 = vunpack.c.l.b16 %v653
        %v1485 = vunpack.c.h.b16 %v653
        %v1486 = vunpack.c.l.b16 %v654
        %v1487 = vunpack.c.h.b16 %v654
        %v1488 = vunpack.c.l.b16 %v655
        %v1489 = vunpack.c.h.b16 %v655
        %v1490 = vunpack.c.l.b16 %v656
        %v1491 = vunpack.c.h.b16 %v656
        %v1492 = vunpack.c.l.b16 %v657
        %v1493 = vunpack.c.h.b16 %v657
        %v1494 = vunpack.c.l.b16 %v658
        %v1495 = vunpack.c.h.b16 %v658
        %v1496 = vunpack.c.l.b16 %v659
        %v1497 = vunpack.c.h.b16 %v659
        %v1498 = vunpack.c.l.b16 %v660
        %v1499 = vunpack.c.h.b16 %v660
        %v1500 = vunpack.c.l.b16 %v661
        %v1501 = vunpack.c.h.b16 %v661
        %v1502 = vunpack.c.l.b16 %v662
        %v1503 = vunpack.c.h.b16 %v662
        %v1504 = vunpack.c.l.b16 %v663
        %v1505 = vunpack.c.h.b16 %v663
        %v1506 = vunpack.c.l.b16 %v664
        %v1507 = vunpack.c.h.b16 %v664
        %v1508 = vunpack.c.l.b16 %v665
        %v1509 = vunpack.c.h.b16 %v665
        %v1510 = vunpack.c.l.b16 %v666
        %v1511 = vunpack.c.h.b16 %v666
        %v1512 = vunpack.c.l.b16 %v667
        %v1513 = vunpack.c.h.b16 %v667
        %v1514 = vunpack.c.l.b16 %v668
        %v1515 = vunpack.c.h.b16 %v668
        %v1516 = vunpack.c.l.b16 %v669
        %v1517 = vunpack.c.h.b16 %v669
        %v1518 = vunpack.c.l.b16 %v670
        %v1519 = vunpack.c.h.b16 %v670
        %v1520 = vunpack.c.l.b16 %v671
        %v1521 = vunpack.c.h.b16 %v671
        %v1522 = vunpack.c.l.b16 %v672
        %v1523 = vunpack.c.h.b16 %v672
        %v1524 = vunpack.c.l.b16 %v673
        %v1525 = vunpack.c.h.b16 %v673
        %v1526 = vunpack.c.l.b16 %v674
        %v1527 = vunpack.c.h.b16 %v674
        %v1528 = vunpack.c.l.b16 %v675
        %v1529 = vunpack.c.h.b16 %v675
        %v1530 = vunpack.c.l.b16 %v676
        %v1531 = vunpack.c.h.b16 %v676
        %v1532 = vunpack.c.l.b16 %v677
        %v1533 = vunpack.c.h.b16 %v677
        %v1534 = vunpack.c.l.b16 %v678
        %v1535 = vunpack.c.h.b16 %v678
        %v1536 = vunpack.c.l.b16 %v679
        %v1537 = vunpack.c.h.b16 %v679
        %v1538 = vunpack.c.l.b16 %v680
        %v1539 = vunpack.c.h.b16 %v680
        %v1540 = vunpack.c.l.b16 %v681
        %v1541 = vunpack.c.h.b16 %v681
        %v1542 = vunpack.c.l.b16 %v682
        %v1543 = vunpack.c.h.b16 %v682
        %v1544 = vunpack.c.l.b16 %v683
        %v1545 = vunpack.c.h.b16 %v683
        %v1546 = vunpack.c.l.b16 %v684
        %v1547 = vunpack.c.h.b16 %v684
        %v1548 = vunpack.c.l.b16 %v685
        %v1549 = vunpack.c.h.b16 %v685
        %v1550 = vunpack.c.l.b16 %v686
        %v1551 = vunpack.c.h.b16 %v686
        %v1552 = vunpack.c.l.b16 %v687
        %v1553 = vunpack.c.h.b16 %v687
        %v1554 = vunpack.c.l.b16 %v688
        %v1555 = vunpack.c.h.b16 %v688
        %v1556 = vunpack.c.l.b16 %v689
        %v1557 = vunpack.c.h.b16 %v689
        %v1558 = vunpack.c.l.b16 %v690
        %v1559 = vunpack.c.h.b16 %v690
        %v1560 = vunpack.c.l.b16 %v691
        %v1561 = vunpack.c.h.b16 %v691
        %v1562 = vunpack.c.l.b16 %v692
        %v1563 = vunpack.c.h.b16 %v692
        %v1564 = vunpack.c.l.b16 %v693
        %v1565 = vunpack.c.h.b16 %v693
        %v1566 = vunpack.c.l.b16 %v694
        %v1567 = vunpack.c.h.b16 %v694
        %v1568 = vunpack.c.l.b16 %v695
        %v1569 = vunpack.c.h.b16 %v695
        %v1570 = vunpack.c.l.b16 %v696
        %v1571 = vunpack.c.h.b16 %v696
        %v1572 = vunpack.c.l.b16 %v697
        %v1573 = vunpack.c.h.b16 %v697
        %v1574 = vunpack.c.l.b16 %v698
        %v1575 = vunpack.c.h.b16 %v698
        %v1576 = vunpack.c.l.b16 %v699
        %v1577 = vunpack.c.h.b16 %v699
        %v1578 = vunpack.c.l.b16 %v700
        %v1579 = vunpack.c.h.b16 %v700
        %v1580 = vunpack.c.l.b16 %v701
        %v1581 = vunpack.c.h.b16 %v701
        %v1582 = vunpack.c.l.b16 %v702
        %v1583 = vunpack.c.h.b16 %v702
        %v1584 = vunpack.c.l.b16 %v703
        %v1585 = vunpack.c.h.b16 %v703
        %v1586 = vunpack.c.l.b16 %v704
        %v1587 = vunpack.c.h.b16 %v704
        %v1588 = vunpack.c.l.b16 %v705
        %v1589 = vunpack.c.h.b16 %v705
        %v1590 = vunpack.c.l.b16 %v706
        %v1591 = vunpack.c.h.b16 %v706
        %v1592 = vunpack.c.l.b16 %v707
        %v1593 = vunpack.c.h.b16 %v707
        %v1594 = vunpack.c.l.b16 %v708
        %v1595 = vunpack.c.h.b16 %v708
        %v1596 = vunpack.c.l.b16 %v709
        %v1597 = vunpack.c.h.b16 %v709
        %v1598 = vunpack.c.l.b16 %v710
        %v1599 = vunpack.c.h.b16 %v710
        %v1600 = vunpack.c.l.b16 %v711
        %v1601 = vunpack.c.h.b16 %v711
        %v1602 = vunpack.c.l.b16 %v712
        %v1603 = vunpack.c.h.b16 %v712
        %v1604 = vunpack.c.l.b16 %v713
        %v1605 = vunpack.c.h.b16 %v713
        %v1606 = vunpack.c.l.b16 %v714
        %v1607 = vunpack.c.h.b16 %v714
        %v1608 = vunpack.c.l.b16 %v715
        %v1609 = vunpack.c.h.b16 %v715
        %v1610 = vunpack.c.l.b16 %v716
        %v1611 = vunpack.c.h.b16 %v716
        %v1612 = vunpack.c.l.b16 %v717
        %v1613 = vunpack.c.h.b16 %v717
        %v1614 = vunpack.c.l.b16 %v718
        %v1615 = vunpack.c.h.b16 %v718
        %v1616 = vunpack.c.l.b16 %v719
        %v1617 = vunpack.c.h.b16 %v719
        %v1618 = vunpack.c.l.b16 %v720
        %v1619 = vunpack.c.h.b16 %v720
        %v1620 = vunpack.c.l.b16 %v721
        %v1621 = vunpack.c.h.b16 %v721
        %v1622 = vunpack.c.l.b16 %v722
        %v1623 = vunpack.c.h.b16 %v722
        %v1624 = vunpack.c.l.b16 %v723
        %v1625 = vunpack.c.h.b16 %v723
        %v1626 = vunpack.c.l.b16 %v724
        %v1627 = vunpack.c.h.b16 %v724
        %v1628 = vunpack.c.l.b16 %v725
        %v1629 = vunpack.c.h.b16 %v725
        %v1630 = vunpack.c.l.b16 %v726
        %v1631 = vunpack.c.h.b16 %v726
        %v1632 = vunpack.c.l.b16 %v727
        %v1633 = vunpack.c.h.b16 %v727
        %v1634 = vunpack.c.l.b16 %v728
        %v1635 = vunpack.c.h.b16 %v728
        %v1636 = vunpack.c.l.b16 %v729
        %v1637 = vunpack.c.h.b16 %v729
        %v1638 = vunpack.c.l.b16 %v730
        %v1639 = vunpack.c.h.b16 %v730
        %v1640 = vunpack.c.l.b16 %v731
        %v1641 = vunpack.c.h.b16 %v731
        %v1642 = vunpack.c.l.b16 %v732
        %v1643 = vunpack.c.h.b16 %v732
        %v1644 = vunpack.c.l.b16 %v733
        %v1645 = vunpack.c.h.b16 %v733
        %v1646 = vunpack.c.l.b16 %v734
        %v1647 = vunpack.c.h.b16 %v734
        %v1648 = vunpack.c.l.b16 %v735
        %v1649 = vunpack.c.h.b16 %v735
        %v1650 = vunpack.c.l.b16 %v736
        %v1651 = vunpack.c.h.b16 %v736
        %v1652 = vunpack.c.l.b16 %v737
        %v1653 = vunpack.c.h.b16 %v737
        %v1654 = vunpack.c.l.b16 %v738
        %v1655 = vunpack.c.h.b16 %v738
        %v1656 = vpack.c.b16 %v1086, %v1080
        %v1657 = vpack.c.b16 %v1087, %v1081
        %v1658 = vpack.c.b16 %v1088, %v1082
        %v1659 = vpack.c.b16 %v1089, %v1083
        %v1660 = vpack.c.b16 %v1090, %v1084
        %v1661 = vpack.c.b16 %v1091, %v1085
        %v1662 = vpack.c.b16 %v1098, %v1092
        %v1663 = vpack.c.b16 %v1099, %v1093
        %v1664 = vpack.c.b16 %v1100, %v1094
        %v1665 = vpack.c.b16 %v1101, %v1095
        %v1666 = vpack.c.b16 %v1102, %v1096
        %v1667 = vpack.c.b16 %v1103, %v1097
        %v1668 = vpack.c.b16 %v1110, %v1104
        %v1669 = vpack.c.b16 %v1111, %v1105
        %v1670 = vpack.c.b16 %v1112, %v1106
        %v1671 = vpack.c.b16 %v1113, %v1107
        %v1672 = vpack.c.b16 %v1114, %v1108
        %v1673 = vpack.c.b16 %v1115, %v1109
        %v1674 = vpack.c.b16 %v1122, %v1116
        %v1675 = vpack.c.b16 %v1123, %v1117
        %v1676 = vpack.c.b16 %v1124, %v1118
        %v1677 = vpack.c.b16 %v1125, %v1119
        %v1678 = vpack.c.b16 %v1126, %v1120
        %v1679 = vpack.c.b16 %v1127, %v1121
        %v1680 = vpack.c.b16 %v1134, %v1128
        %v1681 = vpack.c.b16 %v1135, %v1129
        %v1682 = vpack.c.b16 %v1136, %v1130
        %v1683 = vpack.c.b16 %v1137, %v1131
        %v1684 = vpack.c.b16 %v1138, %v1132
        %v1685 = vpack.c.b16 %v1139, %v1133
        %v1686 = vpack.c.b16 %v1146, %v1140
        %v1687 = vpack.c.b16 %v1147, %v1141
        %v1688 = vpack.c.b16 %v1148, %v1142
        %v1689 = vpack.c.b16 %v1149, %v1143
        %v1690 = vpack.c.b16 %v1150, %v1144
        %v1691 = vpack.c.b16 %v1151, %v1145
        %v1692 = vpack.c.b16 %v1158, %v1152
        %v1693 = vpack.c.b16 %v1159, %v1153
        %v1694 = vpack.c.b16 %v1160, %v1154
        %v1695 = vpack.c.b16 %v1161, %v1155
        %v1696 = vpack.c.b16 %v1162, %v1156
        %v1697 = vpack.c.b16 %v1163, %v1157
        %v1698 = vpack.c.b16 %v1170, %v1164
        %v1699 = vpack.c.b16 %v1171, %v1165
        %v1700 = vpack.c.b16 %v1172, %v1166
        %v1701 = vpack.c.b16 %v1173, %v1167
        %v1702 = vpack.c.b16 %v1174, %v1168
        %v1703 = vpack.c.b16 %v1175, %v1169
        %v1704 = vpack.c.b16 %v1182, %v1176
        %v1705 = vpack.c.b16 %v1183, %v1177
        %v1706 = vpack.c.b16 %v1184, %v1178
        %v1707 = vpack.c.b16 %v1185, %v1179
        %v1708 = vpack.c.b16 %v1186, %v1180
        %v1709 = vpack.c.b16 %v1187, %v1181
        %v1710 = vpack.c.b16 %v1194, %v1188
        %v1711 = vpack.c.b16 %v1195, %v1189
        %v1712 = vpack.c.b16 %v1196, %v1190
        %v1713 = vpack.c.b16 %v1197, %v1191
        %v1714 = vpack.c.b16 %v1198, %v1192
        %v1715 = vpack.c.b16 %v1199, %v1193
        %v1716 = vpack.c.b16 %v1206, %v1200
        %v1717 = vpack.c.b16 %v1207, %v1201
        %v1718 = vpack.c.b16 %v1208, %v1202
        %v1719 = vpack.c.b16 %v1209, %v1203
        %v1720 = vpack.c.b16 %v1210, %v1204
        %v1721 = vpack.c.b16 %v1211, %v1205
        %v1722 = vpack.c.b16 %v1218, %v1212
        %v1723 = vpack.c.b16 %v1219, %v1213
        %v1724 = vpack.c.b16 %v1220, %v1214
        %v1725 = vpack.c.b16 %v1221, %v1215
        %v1726 = vpack.c.b16 %v1222, %v1216
        %v1727 = vpack.c.b16 %v1223, %v1217
        %v1728 = vpack.c.b16 %v1230, %v1224
        %v1729 = vpack.c.b16 %v1231, %v1225
        %v1730 = vpack.c.b16 %v1232, %v1226
        %v1731 = vpack.c.b16 %v1233, %v1227
        %v1732 = vpack.c.b16 %v1234, %v1228
        %v1733 = vpack.c.b16 %v1235, %v1229
        %v1734 = vpack.c.b16 %v1242, %v1236
        %v1735 = vpack.c.b16 %v1243, %v1237
        %v1736 = vpack.c.b16 %v1244, %v1238
        %v1737 = vpack.c.b16 %v1245, %v1239
        %v1738 = vpack.c.b16 %v1246, %v1240
        %v1739 = vpack.c.b16 %v1247, %v1241
        %v1740 = vpack.c.b16 %v1254, %v1248
        %v1741 = vpack.c.b16 %v1255, %v1249
        %v1742 = vpack.c.b16 %v1256, %v1250
        %v1743 = vpack.c.b16 %v1257, %v1251
        %v1744 = vpack.c.b16 %v1258, %v1252
        %v1745 = vpack.c.b16 %v1259, %v1253
        %v1746 = vpack.c.b16 %v1266, %v1260
        %v1747 = vpack.c.b16 %v1267, %v1261
        %v1748 = vpack.c.b16 %v1268, %v1262
        %v1749 = vpack.c.b16 %v1269, %v1263
        %v1750 = vpack.c.b16 %v1270, %v1264
        %v1751 = vpack.c.b16 %v1271, %v1265
        %v1752 = vpack.c.b16 %v1278, %v1272
        %v1753 = vpack.c.b16 %v1279, %v1273
        %v1754 = vpack.c.b16 %v1280, %v1274
        %v1755 = vpack.c.b16 %v1281, %v1275
        %v1756 = vpack.c.b16 %v1282, %v1276
        %v1757 = vpack.c.b16 %v1283, %v1277
        %v1758 = vpack.c.b16 %v1290, %v1284
        %v1759 = vpack.c.b16 %v1291, %v1285
        %v1760 = vpack.c.b16 %v1292, %v1286
        %v1761 = vpack.c.b16 %v1293, %v1287
        %v1762 = vpack.c.b16 %v1294, %v1288
        %v1763 = vpack.c.b16 %v1295, %v1289
        %v1764 = vpack.c.b16 %v1302, %v1296
        %v1765 = vpack.c.b16 %v1303, %v1297
        %v1766 = vpack.c.b16 %v1304, %v1298
        %v1767 = vpack.c.b16 %v1305, %v1299
        %v1768 = vpack.c.b16 %v1306, %v1300
        %v1769 = vpack.c.b16 %v1307, %v1301
        %v1770 = vpack.c.b16 %v1314, %v1308
        %v1771 = vpack.c.b16 %v1315, %v1309
        %v1772 = vpack.c.b16 %v1316, %v1310
        %v1773 = vpack.c.b16 %v1317, %v1311
        %v1774 = vpack.c.b16 %v1318, %v1312
        %v1775 = vpack.c.b16 %v1319, %v1313
        %v1776 = vpack.c.b16 %v1326, %v1320
        %v1777 = vpack.c.b16 %v1327, %v1321
        %v1778 = vpack.c.b16 %v1328, %v1322
        %v1779 = vpack.c.b16 %v1329, %v1323
        %v1780 = vpack.c.b16 %v1330, %v1324
        %v1781 = vpack.c.b16 %v1331, %v1325
        %v1782 = vpack.c.b16 %v1338, %v1332
        %v1783 = vpack.c.b16 %v1339, %v1333
        %v1784 = vpack.c.b16 %v1340, %v1334
        %v1785 = vpack.c.b16 %v1341, %v1335
        %v1786 = vpack.c.b16 %v1342, %v1336
        %v1787 = vpack.c.b16 %v1343, %v1337
        %v1788 = vpack.c.b16 %v1350, %v1344
        %v1789 = vpack.c.b16 %v1351, %v1345
        %v1790 = vpack.c.b16 %v1352, %v1346
        %v1791 = vpack.c.b16 %v1353, %v1347
        %v1792 = vpack.c.b16 %v1354, %v1348
        %v1793 = vpack.c.b16 %v1355, %v1349
        %v1794 = vpack.c.b16 %v1362, %v1356
        %v1795 = vpack.c.b16 %v1363, %v1357
        %v1796 = vpack.c.b16 %v1364, %v1358
        %v1797 = vpack.c.b16 %v1365, %v1359
        %v1798 = vpack.c.b16 %v1366, %v1360
        %v1799 = vpack.c.b16 %v1367, %v1361
        %v1800 = vpack.c.b16 %v1374, %v1368
        %v1801 = vpack.c.b16 %v1375, %v1369
        %v1802 = vpack.c.b16 %v1376, %v1370
        %v1803 = vpack.c.b16 %v1377, %v1371
        %v1804 = vpack.c.b16 %v1378, %v1372
        %v1805 = vpack.c.b16 %v1379, %v1373
        %v1806 = vpack.c.b16 %v1386, %v1380
        %v1807 = vpack.c.b16 %v1387, %v1381
        %v1808 = vpack.c.b16 %v1388, %v1382
        %v1809 = vpack.c.b16 %v1389, %v1383
        %v1810 = vpack.c.b16 %v1390, %v1384
        %v1811 = vpack.c.b16 %v1391, %v1385
        %v1812 = vpack.c.b16 %v1398, %v1392
        %v1813 = vpack.c.b16 %v1399, %v1393
        %v1814 = vpack.c.b16 %v1400, %v1394
        %v1815 = vpack.c.b16 %v1401, %v1395
        %v1816 = vpack.c.b16 %v1402, %v1396
        %v1817 = vpack.c.b16 %v1403, %v1397
        %v1818 = vpack.c.b16 %v1410, %v1404
        %v1819 = vpack.c.b16 %v1411, %v1405
        %v1820 = vpack.c.b16 %v1412, %v1406
        %v1821 = vpack.c.b16 %v1413, %v1407
        %v1822 = vpack.c.b16 %v1414, %v1408
        %v1823 = vpack.c.b16 %v1415, %v1409
        %v1824 = vpack.c.b16 %v1422, %v1416
        %v1825 = vpack.c.b16 %v1423, %v1417
        %v1826 = vpack.c.b16 %v1424, %v1418
        %v1827 = vpack.c.b16 %v1425, %v1419
        %v1828 = vpack.c.b16 %v1426, %v1420
        %v1829 = vpack.c.b16 %v1427, %v1421
        %v1830 = vpack.c.b16 %v1434, %v1428
        %v1831 = vpack.c.b16 %v1435, %v1429
        %v1832 = vpack.c.b16 %v1436, %v1430
        %v1833 = vpack.c.b16 %v1437, %v1431
        %v1834 = vpack.c.b16 %v1438, %v1432
        %v1835 = vpack.c.b16 %v1439, %v1433
        %v1836 = vpack.c.b16 %v1446, %v1440
        %v1837 = vpack.c.b16 %v1447, %v1441
        %v1838 = vpack.c.b16 %v1448, %v1442
        %v1839 = vpack.c.b16 %v1449, %v1443
        %v1840 = vpack.c.b16 %v1450, %v1444
        %v1841 = vpack.c.b16 %v1451, %v1445
        %v1842 = vpack.c.b16 %v1458, %v1452
        %v1843 = vpack.c.b16 %v1459, %v1453
        %v1844 = vpack.c.b16 %v1460, %v1454
        %v1845 = vpack.c.b16 %v1461, %v1455
        %v1846 = vpack.c.b16 %v1462, %v1456
        %v1847 = vpack.c.b16 %v1463, %v1457
        %v1848 = vpack.c.b16 %v1470, %v1464
        %v1849 = vpack.c.b16 %v1471, %v1465
        %v1850 = vpack.c.b16 %v1472, %v1466
        %v1851 = vpack.c.b16 %v1473, %v1467
        %v1852 = vpack.c.b16 %v1474, %v1468
        %v1853 = vpack.c.b16 %v1475, %v1469
        %v1854 = vpack.c.b16 %v1482, %v1476
        %v1855 = vpack.c.b16 %v1483, %v1477
        %v1856 = vpack.c.b16 %v1484, %v1478
        %v1857 = vpack.c.b16 %v1485, %v1479
        %v1858 = vpack.c.b16 %v1486, %v1480
        %v1859 = vpack.c.b16 %v1487, %v1481
        %v1860 = vpack.c.b16 %v1494, %v1488
        %v1861 = vpack.c.b16 %v1495, %v1489
        %v1862 = vpack.c.b16 %v1496, %v1490
        %v1863 = vpack.c.b16 %v1497, %v1491
        %v1864 = vpack.c.b16 %v1498, %v1492
        %v1865 = vpack.c.b16 %v1499, %v1493
        %v1866 = vpack.c.b16 %v1506, %v1500
        %v1867 = vpack.c.b16 %v1507, %v1501
        %v1868 = vpack.c.b16 %v1508, %v1502
        %v1869 = vpack.c.b16 %v1509, %v1503
        %v1870 = vpack.c.b16 %v1510, %v1504
        %v1871 = vpack.c.b16 %v1511, %v1505
        %v1872 = vpack.c.b16 %v1518, %v1512
        %v1873 = vpack.c.b16 %v1519, %v1513
        %v1874 = vpack.c.b16 %v1520, %v1514
        %v1875 = vpack.c.b16 %v1521, %v1515
        %v1876 = vpack.c.b16 %v1522, %v1516
        %v1877 = vpack.c.b16 %v1523, %v1517
        %v1878 = vpack.c.b16 %v1530, %v1524
        %v1879 = vpack.c.b16 %v1531, %v1525
        %v1880 = vpack.c.b16 %v1532, %v1526
        %v1881 = vpack.c.b16 %v1533, %v1527
        %v1882 = vpack.c.b16 %v1534, %v1528
        %v1883 = vpack.c.b16 %v1535, %v1529
        %v1884 = vpack.c.b16 %v1542, %v1536
        %v1885 = vpack.c.b16 %v1543, %v1537
        %v1886 = vpack.c.b16 %v1544, %v1538
        %v1887 = vpack.c.b16 %v1545, %v1539
        %v1888 = vpack.c.b16 %v1546, %v1540
        %v1889 = vpack.c.b16 %v1547, %v1541
        %v1890 = vpack.c.b16 %v1554, %v1548
        %v1891 = vpack.c.b16 %v1555, %v1549
        %v1892 = vpack.c.b16 %v1556, %v1550
        %v1893 = vpack.c.b16 %v1557, %v1551
        %v1894 = vpack.c.b16 %v1558, %v1552
        %v1895 = vpack.c.b16 %v1559, %v1553
        %v1896 = vpack.c.b16 %v1566, %v1560
        %v1897 = vpack.c.b16 %v1567, %v1561
        %v1898 = vpack.c.b16 %v1568, %v1562
        %v1899 = vpack.c.b16 %v1569, %v1563
        %v1900 = vpack.c.b16 %v1570, %v1564
        %v1901 = vpack.c.b16 %v1571, %v1565
        %v1902 = vpack.c.b16 %v1578, %v1572
        %v1903 = vpack.c.b16 %v1579, %v1573
        %v1904 = vpack.c.b16 %v1580, %v1574
        %v1905 = vpack.c.b16 %v1581, %v1575
        %v1906 = vpack.c.b16 %v1582, %v1576
        %v1907 = vpack.c.b16 %v1583, %v1577
        %v1908 = vpack.c.b16 %v1590, %v1584
        %v1909 = vpack.c.b16 %v1591, %v1585
        %v1910 = vpack.c.b16 %v1592, %v1586
        %v1911 = vpack.c.b16 %v1593, %v1587
        %v1912 = vpack.c.b16 %v1594, %v1588
        %v1913 = vpack.c.b16 %v1595, %v1589
        %v1914 = vpack.c.b16 %v1602, %v1596
        %v1915 = vpack.c.b16 %v1603, %v1597
        %v1916 = vpack.c.b16 %v1604, %v1598
        %v1917 = vpack.c.b16 %v1605, %v1599
        %v1918 = vpack.c.b16 %v1606, %v1600
        %v1919 = vpack.c.b16 %v1607, %v1601
        %v1920 = vpack.c.b16 %v1614, %v1608
        %v1921 = vpack.c.b16 %v1615, %v1609
        %v1922 = vpack.c.b16 %v1616, %v1610
        %v1923 = vpack.c.b16 %v1617, %v1611
        %v1924 = vpack.c.b16 %v1618, %v1612
        %v1925 = vpack.c.b16 %v1619, %v1613
        %v1926 = vpack.c.b16 %v1626, %v1620
        %v1927 = vpack.c.b16 %v1627, %v1621
        %v1928 = vpack.c.b16 %v1628, %v1622
        %v1929 = vpack.c.b16 %v1629, %v1623
        %v1930 = vpack.c.b16 %v1630, %v1624
        %v1931 = vpack.c.b16 %v1631, %v1625
        %v1932 = vpack.c.b16 %v1638, %v1632
        %v1933 = vpack.c.b16 %v1639, %v1633
        %v1934 = vpack.c.b16 %v1640, %v1634
        %v1935 = vpack.c.b16 %v1641, %v1635
        %v1936 = vpack.c.b16 %v1642, %v1636
        %v1937 = vpack.c.b16 %v1643, %v1637
        %v1938 = vpack.c.b16 %v1650, %v1644
        %v1939 = vpack.c.b16 %v1651, %v1645
        %v1940 = vpack.c.b16 %v1652, %v1646
        %v1941 = vpack.c.b16 %v1653, %v1647
        %v1942 = vpack.c.b16 %v1654, %v1648
        %v1943 = vpack.c.b16 %v1655, %v1649
        %2232 = vmatprep.subr.bf16.mxu0 %v1657
        %2233 = vmatpush1.bf16.msra.mxu0 %v1656
        %2234 = vmatprep.subr.bf16.mxu0 %v1663
        %2235 = vmatpush1.bf16.msra.mxu0 %v1662
        %2236 = vmatprep.subr.bf16.mxu0 %v1669
        %2237 = vmatpush1.bf16.msra.mxu0 %v1668
        %2238 = vmatprep.subr.bf16.mxu0 %v1675
        %2239 = vmatpush1.bf16.msra.mxu0 %v1674
        %2240 = vmatprep.subr.bf16.mxu0 %v1681
        %2241 = vmatpush1.bf16.msra.mxu0 %v1680
        %2242 = vmatprep.subr.bf16.mxu0 %v1687
        %2243 = vmatpush1.bf16.msra.mxu0 %v1686
        %2244 = vmatprep.subr.bf16.mxu0 %v1693
        %2245 = vmatpush1.bf16.msra.mxu0 %v1692
        %2246 = vmatprep.subr.bf16.mxu0 %v1699
        %2247 = vmatpush1.bf16.msra.mxu0 %v1698
        %2248 = vmatprep.subr.bf16.mxu0 %v1705
        %2249 = vmatpush1.bf16.msra.mxu0 %v1704
        %2250 = vmatprep.subr.bf16.mxu0 %v1711
        %2251 = vmatpush1.bf16.msra.mxu0 %v1710
        %2252 = vmatprep.subr.bf16.mxu0 %v1717
        %2253 = vmatpush1.bf16.msra.mxu0 %v1716
        %2254 = vmatprep.subr.bf16.mxu0 %v1723
        %2255 = vmatpush1.bf16.msra.mxu0 %v1722
        %2256 = vmatprep.subr.bf16.mxu0 %v1729
        %2257 = vmatpush1.bf16.msra.mxu0 %v1728
        %2258 = vmatprep.subr.bf16.mxu0 %v1735
        %2259 = vmatpush1.bf16.msra.mxu0 %v1734
        %2260 = vmatprep.subr.bf16.mxu0 %v1741
        %2261 = vmatpush1.bf16.msra.mxu0 %v1740
        %2262 = vmatprep.subr.bf16.mxu0 %v1747
        %2263 = vmatpush1.bf16.msra.mxu0 %v1746
        %2264 = vmatprep.mubr.bf16.mxu0 %v781
        %2265 = vmatmul.mubr.bf16.gmra.mrb[0].mxu0 %v780
        %v2266 = vpop.f32.mrb[0].mxu0
        %v2267 = vadd.f32 %v744, %v2266
        %v2268 = vpop.f32.mrb[0].mxu0
        %v2269 = vadd.f32 %v748, %v2268
        %v2270 = vpop.f32.mrb[0].mxu0
        %v2271 = vpop.f32.mrb[0].mxu0
        %2272 = vdwg.mxu0
        %2273 = vmatprep.subr.bf16.mxu0 %v1753
        %2274 = vmatpush1.bf16.msra.mxu0 %v1752
        %2275 = vmatprep.subr.bf16.mxu0 %v1759
        %2276 = vmatpush1.bf16.msra.mxu0 %v1758
        %2277 = vmatprep.subr.bf16.mxu0 %v1765
        %2278 = vmatpush1.bf16.msra.mxu0 %v1764
        %2279 = vmatprep.subr.bf16.mxu0 %v1771
        %2280 = vmatpush1.bf16.msra.mxu0 %v1770
        %2281 = vmatprep.subr.bf16.mxu0 %v1777
        %2282 = vmatpush1.bf16.msra.mxu0 %v1776
        %2283 = vmatprep.subr.bf16.mxu0 %v1783
        %2284 = vmatpush1.bf16.msra.mxu0 %v1782
        %2285 = vmatprep.subr.bf16.mxu0 %v1789
        %2286 = vmatpush1.bf16.msra.mxu0 %v1788
        %2287 = vmatprep.subr.bf16.mxu0 %v1795
        %2288 = vmatpush1.bf16.msra.mxu0 %v1794
        %2289 = vmatprep.subr.bf16.mxu0 %v1801
        %2290 = vmatpush1.bf16.msra.mxu0 %v1800
        %2291 = vmatprep.subr.bf16.mxu0 %v1807
        %2292 = vmatpush1.bf16.msra.mxu0 %v1806
        %2293 = vmatprep.subr.bf16.mxu0 %v1813
        %2294 = vmatpush1.bf16.msra.mxu0 %v1812
        %2295 = vmatprep.subr.bf16.mxu0 %v1819
        %2296 = vmatpush1.bf16.msra.mxu0 %v1818
        %2297 = vmatprep.subr.bf16.mxu0 %v1825
        %2298 = vmatpush1.bf16.msra.mxu0 %v1824
        %2299 = vmatprep.subr.bf16.mxu0 %v1831
        %2300 = vmatpush1.bf16.msra.mxu0 %v1830
        %2301 = vmatprep.subr.bf16.mxu0 %v1837
        %2302 = vmatpush1.bf16.msra.mxu0 %v1836
        %2303 = vmatprep.subr.bf16.mxu0 %v1843
        %2304 = vmatpush1.bf16.msra.mxu0 %v1842
        %2305 = vmatprep.mubr.bf16.mxu0 %v783
        %2306 = vmatmul.mubr.bf16.gmra.mrb[0].mxu0 %v782
        %v2307 = vpop.f32.mrb[0].mxu0
        %v2308 = vadd.f32 %v2267, %v2307
        %v2309 = vpop.f32.mrb[0].mxu0
        %v2310 = vadd.f32 %v2269, %v2309
        %v2311 = vpop.f32.mrb[0].mxu0
        %v2312 = vpop.f32.mrb[0].mxu0
        %2313 = vdwg.mxu0
        %2314 = vmatprep.subr.bf16.mxu0 %v1849
        %2315 = vmatpush1.bf16.msra.mxu0 %v1848
        %2316 = vmatprep.subr.bf16.mxu0 %v1855
        %2317 = vmatpush1.bf16.msra.mxu0 %v1854
        %2318 = vmatprep.subr.bf16.mxu0 %v1861
        %2319 = vmatpush1.bf16.msra.mxu0 %v1860
        %2320 = vmatprep.subr.bf16.mxu0 %v1867
        %2321 = vmatpush1.bf16.msra.mxu0 %v1866
        %2322 = vmatprep.subr.bf16.mxu0 %v1873
        %2323 = vmatpush1.bf16.msra.mxu0 %v1872
        %2324 = vmatprep.subr.bf16.mxu0 %v1879
        %2325 = vmatpush1.bf16.msra.mxu0 %v1878
        %2326 = vmatprep.subr.bf16.mxu0 %v1885
        %2327 = vmatpush1.bf16.msra.mxu0 %v1884
        %2328 = vmatprep.subr.bf16.mxu0 %v1891
        %2329 = vmatpush1.bf16.msra.mxu0 %v1890
        %2330 = vmatprep.subr.bf16.mxu0 %v1897
        %2331 = vmatpush1.bf16.msra.mxu0 %v1896
        %2332 = vmatprep.subr.bf16.mxu0 %v1903
        %2333 = vmatpush1.bf16.msra.mxu0 %v1902
        %2334 = vmatprep.subr.bf16.mxu0 %v1909
        %2335 = vmatpush1.bf16.msra.mxu0 %v1908
        %2336 = vmatprep.subr.bf16.mxu0 %v1915
        %2337 = vmatpush1.bf16.msra.mxu0 %v1914
        %2338 = vmatprep.subr.bf16.mxu0 %v1921
        %2339 = vmatpush1.bf16.msra.mxu0 %v1920
        %2340 = vmatprep.subr.bf16.mxu0 %v1927
        %2341 = vmatpush1.bf16.msra.mxu0 %v1926
        %2342 = vmatprep.subr.bf16.mxu0 %v1933
        %2343 = vmatpush1.bf16.msra.mxu0 %v1932
        %2344 = vmatprep.subr.bf16.mxu0 %v1939
        %2345 = vmatpush1.bf16.msra.mxu0 %v1938
        %2346 = vmatprep.mubr.bf16.mxu0 %v785
        %2347 = vmatmul.mubr.bf16.gmra.mrb[0].mxu0 %v784
        %v2348 = vpop.f32.mrb[0].mxu0
        %v2349 = vadd.f32 %v2308, %v2348
        %v2350 = vpop.f32.mrb[0].mxu0
        %v2351 = vadd.f32 %v2310, %v2350
        %v2352 = vpop.f32.mrb[0].mxu0
        %v2353 = vpop.f32.mrb[0].mxu0
        %2354 = vdwg.mxu0
        %2355 = vmatprep.subr.bf16.mxu0 %v1659
        %2356 = vmatpush1.bf16.msra.mxu0 %v1658
        %2357 = vmatprep.subr.bf16.mxu0 %v1665
        %2358 = vmatpush1.bf16.msra.mxu0 %v1664
        %2359 = vmatprep.subr.bf16.mxu0 %v1671
        %2360 = vmatpush1.bf16.msra.mxu0 %v1670
        %2361 = vmatprep.subr.bf16.mxu0 %v1677
        %2362 = vmatpush1.bf16.msra.mxu0 %v1676
        %2363 = vmatprep.subr.bf16.mxu0 %v1683
        %2364 = vmatpush1.bf16.msra.mxu0 %v1682
        %2365 = vmatprep.subr.bf16.mxu0 %v1689
        %2366 = vmatpush1.bf16.msra.mxu0 %v1688
        %2367 = vmatprep.subr.bf16.mxu0 %v1695
        %2368 = vmatpush1.bf16.msra.mxu0 %v1694
        %2369 = vmatprep.subr.bf16.mxu0 %v1701
        %2370 = vmatpush1.bf16.msra.mxu0 %v1700
        %2371 = vmatprep.subr.bf16.mxu0 %v1707
        %2372 = vmatpush1.bf16.msra.mxu0 %v1706
        %2373 = vmatprep.subr.bf16.mxu0 %v1713
        %2374 = vmatpush1.bf16.msra.mxu0 %v1712
        %2375 = vmatprep.subr.bf16.mxu0 %v1719
        %2376 = vmatpush1.bf16.msra.mxu0 %v1718
        %2377 = vmatprep.subr.bf16.mxu0 %v1725
        %2378 = vmatpush1.bf16.msra.mxu0 %v1724
        %2379 = vmatprep.subr.bf16.mxu0 %v1731
        %2380 = vmatpush1.bf16.msra.mxu0 %v1730
        %2381 = vmatprep.subr.bf16.mxu0 %v1737
        %2382 = vmatpush1.bf16.msra.mxu0 %v1736
        %2383 = vmatprep.subr.bf16.mxu0 %v1743
        %2384 = vmatpush1.bf16.msra.mxu0 %v1742
        %2385 = vmatprep.subr.bf16.mxu0 %v1749
        %2386 = vmatpush1.bf16.msra.mxu0 %v1748
        %2387 = vmatprep.mubr.bf16.mxu0 %v781
        %2388 = vmatmul.mubr.bf16.gmra.mrb[0].mxu0 %v780
        %v2389 = vpop.f32.mrb[0].mxu0
        %v2390 = vadd.f32 %v752, %v2389
        %v2391 = vpop.f32.mrb[0].mxu0
        %v2392 = vadd.f32 %v756, %v2391
        %v2393 = vpop.f32.mrb[0].mxu0
        %v2394 = vpop.f32.mrb[0].mxu0
        %2395 = vdwg.mxu0
        %2396 = vmatprep.subr.bf16.mxu0 %v1755
        %2397 = vmatpush1.bf16.msra.mxu0 %v1754
        %2398 = vmatprep.subr.bf16.mxu0 %v1761
        %2399 = vmatpush1.bf16.msra.mxu0 %v1760
        %2400 = vmatprep.subr.bf16.mxu0 %v1767
        %2401 = vmatpush1.bf16.msra.mxu0 %v1766
        %2402 = vmatprep.subr.bf16.mxu0 %v1773
        %2403 = vmatpush1.bf16.msra.mxu0 %v1772
        %2404 = vmatprep.subr.bf16.mxu0 %v1779
        %2405 = vmatpush1.bf16.msra.mxu0 %v1778
        %2406 = vmatprep.subr.bf16.mxu0 %v1785
        %2407 = vmatpush1.bf16.msra.mxu0 %v1784
        %2408 = vmatprep.subr.bf16.mxu0 %v1791
        %2409 = vmatpush1.bf16.msra.mxu0 %v1790
        %2410 = vmatprep.subr.bf16.mxu0 %v1797
        %2411 = vmatpush1.bf16.msra.mxu0 %v1796
        %2412 = vmatprep.subr.bf16.mxu0 %v1803
        %2413 = vmatpush1.bf16.msra.mxu0 %v1802
        %2414 = vmatprep.subr.bf16.mxu0 %v1809
        %2415 = vmatpush1.bf16.msra.mxu0 %v1808
        %2416 = vmatprep.subr.bf16.mxu0 %v1815
        %2417 = vmatpush1.bf16.msra.mxu0 %v1814
        %2418 = vmatprep.subr.bf16.mxu0 %v1821
        %2419 = vmatpush1.bf16.msra.mxu0 %v1820
        %2420 = vmatprep.subr.bf16.mxu0 %v1827
        %2421 = vmatpush1.bf16.msra.mxu0 %v1826
        %2422 = vmatprep.subr.bf16.mxu0 %v1833
        %2423 = vmatpush1.bf16.msra.mxu0 %v1832
        %2424 = vmatprep.subr.bf16.mxu0 %v1839
        %2425 = vmatpush1.bf16.msra.mxu0 %v1838
        %2426 = vmatprep.subr.bf16.mxu0 %v1845
        %2427 = vmatpush1.bf16.msra.mxu0 %v1844
        %2428 = vmatprep.mubr.bf16.mxu0 %v783
        %2429 = vmatmul.mubr.bf16.gmra.mrb[0].mxu0 %v782
        %v2430 = vpop.f32.mrb[0].mxu0
        %v2431 = vadd.f32 %v2390, %v2430
        %v2432 = vpop.f32.mrb[0].mxu0
        %v2433 = vadd.f32 %v2392, %v2432
        %v2434 = vpop.f32.mrb[0].mxu0
        %v2435 = vpop.f32.mrb[0].mxu0
        %2436 = vdwg.mxu0
        %2437 = vmatprep.subr.bf16.mxu0 %v1851
        %2438 = vmatpush1.bf16.msra.mxu0 %v1850
        %2439 = vmatprep.subr.bf16.mxu0 %v1857
        %2440 = vmatpush1.bf16.msra.mxu0 %v1856
        %2441 = vmatprep.subr.bf16.mxu0 %v1863
        %2442 = vmatpush1.bf16.msra.mxu0 %v1862
        %2443 = vmatprep.subr.bf16.mxu0 %v1869
        %2444 = vmatpush1.bf16.msra.mxu0 %v1868
        %2445 = vmatprep.subr.bf16.mxu0 %v1875
        %2446 = vmatpush1.bf16.msra.mxu0 %v1874
        %2447 = vmatprep.subr.bf16.mxu0 %v1881
        %2448 = vmatpush1.bf16.msra.mxu0 %v1880
        %2449 = vmatprep.subr.bf16.mxu0 %v1887
        %2450 = vmatpush1.bf16.msra.mxu0 %v1886
        %2451 = vmatprep.subr.bf16.mxu0 %v1893
        %2452 = vmatpush1.bf16.msra.mxu0 %v1892
        %2453 = vmatprep.subr.bf16.mxu0 %v1899
        %2454 = vmatpush1.bf16.msra.mxu0 %v1898
        %2455 = vmatprep.subr.bf16.mxu0 %v1905
        %2456 = vmatpush1.bf16.msra.mxu0 %v1904
        %2457 = vmatprep.subr.bf16.mxu0 %v1911
        %2458 = vmatpush1.bf16.msra.mxu0 %v1910
        %2459 = vmatprep.subr.bf16.mxu0 %v1917
        %2460 = vmatpush1.bf16.msra.mxu0 %v1916
        %2461 = vmatprep.subr.bf16.mxu0 %v1923
        %2462 = vmatpush1.bf16.msra.mxu0 %v1922
        %2463 = vmatprep.subr.bf16.mxu0 %v1929
        %2464 = vmatpush1.bf16.msra.mxu0 %v1928
        %2465 = vmatprep.subr.bf16.mxu0 %v1935
        %2466 = vmatpush1.bf16.msra.mxu0 %v1934
        %2467 = vmatprep.subr.bf16.mxu0 %v1941
        %2468 = vmatpush1.bf16.msra.mxu0 %v1940
        %2469 = vmatprep.mubr.bf16.mxu0 %v785
        %2470 = vmatmul.mubr.bf16.gmra.mrb[0].mxu0 %v784
        %v2471 = vpop.f32.mrb[0].mxu0
        %v2472 = vadd.f32 %v2431, %v2471
        %v2473 = vpop.f32.mrb[0].mxu0
        %v2474 = vadd.f32 %v2433, %v2473
        %v2475 = vpop.f32.mrb[0].mxu0
        %v2476 = vpop.f32.mrb[0].mxu0
        %2477 = vdwg.mxu0
        %2478 = vmatprep.subr.bf16.mxu0 %v1661
        %2479 = vmatpush1.bf16.msra.mxu0 %v1660
        %2480 = vmatprep.subr.bf16.mxu0 %v1667
        %2481 = vmatpush1.bf16.msra.mxu0 %v1666
        %2482 = vmatprep.subr.bf16.mxu0 %v1673
        %2483 = vmatpush1.bf16.msra.mxu0 %v1672
        %2484 = vmatprep.subr.bf16.mxu0 %v1679
        %2485 = vmatpush1.bf16.msra.mxu0 %v1678
        %2486 = vmatprep.subr.bf16.mxu0 %v1685
        %2487 = vmatpush1.bf16.msra.mxu0 %v1684
        %2488 = vmatprep.subr.bf16.mxu0 %v1691
        %2489 = vmatpush1.bf16.msra.mxu0 %v1690
        %2490 = vmatprep.subr.bf16.mxu0 %v1697
        %2491 = vmatpush1.bf16.msra.mxu0 %v1696
        %2492 = vmatprep.subr.bf16.mxu0 %v1703
        %2493 = vmatpush1.bf16.msra.mxu0 %v1702
        %2494 = vmatprep.subr.bf16.mxu0 %v1709
        %2495 = vmatpush1.bf16.msra.mxu0 %v1708
        %2496 = vmatprep.subr.bf16.mxu0 %v1715
        %2497 = vmatpush1.bf16.msra.mxu0 %v1714
        %2498 = vmatprep.subr.bf16.mxu0 %v1721
        %2499 = vmatpush1.bf16.msra.mxu0 %v1720
        %2500 = vmatprep.subr.bf16.mxu0 %v1727
        %2501 = vmatpush1.bf16.msra.mxu0 %v1726
        %2502 = vmatprep.subr.bf16.mxu0 %v1733
        %2503 = vmatpush1.bf16.msra.mxu0 %v1732
        %2504 = vmatprep.subr.bf16.mxu0 %v1739
        %2505 = vmatpush1.bf16.msra.mxu0 %v1738
        %2506 = vmatprep.subr.bf16.mxu0 %v1745
        %2507 = vmatpush1.bf16.msra.mxu0 %v1744
        %2508 = vmatprep.subr.bf16.mxu0 %v1751
        %2509 = vmatpush1.bf16.msra.mxu0 %v1750
        %2510 = vmatprep.mubr.bf16.mxu0 %v781
        %2511 = vmatmul.mubr.bf16.gmra.mrb[0].mxu0 %v780
        %v2512 = vpop.f32.mrb[0].mxu0
        %v2513 = vadd.f32 %v760, %v2512
        %v2514 = vpop.f32.mrb[0].mxu0
        %v2515 = vadd.f32 %v764, %v2514
        %v2516 = vpop.f32.mrb[0].mxu0
        %v2517 = vpop.f32.mrb[0].mxu0
        %2518 = vdwg.mxu0
        %2519 = vmatprep.subr.bf16.mxu0 %v1757
        %2520 = vmatpush1.bf16.msra.mxu0 %v1756
        %2521 = vmatprep.subr.bf16.mxu0 %v1763
        %2522 = vmatpush1.bf16.msra.mxu0 %v1762
        %2523 = vmatprep.subr.bf16.mxu0 %v1769
        %2524 = vmatpush1.bf16.msra.mxu0 %v1768
        %2525 = vmatprep.subr.bf16.mxu0 %v1775
        %2526 = vmatpush1.bf16.msra.mxu0 %v1774
        %2527 = vmatprep.subr.bf16.mxu0 %v1781
        %2528 = vmatpush1.bf16.msra.mxu0 %v1780
        %2529 = vmatprep.subr.bf16.mxu0 %v1787
        %2530 = vmatpush1.bf16.msra.mxu0 %v1786
        %2531 = vmatprep.subr.bf16.mxu0 %v1793
        %2532 = vmatpush1.bf16.msra.mxu0 %v1792
        %2533 = vmatprep.subr.bf16.mxu0 %v1799
        %2534 = vmatpush1.bf16.msra.mxu0 %v1798
        %2535 = vmatprep.subr.bf16.mxu0 %v1805
        %2536 = vmatpush1.bf16.msra.mxu0 %v1804
        %2537 = vmatprep.subr.bf16.mxu0 %v1811
        %2538 = vmatpush1.bf16.msra.mxu0 %v1810
        %2539 = vmatprep.subr.bf16.mxu0 %v1817
        %2540 = vmatpush1.bf16.msra.mxu0 %v1816
        %2541 = vmatprep.subr.bf16.mxu0 %v1823
        %2542 = vmatpush1.bf16.msra.mxu0 %v1822
        %2543 = vmatprep.subr.bf16.mxu0 %v1829
        %2544 = vmatpush1.bf16.msra.mxu0 %v1828
        %2545 = vmatprep.subr.bf16.mxu0 %v1835
        %2546 = vmatpush1.bf16.msra.mxu0 %v1834
        %2547 = vmatprep.subr.bf16.mxu0 %v1841
        %2548 = vmatpush1.bf16.msra.mxu0 %v1840
        %2549 = vmatprep.subr.bf16.mxu0 %v1847
        %2550 = vmatpush1.bf16.msra.mxu0 %v1846
        %2551 = vmatprep.mubr.bf16.mxu0 %v783
        %2552 = vmatmul.mubr.bf16.gmra.mrb[0].mxu0 %v782
        %v2553 = vpop.f32.mrb[0].mxu0
        %v2554 = vadd.f32 %v2513, %v2553
        %v2555 = vpop.f32.mrb[0].mxu0
        %v2556 = vadd.f32 %v2515, %v2555
        %v2557 = vpop.f32.mrb[0].mxu0
        %v2558 = vpop.f32.mrb[0].mxu0
        %2559 = vdwg.mxu0
        %2560 = vmatprep.subr.bf16.mxu0 %v1853
        %2561 = vmatpush1.bf16.msra.mxu0 %v1852
        %2562 = vmatprep.subr.bf16.mxu0 %v1859
        %2563 = vmatpush1.bf16.msra.mxu0 %v1858
        %2564 = vmatprep.subr.bf16.mxu0 %v1865
        %2565 = vmatpush1.bf16.msra.mxu0 %v1864
        %2566 = vmatprep.subr.bf16.mxu0 %v1871
        %2567 = vmatpush1.bf16.msra.mxu0 %v1870
        %2568 = vmatprep.subr.bf16.mxu0 %v1877
        %2569 = vmatpush1.bf16.msra.mxu0 %v1876
        %2570 = vmatprep.subr.bf16.mxu0 %v1883
        %2571 = vmatpush1.bf16.msra.mxu0 %v1882
        %2572 = vmatprep.subr.bf16.mxu0 %v1889
        %2573 = vmatpush1.bf16.msra.mxu0 %v1888
        %2574 = vmatprep.subr.bf16.mxu0 %v1895
        %2575 = vmatpush1.bf16.msra.mxu0 %v1894
        %2576 = vmatprep.subr.bf16.mxu0 %v1901
        %2577 = vmatpush1.bf16.msra.mxu0 %v1900
        %2578 = vmatprep.subr.bf16.mxu0 %v1907
        %2579 = vmatpush1.bf16.msra.mxu0 %v1906
        %2580 = vmatprep.subr.bf16.mxu0 %v1913
        %2581 = vmatpush1.bf16.msra.mxu0 %v1912
        %2582 = vmatprep.subr.bf16.mxu0 %v1919
        %2583 = vmatpush1.bf16.msra.mxu0 %v1918
        %2584 = vmatprep.subr.bf16.mxu0 %v1925
        %2585 = vmatpush1.bf16.msra.mxu0 %v1924
        %2586 = vmatprep.subr.bf16.mxu0 %v1931
        %2587 = vmatpush1.bf16.msra.mxu0 %v1930
        %2588 = vmatprep.subr.bf16.mxu0 %v1937
        %2589 = vmatpush1.bf16.msra.mxu0 %v1936
        %2590 = vmatprep.subr.bf16.mxu0 %v1943
        %2591 = vmatpush1.bf16.msra.mxu0 %v1942
        %2592 = vmatprep.mubr.bf16.mxu0 %v785
        %2593 = vmatmul.mubr.bf16.gmra.mrb[0].mxu0 %v784
        %v2594 = vpop.f32.mrb[0].mxu0
        %v2595 = vadd.f32 %v2554, %v2594
        %v2596 = vpop.f32.mrb[0].mxu0
        %v2597 = vadd.f32 %v2556, %v2596
        %v2598 = vpop.f32.mrb[0].mxu0
        %v2599 = vpop.f32.mrb[0].mxu0
        %2600 = vdwg.mxu0
        %v2601 = vtanh.pop %v2349
        %v2602 = vtanh.pop %v2351
        %v2603 = vtanh.pop %v2472
        %v2604 = vtanh.pop %v2474
        %v2605 = vtanh.pop %v2595
        %v2606 = vtanh.pop %v2597
        %v2607 = vpack.c.bf16 %v2601, %v2601
        %v2608 = vpack.c.bf16 %v2602, %v2602
        %v2609 = vpack.c.bf16 %v2603, %v2603
        %v2610 = vpack.c.bf16 %v2604, %v2604
        %v2611 = vpack.c.bf16 %v2605, %v2605
        %v2612 = vpack.c.bf16 %v2606, %v2606
        %v2613 = vld [vmem:[#allocation6] sm:$0xff]
        %v2614 = vld [vmem:[#allocation6 + $0x8] sm:$0xff]
        %v2615 = vld [vmem:[#allocation6 + $0x10] sm:$0xff]
        %v2616 = vld [vmem:[#allocation6 + $0x18] sm:$0xff]
        %v2617 = vld [vmem:[#allocation6 + $0x20] sm:$0xff]
        %v2618 = vld [vmem:[#allocation6 + $0x28] sm:$0xff]
        %v2619 = vld [vmem:[#allocation6 + $0x30] sm:$0xff]
        %v2620 = vld [vmem:[#allocation6 + $0x38] sm:$0xff]
        %v2621 = vld [vmem:[#allocation6 + $0x40] sm:$0xff]
        %v2622 = vld [vmem:[#allocation6 + $0x48] sm:$0xff]
        %v2623 = vld [vmem:[#allocation6 + $0x50] sm:$0xff]
        %v2624 = vld [vmem:[#allocation6 + $0x58] sm:$0xff]
        %v2625 = vld [vmem:[#allocation6 + $0x60] sm:$0xff]
        %v2626 = vld [vmem:[#allocation6 + $0x68] sm:$0xff]
        %v2627 = vld [vmem:[#allocation6 + $0x70] sm:$0xff]
        %v2628 = vld [vmem:[#allocation6 + $0x78] sm:$0xff]
        %v2629 = vld [vmem:[#allocation6 + $0x80] sm:$0xff]
        %v2630 = vld [vmem:[#allocation6 + $0x88] sm:$0xff]
        %v2631 = vld [vmem:[#allocation6 + $0x90] sm:$0xff]
        %v2632 = vld [vmem:[#allocation6 + $0x98] sm:$0xff]
        %v2633 = vld [vmem:[#allocation6 + $0xa0] sm:$0xff]
        %v2634 = vld [vmem:[#allocation6 + $0xa8] sm:$0xff]
        %v2635 = vld [vmem:[#allocation6 + $0xb0] sm:$0xff]
        %v2636 = vld [vmem:[#allocation6 + $0xb8] sm:$0xff]
        %v2637 = vld [vmem:[#allocation6 + $0xc0] sm:$0xff]
        %v2638 = vld [vmem:[#allocation6 + $0xc8] sm:$0xff]
        %v2639 = vld [vmem:[#allocation6 + $0xd0] sm:$0xff]
        %v2640 = vld [vmem:[#allocation6 + $0xd8] sm:$0xff]
        %v2641 = vld [vmem:[#allocation6 + $0xe0] sm:$0xff]
        %v2642 = vld [vmem:[#allocation6 + $0xe8] sm:$0xff]
        %v2643 = vld [vmem:[#allocation6 + $0xf0] sm:$0xff]
        %v2644 = vld [vmem:[#allocation6 + $0xf8] sm:$0xff]
        %v2645 = vld [vmem:[#allocation6 + $0x100] sm:$0xff]
        %v2646 = vld [vmem:[#allocation6 + $0x108] sm:$0xff]
        %v2647 = vld [vmem:[#allocation6 + $0x110] sm:$0xff]
        %v2648 = vld [vmem:[#allocation6 + $0x118] sm:$0xff]
        %v2649 = vld [vmem:[#allocation6 + $0x120] sm:$0xff]
        %v2650 = vld [vmem:[#allocation6 + $0x128] sm:$0xff]
        %v2651 = vld [vmem:[#allocation6 + $0x130] sm:$0xff]
        %v2652 = vld [vmem:[#allocation6 + $0x138] sm:$0xff]
        %v2653 = vld [vmem:[#allocation6 + $0x140] sm:$0xff]
        %v2654 = vld [vmem:[#allocation6 + $0x148] sm:$0xff]
        %v2655 = vld [vmem:[#allocation6 + $0x150] sm:$0xff]
        %v2656 = vld [vmem:[#allocation6 + $0x158] sm:$0xff]
        %v2657 = vld [vmem:[#allocation6 + $0x160] sm:$0xff]
        %v2658 = vld [vmem:[#allocation6 + $0x168] sm:$0xff]
        %v2659 = vld [vmem:[#allocation6 + $0x170] sm:$0xff]
        %v2660 = vld [vmem:[#allocation6 + $0x178] sm:$0xff]
        %v2661 = vld [vmem:[#allocation6 + $0x180] sm:$0xff]
        %v2662 = vld [vmem:[#allocation6 + $0x188] sm:$0xff]
        %v2663 = vld [vmem:[#allocation6 + $0x190] sm:$0xff]
        %v2664 = vld [vmem:[#allocation6 + $0x198] sm:$0xff]
        %v2665 = vld [vmem:[#allocation6 + $0x1a0] sm:$0xff]
        %v2666 = vld [vmem:[#allocation6 + $0x1a8] sm:$0xff]
        %v2667 = vld [vmem:[#allocation6 + $0x1b0] sm:$0xff]
        %v2668 = vld [vmem:[#allocation6 + $0x1b8] sm:$0xff]
        %v2669 = vld [vmem:[#allocation6 + $0x1c0] sm:$0xff]
        %v2670 = vld [vmem:[#allocation6 + $0x1c8] sm:$0xff]
        %v2671 = vld [vmem:[#allocation6 + $0x1d0] sm:$0xff]
        %v2672 = vld [vmem:[#allocation6 + $0x1d8] sm:$0xff]
        %v2673 = vld [vmem:[#allocation6 + $0x1e0] sm:$0xff]
        %v2674 = vld [vmem:[#allocation6 + $0x1e8] sm:$0xff]
        %v2675 = vld [vmem:[#allocation6 + $0x1f0] sm:$0xff]
        %v2676 = vld [vmem:[#allocation6 + $0x1f8] sm:$0xff]
        %v2677 = vld [vmem:[#allocation6 + $0x200] sm:$0xff]
        %v2678 = vld [vmem:[#allocation6 + $0x208] sm:$0xff]
        %v2679 = vld [vmem:[#allocation6 + $0x210] sm:$0xff]
        %v2680 = vld [vmem:[#allocation6 + $0x218] sm:$0xff]
        %v2681 = vld [vmem:[#allocation6 + $0x220] sm:$0xff]
        %v2682 = vld [vmem:[#allocation6 + $0x228] sm:$0xff]
        %v2683 = vld [vmem:[#allocation6 + $0x230] sm:$0xff]
        %v2684 = vld [vmem:[#allocation6 + $0x238] sm:$0xff]
        %v2685 = vld [vmem:[#allocation6 + $0x240] sm:$0xff]
        %v2686 = vld [vmem:[#allocation6 + $0x248] sm:$0xff]
        %v2687 = vld [vmem:[#allocation6 + $0x250] sm:$0xff]
        %v2688 = vld [vmem:[#allocation6 + $0x258] sm:$0xff]
        %v2689 = vld [vmem:[#allocation6 + $0x260] sm:$0xff]
        %v2690 = vld [vmem:[#allocation6 + $0x268] sm:$0xff]
        %v2691 = vld [vmem:[#allocation6 + $0x270] sm:$0xff]
        %v2692 = vld [vmem:[#allocation6 + $0x278] sm:$0xff]
        %v2693 = vld [vmem:[#allocation6 + $0x280] sm:$0xff]
        %v2694 = vld [vmem:[#allocation6 + $0x288] sm:$0xff]
        %v2695 = vld [vmem:[#allocation6 + $0x290] sm:$0xff]
        %v2696 = vld [vmem:[#allocation6 + $0x298] sm:$0xff]
        %v2697 = vld [vmem:[#allocation6 + $0x2a0] sm:$0xff]
        %v2698 = vld [vmem:[#allocation6 + $0x2a8] sm:$0xff]
        %v2699 = vld [vmem:[#allocation6 + $0x2b0] sm:$0xff]
        %v2700 = vld [vmem:[#allocation6 + $0x2b8] sm:$0xff]
        %v2701 = vld [vmem:[#allocation6 + $0x2c0] sm:$0xff]
        %v2702 = vld [vmem:[#allocation6 + $0x2c8] sm:$0xff]
        %v2703 = vld [vmem:[#allocation6 + $0x2d0] sm:$0xff]
        %v2704 = vld [vmem:[#allocation6 + $0x2d8] sm:$0xff]
        %v2705 = vld [vmem:[#allocation6 + $0x2e0] sm:$0xff]
        %v2706 = vld [vmem:[#allocation6 + $0x2e8] sm:$0xff]
        %v2707 = vld [vmem:[#allocation6 + $0x2f0] sm:$0xff]
        %v2708 = vld [vmem:[#allocation6 + $0x2f8] sm:$0xff]
        %v2709 = vld [vmem:[#allocation6 + $0x300] sm:$0xff]
        %v2710 = vld [vmem:[#allocation6 + $0x308] sm:$0xff]
        %v2711 = vld [vmem:[#allocation6 + $0x310] sm:$0xff]
        %v2712 = vld [vmem:[#allocation6 + $0x318] sm:$0xff]
        %v2713 = vld [vmem:[#allocation6 + $0x320] sm:$0xff]
        %v2714 = vld [vmem:[#allocation6 + $0x328] sm:$0xff]
        %v2715 = vld [vmem:[#allocation6 + $0x330] sm:$0xff]
        %v2716 = vld [vmem:[#allocation6 + $0x338] sm:$0xff]
        %v2717 = vld [vmem:[#allocation6 + $0x340] sm:$0xff]
        %v2718 = vld [vmem:[#allocation6 + $0x348] sm:$0xff]
        %v2719 = vld [vmem:[#allocation6 + $0x350] sm:$0xff]
        %v2720 = vld [vmem:[#allocation6 + $0x358] sm:$0xff]
        %v2721 = vld [vmem:[#allocation6 + $0x360] sm:$0xff]
        %v2722 = vld [vmem:[#allocation6 + $0x368] sm:$0xff]
        %v2723 = vld [vmem:[#allocation6 + $0x370] sm:$0xff]
        %v2724 = vld [vmem:[#allocation6 + $0x378] sm:$0xff]
        %v2725 = vld [vmem:[#allocation6 + $0x380] sm:$0xff]
        %v2726 = vld [vmem:[#allocation6 + $0x388] sm:$0xff]
        %v2727 = vld [vmem:[#allocation6 + $0x390] sm:$0xff]
        %v2728 = vld [vmem:[#allocation6 + $0x398] sm:$0xff]
        %v2729 = vld [vmem:[#allocation6 + $0x3a0] sm:$0xff]
        %v2730 = vld [vmem:[#allocation6 + $0x3a8] sm:$0xff]
        %v2731 = vld [vmem:[#allocation6 + $0x3b0] sm:$0xff]
        %v2732 = vld [vmem:[#allocation6 + $0x3b8] sm:$0xff]
        %v2733 = vld [vmem:[#allocation6 + $0x3c0] sm:$0xff]
        %v2734 = vld [vmem:[#allocation6 + $0x3c8] sm:$0xff]
        %v2735 = vld [vmem:[#allocation6 + $0x3d0] sm:$0xff]
        %v2736 = vld [vmem:[#allocation6 + $0x3d8] sm:$0xff]
        %v2737 = vld [vmem:[#allocation6 + $0x3e0] sm:$0xff]
        %v2738 = vld [vmem:[#allocation6 + $0x3e8] sm:$0xff]
        %v2739 = vld [vmem:[#allocation6 + $0x3f0] sm:$0xff]
        %v2740 = vld [vmem:[#allocation6 + $0x3f8] sm:$0xff]
        %v2741 = vld [vmem:[#allocation6 + $0x400] sm:$0xff]
        %v2742 = vld [vmem:[#allocation6 + $0x408] sm:$0xff]
        %v2743 = vld [vmem:[#allocation6 + $0x410] sm:$0xff]
        %v2744 = vld [vmem:[#allocation6 + $0x418] sm:$0xff]
        %v2745 = vld [vmem:[#allocation6 + $0x420] sm:$0xff]
        %v2746 = vld [vmem:[#allocation6 + $0x428] sm:$0xff]
        %v2747 = vld [vmem:[#allocation6 + $0x430] sm:$0xff]
        %v2748 = vld [vmem:[#allocation6 + $0x438] sm:$0xff]
        %v2749 = vld [vmem:[#allocation6 + $0x440] sm:$0xff]
        %v2750 = vld [vmem:[#allocation6 + $0x448] sm:$0xff]
        %v2751 = vld [vmem:[#allocation6 + $0x450] sm:$0xff]
        %v2752 = vld [vmem:[#allocation6 + $0x458] sm:$0xff]
        %v2753 = vld [vmem:[#allocation6 + $0x460] sm:$0xff]
        %v2754 = vld [vmem:[#allocation6 + $0x468] sm:$0xff]
        %v2755 = vld [vmem:[#allocation6 + $0x470] sm:$0xff]
        %v2756 = vld [vmem:[#allocation6 + $0x478] sm:$0xff]
        %v2757 = vld [vmem:[#allocation6 + $0x480] sm:$0xff]
        %v2758 = vld [vmem:[#allocation6 + $0x488] sm:$0xff]
        %v2759 = vld [vmem:[#allocation6 + $0x490] sm:$0xff]
        %v2760 = vld [vmem:[#allocation6 + $0x498] sm:$0xff]
        %v2761 = vld [vmem:[#allocation6 + $0x4a0] sm:$0xff]
        %v2762 = vld [vmem:[#allocation6 + $0x4a8] sm:$0xff]
        %v2763 = vld [vmem:[#allocation6 + $0x4b0] sm:$0xff]
        %v2764 = vld [vmem:[#allocation6 + $0x4b8] sm:$0xff]
        %v2765 = vld [vmem:[#allocation6 + $0x4c0] sm:$0xff]
        %v2766 = vld [vmem:[#allocation6 + $0x4c8] sm:$0xff]
        %v2767 = vld [vmem:[#allocation6 + $0x4d0] sm:$0xff]
        %v2768 = vld [vmem:[#allocation6 + $0x4d8] sm:$0xff]
        %v2769 = vld [vmem:[#allocation6 + $0x4e0] sm:$0xff]
        %v2770 = vld [vmem:[#allocation6 + $0x4e8] sm:$0xff]
        %v2771 = vld [vmem:[#allocation6 + $0x4f0] sm:$0xff]
        %v2772 = vld [vmem:[#allocation6 + $0x4f8] sm:$0xff]
        %v2773 = vld [vmem:[#allocation6 + $0x500] sm:$0xff]
        %v2774 = vld [vmem:[#allocation6 + $0x508] sm:$0xff]
        %v2775 = vld [vmem:[#allocation6 + $0x510] sm:$0xff]
        %v2776 = vld [vmem:[#allocation6 + $0x518] sm:$0xff]
        %v2777 = vld [vmem:[#allocation6 + $0x520] sm:$0xff]
        %v2778 = vld [vmem:[#allocation6 + $0x528] sm:$0xff]
        %v2779 = vld [vmem:[#allocation6 + $0x530] sm:$0xff]
        %v2780 = vld [vmem:[#allocation6 + $0x538] sm:$0xff]
        %v2781 = vld [vmem:[#allocation6 + $0x540] sm:$0xff]
        %v2782 = vld [vmem:[#allocation6 + $0x548] sm:$0xff]
        %v2783 = vld [vmem:[#allocation6 + $0x550] sm:$0xff]
        %v2784 = vld [vmem:[#allocation6 + $0x558] sm:$0xff]
        %v2785 = vld [vmem:[#allocation6 + $0x560] sm:$0xff]
        %v2786 = vld [vmem:[#allocation6 + $0x568] sm:$0xff]
        %v2787 = vld [vmem:[#allocation6 + $0x570] sm:$0xff]
        %v2788 = vld [vmem:[#allocation6 + $0x578] sm:$0xff]
        %v2789 = vld [vmem:[#allocation6 + $0x580] sm:$0xff]
        %v2790 = vld [vmem:[#allocation6 + $0x588] sm:$0xff]
        %v2791 = vld [vmem:[#allocation6 + $0x590] sm:$0xff]
        %v2792 = vld [vmem:[#allocation6 + $0x598] sm:$0xff]
        %v2793 = vld [vmem:[#allocation6 + $0x5a0] sm:$0xff]
        %v2794 = vld [vmem:[#allocation6 + $0x5a8] sm:$0xff]
        %v2795 = vld [vmem:[#allocation6 + $0x5b0] sm:$0xff]
        %v2796 = vld [vmem:[#allocation6 + $0x5b8] sm:$0xff]
        %v2797 = vld [vmem:[#allocation6 + $0x5c0] sm:$0xff]
        %v2798 = vld [vmem:[#allocation6 + $0x5c8] sm:$0xff]
        %v2799 = vld [vmem:[#allocation6 + $0x5d0] sm:$0xff]
        %v2800 = vld [vmem:[#allocation6 + $0x5d8] sm:$0xff]
        %v2801 = vld [vmem:[#allocation6 + $0x5e0] sm:$0xff]
        %v2802 = vld [vmem:[#allocation6 + $0x5e8] sm:$0xff]
        %v2803 = vld [vmem:[#allocation6 + $0x5f0] sm:$0xff]
        %v2804 = vld [vmem:[#allocation6 + $0x5f8] sm:$0xff]
        %v2805 = vld [vmem:[%s442] sm:$0xff]
        %v2806 = vld [vmem:[%s442 + $0x8] sm:$0xf]
        %v2807 = vld [vmem:[#allocation7] sm:$0xff]
        %v2808 = vld [vmem:[#allocation7 + $0x8] sm:$0xff]
        %v2809 = vld [vmem:[#allocation7 + $0x10] sm:$0xff]
        %v2810 = vld [vmem:[#allocation7 + $0x18] sm:$0xff]
        %v2811 = vld [vmem:[#allocation7 + $0x20] sm:$0xff]
        %v2812 = vld [vmem:[#allocation7 + $0x28] sm:$0xff]
        %v2813 = vld [vmem:[#allocation7 + $0x30] sm:$0xff]
        %v2814 = vld [vmem:[#allocation7 + $0x38] sm:$0xff]
        %v2815 = vld [vmem:[#allocation7 + $0x40] sm:$0xff]
        %v2816 = vld [vmem:[#allocation7 + $0x48] sm:$0xff]
        %v2817 = vld [vmem:[#allocation7 + $0x50] sm:$0xff]
        %v2818 = vld [vmem:[#allocation7 + $0x58] sm:$0xff]
        %v2819 = vld [vmem:[#allocation7 + $0x60] sm:$0xff]
        %v2820 = vld [vmem:[#allocation7 + $0x68] sm:$0xff]
        %v2821 = vld [vmem:[#allocation7 + $0x70] sm:$0xff]
        %v2822 = vld [vmem:[#allocation7 + $0x78] sm:$0xff]
        %v2823 = vld [vmem:[#allocation7 + $0x80] sm:$0xff]
        %v2824 = vld [vmem:[#allocation7 + $0x88] sm:$0xff]
        %v2825 = vld [vmem:[#allocation7 + $0x90] sm:$0xff]
        %v2826 = vld [vmem:[#allocation7 + $0x98] sm:$0xff]
        %v2827 = vld [vmem:[#allocation7 + $0xa0] sm:$0xff]
        %v2828 = vld [vmem:[#allocation7 + $0xa8] sm:$0xff]
        %v2829 = vld [vmem:[#allocation7 + $0xb0] sm:$0xff]
        %v2830 = vld [vmem:[#allocation7 + $0xb8] sm:$0xff]
        %v2831 = vld [vmem:[#allocation7 + $0xc0] sm:$0xff]
        %v2832 = vld [vmem:[#allocation7 + $0xc8] sm:$0xff]
        %v2833 = vld [vmem:[#allocation7 + $0xd0] sm:$0xff]
        %v2834 = vld [vmem:[#allocation7 + $0xd8] sm:$0xff]
        %v2835 = vld [vmem:[#allocation7 + $0xe0] sm:$0xff]
        %v2836 = vld [vmem:[#allocation7 + $0xe8] sm:$0xff]
        %v2837 = vld [vmem:[#allocation7 + $0xf0] sm:$0xff]
        %v2838 = vld [vmem:[#allocation7 + $0xf8] sm:$0xff]
        %v2839 = vld [vmem:[#allocation7 + $0x100] sm:$0xff]
        %v2840 = vld [vmem:[#allocation7 + $0x108] sm:$0xff]
        %v2841 = vld [vmem:[#allocation7 + $0x110] sm:$0xff]
        %v2842 = vld [vmem:[#allocation7 + $0x118] sm:$0xff]
        %v2843 = vld [vmem:[#allocation7 + $0x120] sm:$0xff]
        %v2844 = vld [vmem:[#allocation7 + $0x128] sm:$0xff]
        %v2845 = vld [vmem:[#allocation7 + $0x130] sm:$0xff]
        %v2846 = vld [vmem:[#allocation7 + $0x138] sm:$0xff]
        %v2847 = vld [vmem:[#allocation7 + $0x140] sm:$0xff]
        %v2848 = vld [vmem:[#allocation7 + $0x148] sm:$0xff]
        %v2849 = vld [vmem:[#allocation7 + $0x150] sm:$0xff]
        %v2850 = vld [vmem:[#allocation7 + $0x158] sm:$0xff]
        %v2851 = vld [vmem:[#allocation7 + $0x160] sm:$0xff]
        %v2852 = vld [vmem:[#allocation7 + $0x168] sm:$0xff]
        %v2853 = vld [vmem:[#allocation7 + $0x170] sm:$0xff]
        %v2854 = vld [vmem:[#allocation7 + $0x178] sm:$0xff]
        %v2855 = vld [vmem:[#allocation7 + $0x180] sm:$0xff]
        %v2856 = vld [vmem:[#allocation7 + $0x188] sm:$0xff]
        %v2857 = vld [vmem:[#allocation7 + $0x190] sm:$0xff]
        %v2858 = vld [vmem:[#allocation7 + $0x198] sm:$0xff]
        %v2859 = vld [vmem:[#allocation7 + $0x1a0] sm:$0xff]
        %v2860 = vld [vmem:[#allocation7 + $0x1a8] sm:$0xff]
        %v2861 = vld [vmem:[#allocation7 + $0x1b0] sm:$0xff]
        %v2862 = vld [vmem:[#allocation7 + $0x1b8] sm:$0xff]
        %v2863 = vld [vmem:[#allocation7 + $0x1c0] sm:$0xff]
        %v2864 = vld [vmem:[#allocation7 + $0x1c8] sm:$0xff]
        %v2865 = vld [vmem:[#allocation7 + $0x1d0] sm:$0xff]
        %v2866 = vld [vmem:[#allocation7 + $0x1d8] sm:$0xff]
        %v2867 = vld [vmem:[#allocation7 + $0x1e0] sm:$0xff]
        %v2868 = vld [vmem:[#allocation7 + $0x1e8] sm:$0xff]
        %v2869 = vld [vmem:[#allocation7 + $0x1f0] sm:$0xff]
        %v2870 = vld [vmem:[#allocation7 + $0x1f8] sm:$0xff]
        %v2871 = vld [vmem:[#allocation7 + $0x200] sm:$0xff]
        %v2872 = vld [vmem:[#allocation7 + $0x208] sm:$0xff]
        %v2873 = vld [vmem:[#allocation7 + $0x210] sm:$0xff]
        %v2874 = vld [vmem:[#allocation7 + $0x218] sm:$0xff]
        %v2875 = vld [vmem:[#allocation7 + $0x220] sm:$0xff]
        %v2876 = vld [vmem:[#allocation7 + $0x228] sm:$0xff]
        %v2877 = vld [vmem:[#allocation7 + $0x230] sm:$0xff]
        %v2878 = vld [vmem:[#allocation7 + $0x238] sm:$0xff]
        %v2879 = vld [vmem:[#allocation7 + $0x240] sm:$0xff]
        %v2880 = vld [vmem:[#allocation7 + $0x248] sm:$0xff]
        %v2881 = vld [vmem:[#allocation7 + $0x250] sm:$0xff]
        %v2882 = vld [vmem:[#allocation7 + $0x258] sm:$0xff]
        %v2883 = vld [vmem:[#allocation7 + $0x260] sm:$0xff]
        %v2884 = vld [vmem:[#allocation7 + $0x268] sm:$0xff]
        %v2885 = vld [vmem:[#allocation7 + $0x270] sm:$0xff]
        %v2886 = vld [vmem:[#allocation7 + $0x278] sm:$0xff]
        %v2887 = vld [vmem:[#allocation7 + $0x280] sm:$0xff]
        %v2888 = vld [vmem:[#allocation7 + $0x288] sm:$0xff]
        %v2889 = vld [vmem:[#allocation7 + $0x290] sm:$0xff]
        %v2890 = vld [vmem:[#allocation7 + $0x298] sm:$0xff]
        %v2891 = vld [vmem:[#allocation7 + $0x2a0] sm:$0xff]
        %v2892 = vld [vmem:[#allocation7 + $0x2a8] sm:$0xff]
        %v2893 = vld [vmem:[#allocation7 + $0x2b0] sm:$0xff]
        %v2894 = vld [vmem:[#allocation7 + $0x2b8] sm:$0xff]
        %v2895 = vld [vmem:[#allocation7 + $0x2c0] sm:$0xff]
        %v2896 = vld [vmem:[#allocation7 + $0x2c8] sm:$0xff]
        %v2897 = vld [vmem:[#allocation7 + $0x2d0] sm:$0xff]
        %v2898 = vld [vmem:[#allocation7 + $0x2d8] sm:$0xff]
        %v2899 = vld [vmem:[#allocation7 + $0x2e0] sm:$0xff]
        %v2900 = vld [vmem:[#allocation7 + $0x2e8] sm:$0xff]
        %v2901 = vld [vmem:[#allocation7 + $0x2f0] sm:$0xff]
        %v2902 = vld [vmem:[#allocation7 + $0x2f8] sm:$0xff]
        %v2905 = vunpack.c.l.b16 %v2805
        %v2906 = vunpack.c.h.b16 %v2805
        %v2907 = vunpack.c.l.b16 %v2806
        %v2908 = vpack.c.b16 %v2905, %v2905
        %v2909 = vpack.c.b16 %v2906, %v2906
        %v2910 = vpack.c.b16 %v2907, %v2907
        %v3010 = vunpack.c.l.b16 %v2807
        %v3011 = vunpack.c.h.b16 %v2807
        %v3012 = vunpack.c.l.b16 %v2808
        %v3013 = vunpack.c.h.b16 %v2808
        %v3014 = vunpack.c.l.b16 %v2809
        %v3015 = vunpack.c.h.b16 %v2809
        %v3016 = vunpack.c.l.b16 %v2810
        %v3017 = vunpack.c.h.b16 %v2810
        %v3018 = vunpack.c.l.b16 %v2811
        %v3019 = vunpack.c.h.b16 %v2811
        %v3020 = vunpack.c.l.b16 %v2812
        %v3021 = vunpack.c.h.b16 %v2812
        %v3022 = vunpack.c.l.b16 %v2813
        %v3023 = vunpack.c.h.b16 %v2813
        %v3024 = vunpack.c.l.b16 %v2814
        %v3025 = vunpack.c.h.b16 %v2814
        %v3026 = vunpack.c.l.b16 %v2815
        %v3027 = vunpack.c.h.b16 %v2815
        %v3028 = vunpack.c.l.b16 %v2816
        %v3029 = vunpack.c.h.b16 %v2816
        %v3030 = vunpack.c.l.b16 %v2817
        %v3031 = vunpack.c.h.b16 %v2817
        %v3032 = vunpack.c.l.b16 %v2818
        %v3033 = vunpack.c.h.b16 %v2818
        %v3034 = vunpack.c.l.b16 %v2819
        %v3035 = vunpack.c.h.b16 %v2819
        %v3036 = vunpack.c.l.b16 %v2820
        %v3037 = vunpack.c.h.b16 %v2820
        %v3038 = vunpack.c.l.b16 %v2821
        %v3039 = vunpack.c.h.b16 %v2821
        %v3040 = vunpack.c.l.b16 %v2822
        %v3041 = vunpack.c.h.b16 %v2822
        %v3042 = vunpack.c.l.b16 %v2823
        %v3043 = vunpack.c.h.b16 %v2823
        %v3044 = vunpack.c.l.b16 %v2824
        %v3045 = vunpack.c.h.b16 %v2824
        %v3046 = vunpack.c.l.b16 %v2825
        %v3047 = vunpack.c.h.b16 %v2825
        %v3048 = vunpack.c.l.b16 %v2826
        %v3049 = vunpack.c.h.b16 %v2826
        %v3050 = vunpack.c.l.b16 %v2827
        %v3051 = vunpack.c.h.b16 %v2827
        %v3052 = vunpack.c.l.b16 %v2828
        %v3053 = vunpack.c.h.b16 %v2828
        %v3054 = vunpack.c.l.b16 %v2829
        %v3055 = vunpack.c.h.b16 %v2829
        %v3056 = vunpack.c.l.b16 %v2830
        %v3057 = vunpack.c.h.b16 %v2830
        %v3058 = vunpack.c.l.b16 %v2831
        %v3059 = vunpack.c.h.b16 %v2831
        %v3060 = vunpack.c.l.b16 %v2832
        %v3061 = vunpack.c.h.b16 %v2832
        %v3062 = vunpack.c.l.b16 %v2833
        %v3063 = vunpack.c.h.b16 %v2833
        %v3064 = vunpack.c.l.b16 %v2834
        %v3065 = vunpack.c.h.b16 %v2834
        %v3066 = vunpack.c.l.b16 %v2835
        %v3067 = vunpack.c.h.b16 %v2835
        %v3068 = vunpack.c.l.b16 %v2836
        %v3069 = vunpack.c.h.b16 %v2836
        %v3070 = vunpack.c.l.b16 %v2837
        %v3071 = vunpack.c.h.b16 %v2837
        %v3072 = vunpack.c.l.b16 %v2838
        %v3073 = vunpack.c.h.b16 %v2838
        %v3074 = vunpack.c.l.b16 %v2839
        %v3075 = vunpack.c.h.b16 %v2839
        %v3076 = vunpack.c.l.b16 %v2840
        %v3077 = vunpack.c.h.b16 %v2840
        %v3078 = vunpack.c.l.b16 %v2841
        %v3079 = vunpack.c.h.b16 %v2841
        %v3080 = vunpack.c.l.b16 %v2842
        %v3081 = vunpack.c.h.b16 %v2842
        %v3082 = vunpack.c.l.b16 %v2843
        %v3083 = vunpack.c.h.b16 %v2843
        %v3084 = vunpack.c.l.b16 %v2844
        %v3085 = vunpack.c.h.b16 %v2844
        %v3086 = vunpack.c.l.b16 %v2845
        %v3087 = vunpack.c.h.b16 %v2845
        %v3088 = vunpack.c.l.b16 %v2846
        %v3089 = vunpack.c.h.b16 %v2846
        %v3090 = vunpack.c.l.b16 %v2847
        %v3091 = vunpack.c.h.b16 %v2847
        %v3092 = vunpack.c.l.b16 %v2848
        %v3093 = vunpack.c.h.b16 %v2848
        %v3094 = vunpack.c.l.b16 %v2849
        %v3095 = vunpack.c.h.b16 %v2849
        %v3096 = vunpack.c.l.b16 %v2850
        %v3097 = vunpack.c.h.b16 %v2850
        %v3098 = vunpack.c.l.b16 %v2851
        %v3099 = vunpack.c.h.b16 %v2851
        %v3100 = vunpack.c.l.b16 %v2852
        %v3101 = vunpack.c.h.b16 %v2852
        %v3102 = vunpack.c.l.b16 %v2853
        %v3103 = vunpack.c.h.b16 %v2853
        %v3104 = vunpack.c.l.b16 %v2854
        %v3105 = vunpack.c.h.b16 %v2854
        %v3106 = vunpack.c.l.b16 %v2855
        %v3107 = vunpack.c.h.b16 %v2855
        %v3108 = vunpack.c.l.b16 %v2856
        %v3109 = vunpack.c.h.b16 %v2856
        %v3110 = vunpack.c.l.b16 %v2857
        %v3111 = vunpack.c.h.b16 %v2857
        %v3112 = vunpack.c.l.b16 %v2858
        %v3113 = vunpack.c.h.b16 %v2858
        %v3114 = vunpack.c.l.b16 %v2859
        %v3115 = vunpack.c.h.b16 %v2859
        %v3116 = vunpack.c.l.b16 %v2860
        %v3117 = vunpack.c.h.b16 %v2860
        %v3118 = vunpack.c.l.b16 %v2861
        %v3119 = vunpack.c.h.b16 %v2861
        %v3120 = vunpack.c.l.b16 %v2862
        %v3121 = vunpack.c.h.b16 %v2862
        %v3122 = vunpack.c.l.b16 %v2863
        %v3123 = vunpack.c.h.b16 %v2863
        %v3124 = vunpack.c.l.b16 %v2864
        %v3125 = vunpack.c.h.b16 %v2864
        %v3126 = vunpack.c.l.b16 %v2865
        %v3127 = vunpack.c.h.b16 %v2865
        %v3128 = vunpack.c.l.b16 %v2866
        %v3129 = vunpack.c.h.b16 %v2866
        %v3130 = vunpack.c.l.b16 %v2867
        %v3131 = vunpack.c.h.b16 %v2867
        %v3132 = vunpack.c.l.b16 %v2868
        %v3133 = vunpack.c.h.b16 %v2868
        %v3134 = vunpack.c.l.b16 %v2869
        %v3135 = vunpack.c.h.b16 %v2869
        %v3136 = vunpack.c.l.b16 %v2870
        %v3137 = vunpack.c.h.b16 %v2870
        %v3138 = vunpack.c.l.b16 %v2871
        %v3139 = vunpack.c.h.b16 %v2871
        %v3140 = vunpack.c.l.b16 %v2872
        %v3141 = vunpack.c.h.b16 %v2872
        %v3142 = vunpack.c.l.b16 %v2873
        %v3143 = vunpack.c.h.b16 %v2873
        %v3144 = vunpack.c.l.b16 %v2874
        %v3145 = vunpack.c.h.b16 %v2874
        %v3146 = vunpack.c.l.b16 %v2875
        %v3147 = vunpack.c.h.b16 %v2875
        %v3148 = vunpack.c.l.b16 %v2876
        %v3149 = vunpack.c.h.b16 %v2876
        %v3150 = vunpack.c.l.b16 %v2877
        %v3151 = vunpack.c.h.b16 %v2877
        %v3152 = vunpack.c.l.b16 %v2878
        %v3153 = vunpack.c.h.b16 %v2878
        %v3154 = vunpack.c.l.b16 %v2879
        %v3155 = vunpack.c.h.b16 %v2879
        %v3156 = vunpack.c.l.b16 %v2880
        %v3157 = vunpack.c.h.b16 %v2880
        %v3158 = vunpack.c.l.b16 %v2881
        %v3159 = vunpack.c.h.b16 %v2881
        %v3160 = vunpack.c.l.b16 %v2882
        %v3161 = vunpack.c.h.b16 %v2882
        %v3162 = vunpack.c.l.b16 %v2883
        %v3163 = vunpack.c.h.b16 %v2883
        %v3164 = vunpack.c.l.b16 %v2884
        %v3165 = vunpack.c.h.b16 %v2884
        %v3166 = vunpack.c.l.b16 %v2885
        %v3167 = vunpack.c.h.b16 %v2885
        %v3168 = vunpack.c.l.b16 %v2886
        %v3169 = vunpack.c.h.b16 %v2886
        %v3170 = vunpack.c.l.b16 %v2887
        %v3171 = vunpack.c.h.b16 %v2887
        %v3172 = vunpack.c.l.b16 %v2888
        %v3173 = vunpack.c.h.b16 %v2888
        %v3174 = vunpack.c.l.b16 %v2889
        %v3175 = vunpack.c.h.b16 %v2889
        %v3176 = vunpack.c.l.b16 %v2890
        %v3177 = vunpack.c.h.b16 %v2890
        %v3178 = vunpack.c.l.b16 %v2891
        %v3179 = vunpack.c.h.b16 %v2891
        %v3180 = vunpack.c.l.b16 %v2892
        %v3181 = vunpack.c.h.b16 %v2892
        %v3182 = vunpack.c.l.b16 %v2893
        %v3183 = vunpack.c.h.b16 %v2893
        %v3184 = vunpack.c.l.b16 %v2894
        %v3185 = vunpack.c.h.b16 %v2894
        %v3186 = vunpack.c.l.b16 %v2895
        %v3187 = vunpack.c.h.b16 %v2895
        %v3188 = vunpack.c.l.b16 %v2896
        %v3189 = vunpack.c.h.b16 %v2896
        %v3190 = vunpack.c.l.b16 %v2897
        %v3191 = vunpack.c.h.b16 %v2897
        %v3192 = vunpack.c.l.b16 %v2898
        %v3193 = vunpack.c.h.b16 %v2898
        %v3194 = vunpack.c.l.b16 %v2899
        %v3195 = vunpack.c.h.b16 %v2899
        %v3196 = vunpack.c.l.b16 %v2900
        %v3197 = vunpack.c.h.b16 %v2900
        %v3198 = vunpack.c.l.b16 %v2901
        %v3199 = vunpack.c.h.b16 %v2901
        %v3200 = vunpack.c.l.b16 %v2902
        %v3201 = vunpack.c.h.b16 %v2902
        %v3202 = vpack.c.b16 %v3014, %v3010
        %v3203 = vpack.c.b16 %v3015, %v3011
        %v3204 = vpack.c.b16 %v3016, %v3012
        %v3205 = vpack.c.b16 %v3017, %v3013
        %v3206 = vpack.c.b16 %v3022, %v3018
        %v3207 = vpack.c.b16 %v3023, %v3019
        %v3208 = vpack.c.b16 %v3024, %v3020
        %v3209 = vpack.c.b16 %v3025, %v3021
        %v3210 = vpack.c.b16 %v3030, %v3026
        %v3211 = vpack.c.b16 %v3031, %v3027
        %v3212 = vpack.c.b16 %v3032, %v3028
        %v3213 = vpack.c.b16 %v3033, %v3029
        %v3214 = vpack.c.b16 %v3038, %v3034
        %v3215 = vpack.c.b16 %v3039, %v3035
        %v3216 = vpack.c.b16 %v3040, %v3036
        %v3217 = vpack.c.b16 %v3041, %v3037
        %v3218 = vpack.c.b16 %v3046, %v3042
        %v3219 = vpack.c.b16 %v3047, %v3043
        %v3220 = vpack.c.b16 %v3048, %v3044
        %v3221 = vpack.c.b16 %v3049, %v3045
        %v3222 = vpack.c.b16 %v3054, %v3050
        %v3223 = vpack.c.b16 %v3055, %v3051
        %v3224 = vpack.c.b16 %v3056, %v3052
        %v3225 = vpack.c.b16 %v3057, %v3053
        %v3226 = vpack.c.b16 %v3062, %v3058
        %v3227 = vpack.c.b16 %v3063, %v3059
        %v3228 = vpack.c.b16 %v3064, %v3060
        %v3229 = vpack.c.b16 %v3065, %v3061
        %v3230 = vpack.c.b16 %v3070, %v3066
        %v3231 = vpack.c.b16 %v3071, %v3067
        %v3232 = vpack.c.b16 %v3072, %v3068
        %v3233 = vpack.c.b16 %v3073, %v3069
        %v3234 = vpack.c.b16 %v3078, %v3074
        %v3235 = vpack.c.b16 %v3079, %v3075
        %v3236 = vpack.c.b16 %v3080, %v3076
        %v3237 = vpack.c.b16 %v3081, %v3077
        %v3238 = vpack.c.b16 %v3086, %v3082
        %v3239 = vpack.c.b16 %v3087, %v3083
        %v3240 = vpack.c.b16 %v3088, %v3084
        %v3241 = vpack.c.b16 %v3089, %v3085
        %v3242 = vpack.c.b16 %v3094, %v3090
        %v3243 = vpack.c.b16 %v3095, %v3091
        %v3244 = vpack.c.b16 %v3096, %v3092
        %v3245 = vpack.c.b16 %v3097, %v3093
        %v3246 = vpack.c.b16 %v3102, %v3098
        %v3247 = vpack.c.b16 %v3103, %v3099
        %v3248 = vpack.c.b16 %v3104, %v3100
        %v3249 = vpack.c.b16 %v3105, %v3101
        %v3250 = vpack.c.b16 %v3110, %v3106
        %v3251 = vpack.c.b16 %v3111, %v3107
        %v3252 = vpack.c.b16 %v3112, %v3108
        %v3253 = vpack.c.b16 %v3113, %v3109
        %v3254 = vpack.c.b16 %v3118, %v3114
        %v3255 = vpack.c.b16 %v3119, %v3115
        %v3256 = vpack.c.b16 %v3120, %v3116
        %v3257 = vpack.c.b16 %v3121, %v3117
        %v3258 = vpack.c.b16 %v3126, %v3122
        %v3259 = vpack.c.b16 %v3127, %v3123
        %v3260 = vpack.c.b16 %v3128, %v3124
        %v3261 = vpack.c.b16 %v3129, %v3125
        %v3262 = vpack.c.b16 %v3134, %v3130
        %v3263 = vpack.c.b16 %v3135, %v3131
        %v3264 = vpack.c.b16 %v3136, %v3132
        %v3265 = vpack.c.b16 %v3137, %v3133
        %v3266 = vpack.c.b16 %v3142, %v3138
        %v3267 = vpack.c.b16 %v3143, %v3139
        %v3268 = vpack.c.b16 %v3144, %v3140
        %v3269 = vpack.c.b16 %v3145, %v3141
        %v3270 = vpack.c.b16 %v3150, %v3146
        %v3271 = vpack.c.b16 %v3151, %v3147
        %v3272 = vpack.c.b16 %v3152, %v3148
        %v3273 = vpack.c.b16 %v3153, %v3149
        %v3274 = vpack.c.b16 %v3158, %v3154
        %v3275 = vpack.c.b16 %v3159, %v3155
        %v3276 = vpack.c.b16 %v3160, %v3156
        %v3277 = vpack.c.b16 %v3161, %v3157
        %v3278 = vpack.c.b16 %v3166, %v3162
        %v3279 = vpack.c.b16 %v3167, %v3163
        %v3280 = vpack.c.b16 %v3168, %v3164
        %v3281 = vpack.c.b16 %v3169, %v3165
        %v3282 = vpack.c.b16 %v3174, %v3170
        %v3283 = vpack.c.b16 %v3175, %v3171
        %v3284 = vpack.c.b16 %v3176, %v3172
        %v3285 = vpack.c.b16 %v3177, %v3173
        %v3286 = vpack.c.b16 %v3182, %v3178
        %v3287 = vpack.c.b16 %v3183, %v3179
        %v3288 = vpack.c.b16 %v3184, %v3180
        %v3289 = vpack.c.b16 %v3185, %v3181
        %v3290 = vpack.c.b16 %v3190, %v3186
        %v3291 = vpack.c.b16 %v3191, %v3187
        %v3292 = vpack.c.b16 %v3192, %v3188
        %v3293 = vpack.c.b16 %v3193, %v3189
        %v3294 = vpack.c.b16 %v3198, %v3194
        %v3295 = vpack.c.b16 %v3199, %v3195
        %v3296 = vpack.c.b16 %v3200, %v3196
        %v3297 = vpack.c.b16 %v3201, %v3197
        %3394 = vmatprep.subr.bf16.mxu0 %v3203
        %3395 = vmatpush1.bf16.msra.mxu0 %v3202
        %3396 = vmatprep.subr.bf16.mxu0 %v3207
        %3397 = vmatpush1.bf16.msra.mxu0 %v3206
        %3398 = vmatprep.subr.bf16.mxu0 %v3211
        %3399 = vmatpush1.bf16.msra.mxu0 %v3210
        %3400 = vmatprep.subr.bf16.mxu0 %v3215
        %3401 = vmatpush1.bf16.msra.mxu0 %v3214
        %3402 = vmatprep.subr.bf16.mxu0 %v3219
        %3403 = vmatpush1.bf16.msra.mxu0 %v3218
        %3404 = vmatprep.subr.bf16.mxu0 %v3223
        %3405 = vmatpush1.bf16.msra.mxu0 %v3222
        %3406 = vmatprep.subr.bf16.mxu0 %v3227
        %3407 = vmatpush1.bf16.msra.mxu0 %v3226
        %3408 = vmatprep.subr.bf16.mxu0 %v3231
        %3409 = vmatpush1.bf16.msra.mxu0 %v3230
        %3410 = vmatprep.subr.bf16.mxu0 %v3235
        %3411 = vmatpush1.bf16.msra.mxu0 %v3234
        %3412 = vmatprep.subr.bf16.mxu0 %v3239
        %3413 = vmatpush1.bf16.msra.mxu0 %v3238
        %3414 = vmatprep.subr.bf16.mxu0 %v3243
        %3415 = vmatpush1.bf16.msra.mxu0 %v3242
        %3416 = vmatprep.subr.bf16.mxu0 %v3247
        %3417 = vmatpush1.bf16.msra.mxu0 %v3246
        %3418 = vmatprep.subr.bf16.mxu0 %v3251
        %3419 = vmatpush1.bf16.msra.mxu0 %v3250
        %3420 = vmatprep.subr.bf16.mxu0 %v3255
        %3421 = vmatpush1.bf16.msra.mxu0 %v3254
        %3422 = vmatprep.subr.bf16.mxu0 %v3259
        %3423 = vmatpush1.bf16.msra.mxu0 %v3258
        %3424 = vmatprep.subr.bf16.mxu0 %v3263
        %3425 = vmatpush1.bf16.msra.mxu0 %v3262
        %3426 = vmatprep.mubr.bf16.mxu0 %v2909
        %3427 = vmatmul.mubr.bf16.gmra.mrb[0].mxu0 %v2908
        %v3428 = vpop.f32.mrb[0].mxu0
        %v3429 = vadd.f32 0.0, %v3428
        %v3430 = vpop.f32.mrb[0].mxu0
        %v3431 = vadd.f32 0.0, %v3430
        %v3432 = vpop.f32.mrb[0].mxu0
        %v3433 = vpop.f32.mrb[0].mxu0
        %3434 = vdwg.mxu0
        %3435 = vmatprep.subr.bf16.mxu0 %v3267
        %3436 = vmatpush1.bf16.msra.mxu0 %v3266
        %3437 = vmatprep.subr.bf16.mxu0 %v3271
        %3438 = vmatpush1.bf16.msra.mxu0 %v3270
        %3439 = vmatprep.subr.bf16.mxu0 %v3275
        %3440 = vmatpush1.bf16.msra.mxu0 %v3274
        %3441 = vmatprep.subr.bf16.mxu0 %v3279
        %3442 = vmatpush1.bf16.msra.mxu0 %v3278
        %3443 = vmatprep.subr.bf16.mxu0 %v3283
        %3444 = vmatpush1.bf16.msra.mxu0 %v3282
        %3445 = vmatprep.subr.bf16.mxu0 %v3287
        %3446 = vmatpush1.bf16.msra.mxu0 %v3286
        %3447 = vmatprep.subr.bf16.mxu0 %v3291
        %3448 = vmatpush1.bf16.msra.mxu0 %v3290
        %3449 = vmatprep.subr.bf16.mxu0 %v3295
        %3450 = vmatpush1.bf16.msra.mxu0 %v3294
        %3451 = vmatprep.subr.bf16.mxu0 0
        %3452 = vmatpush1.bf16.msra.mxu0 0
        %3453 = vmatprep.subr.bf16.mxu0 0
        %3454 = vmatpush1.bf16.msra.mxu0 0
        %3455 = vmatprep.subr.bf16.mxu0 0
        %3456 = vmatpush1.bf16.msra.mxu0 0
        %3457 = vmatprep.subr.bf16.mxu0 0
        %3458 = vmatpush1.bf16.msra.mxu0 0
        %3459 = vmatprep.subr.bf16.mxu0 0
        %3460 = vmatpush1.bf16.msra.mxu0 0
        %3461 = vmatprep.subr.bf16.mxu0 0
        %3462 = vmatpush1.bf16.msra.mxu0 0
        %3463 = vmatprep.subr.bf16.mxu0 0
        %3464 = vmatpush1.bf16.msra.mxu0 0
        %3465 = vmatprep.subr.bf16.mxu0 0
        %3466 = vmatpush1.bf16.msra.mxu0 0
        %3467 = vmatprep.mubr.bf16.mxu0 0
        %3468 = vmatmul.mubr.bf16.gmra.mrb[0].mxu0 %v2910
        %v3469 = vpop.f32.mrb[0].mxu0
        %v3470 = vadd.f32 %v3429, %v3469
        %v3471 = vpop.f32.mrb[0].mxu0
        %v3472 = vadd.f32 %v3431, %v3471
        %v3473 = vpop.f32.mrb[0].mxu0
        %v3474 = vpop.f32.mrb[0].mxu0
        %3475 = vdwg.mxu0
        %3476 = vmatprep.subr.bf16.mxu0 %v3205
        %3477 = vmatpush1.bf16.msra.mxu0 %v3204
        %3478 = vmatprep.subr.bf16.mxu0 %v3209
        %3479 = vmatpush1.bf16.msra.mxu0 %v3208
        %3480 = vmatprep.subr.bf16.mxu0 %v3213
        %3481 = vmatpush1.bf16.msra.mxu0 %v3212
        %3482 = vmatprep.subr.bf16.mxu0 %v3217
        %3483 = vmatpush1.bf16.msra.mxu0 %v3216
        %3484 = vmatprep.subr.bf16.mxu0 %v3221
        %3485 = vmatpush1.bf16.msra.mxu0 %v3220
        %3486 = vmatprep.subr.bf16.mxu0 %v3225
        %3487 = vmatpush1.bf16.msra.mxu0 %v3224
        %3488 = vmatprep.subr.bf16.mxu0 %v3229
        %3489 = vmatpush1.bf16.msra.mxu0 %v3228
        %3490 = vmatprep.subr.bf16.mxu0 %v3233
        %3491 = vmatpush1.bf16.msra.mxu0 %v3232
        %3492 = vmatprep.subr.bf16.mxu0 %v3237
        %3493 = vmatpush1.bf16.msra.mxu0 %v3236
        %3494 = vmatprep.subr.bf16.mxu0 %v3241
        %3495 = vmatpush1.bf16.msra.mxu0 %v3240
        %3496 = vmatprep.subr.bf16.mxu0 %v3245
        %3497 = vmatpush1.bf16.msra.mxu0 %v3244
        %3498 = vmatprep.subr.bf16.mxu0 %v3249
        %3499 = vmatpush1.bf16.msra.mxu0 %v3248
        %3500 = vmatprep.subr.bf16.mxu0 %v3253
        %3501 = vmatpush1.bf16.msra.mxu0 %v3252
        %3502 = vmatprep.subr.bf16.mxu0 %v3257
        %3503 = vmatpush1.bf16.msra.mxu0 %v3256
        %3504 = vmatprep.subr.bf16.mxu0 %v3261
        %3505 = vmatpush1.bf16.msra.mxu0 %v3260
        %3506 = vmatprep.subr.bf16.mxu0 %v3265
        %3507 = vmatpush1.bf16.msra.mxu0 %v3264
        %3508 = vmatprep.mubr.bf16.mxu0 %v2909
        %3509 = vmatmul.mubr.bf16.gmra.mrb[0].mxu0 %v2908
        %v3510 = vpop.f32.mrb[0].mxu0
        %v3511 = vadd.f32 0.0, %v3510
        %v3512 = vpop.f32.mrb[0].mxu0
        %v3513 = vadd.f32 0.0, %v3512
        %v3514 = vpop.f32.mrb[0].mxu0
        %v3515 = vpop.f32.mrb[0].mxu0
        %3516 = vdwg.mxu0
        %3517 = vmatprep.subr.bf16.mxu0 %v3269
        %3518 = vmatpush1.bf16.msra.mxu0 %v3268
        %3519 = vmatprep.subr.bf16.mxu0 %v3273
        %3520 = vmatpush1.bf16.msra.mxu0 %v3272
        %3521 = vmatprep.subr.bf16.mxu0 %v3277
        %3522 = vmatpush1.bf16.msra.mxu0 %v3276
        %3523 = vmatprep.subr.bf16.mxu0 %v3281
        %3524 = vmatpush1.bf16.msra.mxu0 %v3280
        %3525 = vmatprep.subr.bf16.mxu0 %v3285
        %3526 = vmatpush1.bf16.msra.mxu0 %v3284
        %3527 = vmatprep.subr.bf16.mxu0 %v3289
        %3528 = vmatpush1.bf16.msra.mxu0 %v3288
        %3529 = vmatprep.subr.bf16.mxu0 %v3293
        %3530 = vmatpush1.bf16.msra.mxu0 %v3292
        %3531 = vmatprep.subr.bf16.mxu0 %v3297
        %3532 = vmatpush1.bf16.msra.mxu0 %v3296
        %3533 = vmatprep.subr.bf16.mxu0 0
        %3534 = vmatpush1.bf16.msra.mxu0 0
        %3535 = vmatprep.subr.bf16.mxu0 0
        %3536 = vmatpush1.bf16.msra.mxu0 0
        %3537 = vmatprep.subr.bf16.mxu0 0
        %3538 = vmatpush1.bf16.msra.mxu0 0
        %3539 = vmatprep.subr.bf16.mxu0 0
        %3540 = vmatpush1.bf16.msra.mxu0 0
        %3541 = vmatprep.subr.bf16.mxu0 0
        %3542 = vmatpush1.bf16.msra.mxu0 0
        %3543 = vmatprep.subr.bf16.mxu0 0
        %3544 = vmatpush1.bf16.msra.mxu0 0
        %3545 = vmatprep.subr.bf16.mxu0 0
        %3546 = vmatpush1.bf16.msra.mxu0 0
        %3547 = vmatprep.subr.bf16.mxu0 0
        %3548 = vmatpush1.bf16.msra.mxu0 0
        %3549 = vmatprep.mubr.bf16.mxu0 0
        %3550 = vmatmul.mubr.bf16.gmra.mrb[0].mxu0 %v2910
        %v3551 = vpop.f32.mrb[0].mxu0
        %v3552 = vadd.f32 %v3511, %v3551
        %v3553 = vpop.f32.mrb[0].mxu0
        %v3554 = vadd.f32 %v3513, %v3553
        %v3555 = vpop.f32.mrb[0].mxu0
        %v3556 = vpop.f32.mrb[0].mxu0
        %3557 = vdwg.mxu0
        %v3750 = vunpack.c.l.b16 %v2613
        %v3751 = vunpack.c.h.b16 %v2613
        %v3752 = vunpack.c.l.b16 %v2614
        %v3753 = vunpack.c.h.b16 %v2614
        %v3754 = vunpack.c.l.b16 %v2615
        %v3755 = vunpack.c.h.b16 %v2615
        %v3756 = vunpack.c.l.b16 %v2616
        %v3757 = vunpack.c.h.b16 %v2616
        %v3758 = vunpack.c.l.b16 %v2617
        %v3759 = vunpack.c.h.b16 %v2617
        %v3760 = vunpack.c.l.b16 %v2618
        %v3761 = vunpack.c.h.b16 %v2618
        %v3762 = vunpack.c.l.b16 %v2619
        %v3763 = vunpack.c.h.b16 %v2619
        %v3764 = vunpack.c.l.b16 %v2620
        %v3765 = vunpack.c.h.b16 %v2620
        %v3766 = vunpack.c.l.b16 %v2621
        %v3767 = vunpack.c.h.b16 %v2621
        %v3768 = vunpack.c.l.b16 %v2622
        %v3769 = vunpack.c.h.b16 %v2622
        %v3770 = vunpack.c.l.b16 %v2623
        %v3771 = vunpack.c.h.b16 %v2623
        %v3772 = vunpack.c.l.b16 %v2624
        %v3773 = vunpack.c.h.b16 %v2624
        %v3774 = vunpack.c.l.b16 %v2625
        %v3775 = vunpack.c.h.b16 %v2625
        %v3776 = vunpack.c.l.b16 %v2626
        %v3777 = vunpack.c.h.b16 %v2626
        %v3778 = vunpack.c.l.b16 %v2627
        %v3779 = vunpack.c.h.b16 %v2627
        %v3780 = vunpack.c.l.b16 %v2628
        %v3781 = vunpack.c.h.b16 %v2628
        %v3782 = vunpack.c.l.b16 %v2629
        %v3783 = vunpack.c.h.b16 %v2629
        %v3784 = vunpack.c.l.b16 %v2630
        %v3785 = vunpack.c.h.b16 %v2630
        %v3786 = vunpack.c.l.b16 %v2631
        %v3787 = vunpack.c.h.b16 %v2631
        %v3788 = vunpack.c.l.b16 %v2632
        %v3789 = vunpack.c.h.b16 %v2632
        %v3790 = vunpack.c.l.b16 %v2633
        %v3791 = vunpack.c.h.b16 %v2633
        %v3792 = vunpack.c.l.b16 %v2634
        %v3793 = vunpack.c.h.b16 %v2634
        %v3794 = vunpack.c.l.b16 %v2635
        %v3795 = vunpack.c.h.b16 %v2635
        %v3796 = vunpack.c.l.b16 %v2636
        %v3797 = vunpack.c.h.b16 %v2636
        %v3798 = vunpack.c.l.b16 %v2637
        %v3799 = vunpack.c.h.b16 %v2637
        %v3800 = vunpack.c.l.b16 %v2638
        %v3801 = vunpack.c.h.b16 %v2638
        %v3802 = vunpack.c.l.b16 %v2639
        %v3803 = vunpack.c.h.b16 %v2639
        %v3804 = vunpack.c.l.b16 %v2640
        %v3805 = vunpack.c.h.b16 %v2640
        %v3806 = vunpack.c.l.b16 %v2641
        %v3807 = vunpack.c.h.b16 %v2641
        %v3808 = vunpack.c.l.b16 %v2642
        %v3809 = vunpack.c.h.b16 %v2642
        %v3810 = vunpack.c.l.b16 %v2643
        %v3811 = vunpack.c.h.b16 %v2643
        %v3812 = vunpack.c.l.b16 %v2644
        %v3813 = vunpack.c.h.b16 %v2644
        %v3814 = vunpack.c.l.b16 %v2645
        %v3815 = vunpack.c.h.b16 %v2645
        %v3816 = vunpack.c.l.b16 %v2646
        %v3817 = vunpack.c.h.b16 %v2646
        %v3818 = vunpack.c.l.b16 %v2647
        %v3819 = vunpack.c.h.b16 %v2647
        %v3820 = vunpack.c.l.b16 %v2648
        %v3821 = vunpack.c.h.b16 %v2648
        %v3822 = vunpack.c.l.b16 %v2649
        %v3823 = vunpack.c.h.b16 %v2649
        %v3824 = vunpack.c.l.b16 %v2650
        %v3825 = vunpack.c.h.b16 %v2650
        %v3826 = vunpack.c.l.b16 %v2651
        %v3827 = vunpack.c.h.b16 %v2651
        %v3828 = vunpack.c.l.b16 %v2652
        %v3829 = vunpack.c.h.b16 %v2652
        %v3830 = vunpack.c.l.b16 %v2653
        %v3831 = vunpack.c.h.b16 %v2653
        %v3832 = vunpack.c.l.b16 %v2654
        %v3833 = vunpack.c.h.b16 %v2654
        %v3834 = vunpack.c.l.b16 %v2655
        %v3835 = vunpack.c.h.b16 %v2655
        %v3836 = vunpack.c.l.b16 %v2656
        %v3837 = vunpack.c.h.b16 %v2656
        %v3838 = vunpack.c.l.b16 %v2657
        %v3839 = vunpack.c.h.b16 %v2657
        %v3840 = vunpack.c.l.b16 %v2658
        %v3841 = vunpack.c.h.b16 %v2658
        %v3842 = vunpack.c.l.b16 %v2659
        %v3843 = vunpack.c.h.b16 %v2659
        %v3844 = vunpack.c.l.b16 %v2660
        %v3845 = vunpack.c.h.b16 %v2660
        %v3846 = vunpack.c.l.b16 %v2661
        %v3847 = vunpack.c.h.b16 %v2661
        %v3848 = vunpack.c.l.b16 %v2662
        %v3849 = vunpack.c.h.b16 %v2662
        %v3850 = vunpack.c.l.b16 %v2663
        %v3851 = vunpack.c.h.b16 %v2663
        %v3852 = vunpack.c.l.b16 %v2664
        %v3853 = vunpack.c.h.b16 %v2664
        %v3854 = vunpack.c.l.b16 %v2665
        %v3855 = vunpack.c.h.b16 %v2665
        %v3856 = vunpack.c.l.b16 %v2666
        %v3857 = vunpack.c.h.b16 %v2666
        %v3858 = vunpack.c.l.b16 %v2667
        %v3859 = vunpack.c.h.b16 %v2667
        %v3860 = vunpack.c.l.b16 %v2668
        %v3861 = vunpack.c.h.b16 %v2668
        %v3862 = vunpack.c.l.b16 %v2669
        %v3863 = vunpack.c.h.b16 %v2669
        %v3864 = vunpack.c.l.b16 %v2670
        %v3865 = vunpack.c.h.b16 %v2670
        %v3866 = vunpack.c.l.b16 %v2671
        %v3867 = vunpack.c.h.b16 %v2671
        %v3868 = vunpack.c.l.b16 %v2672
        %v3869 = vunpack.c.h.b16 %v2672
        %v3870 = vunpack.c.l.b16 %v2673
        %v3871 = vunpack.c.h.b16 %v2673
        %v3872 = vunpack.c.l.b16 %v2674
        %v3873 = vunpack.c.h.b16 %v2674
        %v3874 = vunpack.c.l.b16 %v2675
        %v3875 = vunpack.c.h.b16 %v2675
        %v3876 = vunpack.c.l.b16 %v2676
        %v3877 = vunpack.c.h.b16 %v2676
        %v3878 = vunpack.c.l.b16 %v2677
        %v3879 = vunpack.c.h.b16 %v2677
        %v3880 = vunpack.c.l.b16 %v2678
        %v3881 = vunpack.c.h.b16 %v2678
        %v3882 = vunpack.c.l.b16 %v2679
        %v3883 = vunpack.c.h.b16 %v2679
        %v3884 = vunpack.c.l.b16 %v2680
        %v3885 = vunpack.c.h.b16 %v2680
        %v3886 = vunpack.c.l.b16 %v2681
        %v3887 = vunpack.c.h.b16 %v2681
        %v3888 = vunpack.c.l.b16 %v2682
        %v3889 = vunpack.c.h.b16 %v2682
        %v3890 = vunpack.c.l.b16 %v2683
        %v3891 = vunpack.c.h.b16 %v2683
        %v3892 = vunpack.c.l.b16 %v2684
        %v3893 = vunpack.c.h.b16 %v2684
        %v3894 = vunpack.c.l.b16 %v2685
        %v3895 = vunpack.c.h.b16 %v2685
        %v3896 = vunpack.c.l.b16 %v2686
        %v3897 = vunpack.c.h.b16 %v2686
        %v3898 = vunpack.c.l.b16 %v2687
        %v3899 = vunpack.c.h.b16 %v2687
        %v3900 = vunpack.c.l.b16 %v2688
        %v3901 = vunpack.c.h.b16 %v2688
        %v3902 = vunpack.c.l.b16 %v2689
        %v3903 = vunpack.c.h.b16 %v2689
        %v3904 = vunpack.c.l.b16 %v2690
        %v3905 = vunpack.c.h.b16 %v2690
        %v3906 = vunpack.c.l.b16 %v2691
        %v3907 = vunpack.c.h.b16 %v2691
        %v3908 = vunpack.c.l.b16 %v2692
        %v3909 = vunpack.c.h.b16 %v2692
        %v3910 = vunpack.c.l.b16 %v2693
        %v3911 = vunpack.c.h.b16 %v2693
        %v3912 = vunpack.c.l.b16 %v2694
        %v3913 = vunpack.c.h.b16 %v2694
        %v3914 = vunpack.c.l.b16 %v2695
        %v3915 = vunpack.c.h.b16 %v2695
        %v3916 = vunpack.c.l.b16 %v2696
        %v3917 = vunpack.c.h.b16 %v2696
        %v3918 = vunpack.c.l.b16 %v2697
        %v3919 = vunpack.c.h.b16 %v2697
        %v3920 = vunpack.c.l.b16 %v2698
        %v3921 = vunpack.c.h.b16 %v2698
        %v3922 = vunpack.c.l.b16 %v2699
        %v3923 = vunpack.c.h.b16 %v2699
        %v3924 = vunpack.c.l.b16 %v2700
        %v3925 = vunpack.c.h.b16 %v2700
        %v3926 = vunpack.c.l.b16 %v2701
        %v3927 = vunpack.c.h.b16 %v2701
        %v3928 = vunpack.c.l.b16 %v2702
        %v3929 = vunpack.c.h.b16 %v2702
        %v3930 = vunpack.c.l.b16 %v2703
        %v3931 = vunpack.c.h.b16 %v2703
        %v3932 = vunpack.c.l.b16 %v2704
        %v3933 = vunpack.c.h.b16 %v2704
        %v3934 = vunpack.c.l.b16 %v2705
        %v3935 = vunpack.c.h.b16 %v2705
        %v3936 = vunpack.c.l.b16 %v2706
        %v3937 = vunpack.c.h.b16 %v2706
        %v3938 = vunpack.c.l.b16 %v2707
        %v3939 = vunpack.c.h.b16 %v2707
        %v3940 = vunpack.c.l.b16 %v2708
        %v3941 = vunpack.c.h.b16 %v2708
        %v3942 = vunpack.c.l.b16 %v2709
        %v3943 = vunpack.c.h.b16 %v2709
        %v3944 = vunpack.c.l.b16 %v2710
        %v3945 = vunpack.c.h.b16 %v2710
        %v3946 = vunpack.c.l.b16 %v2711
        %v3947 = vunpack.c.h.b16 %v2711
        %v3948 = vunpack.c.l.b16 %v2712
        %v3949 = vunpack.c.h.b16 %v2712
        %v3950 = vunpack.c.l.b16 %v2713
        %v3951 = vunpack.c.h.b16 %v2713
        %v3952 = vunpack.c.l.b16 %v2714
        %v3953 = vunpack.c.h.b16 %v2714
        %v3954 = vunpack.c.l.b16 %v2715
        %v3955 = vunpack.c.h.b16 %v2715
        %v3956 = vunpack.c.l.b16 %v2716
        %v3957 = vunpack.c.h.b16 %v2716
        %v3958 = vunpack.c.l.b16 %v2717
        %v3959 = vunpack.c.h.b16 %v2717
        %v3960 = vunpack.c.l.b16 %v2718
        %v3961 = vunpack.c.h.b16 %v2718
        %v3962 = vunpack.c.l.b16 %v2719
        %v3963 = vunpack.c.h.b16 %v2719
        %v3964 = vunpack.c.l.b16 %v2720
        %v3965 = vunpack.c.h.b16 %v2720
        %v3966 = vunpack.c.l.b16 %v2721
        %v3967 = vunpack.c.h.b16 %v2721
        %v3968 = vunpack.c.l.b16 %v2722
        %v3969 = vunpack.c.h.b16 %v2722
        %v3970 = vunpack.c.l.b16 %v2723
        %v3971 = vunpack.c.h.b16 %v2723
        %v3972 = vunpack.c.l.b16 %v2724
        %v3973 = vunpack.c.h.b16 %v2724
        %v3974 = vunpack.c.l.b16 %v2725
        %v3975 = vunpack.c.h.b16 %v2725
        %v3976 = vunpack.c.l.b16 %v2726
        %v3977 = vunpack.c.h.b16 %v2726
        %v3978 = vunpack.c.l.b16 %v2727
        %v3979 = vunpack.c.h.b16 %v2727
        %v3980 = vunpack.c.l.b16 %v2728
        %v3981 = vunpack.c.h.b16 %v2728
        %v3982 = vunpack.c.l.b16 %v2729
        %v3983 = vunpack.c.h.b16 %v2729
        %v3984 = vunpack.c.l.b16 %v2730
        %v3985 = vunpack.c.h.b16 %v2730
        %v3986 = vunpack.c.l.b16 %v2731
        %v3987 = vunpack.c.h.b16 %v2731
        %v3988 = vunpack.c.l.b16 %v2732
        %v3989 = vunpack.c.h.b16 %v2732
        %v3990 = vunpack.c.l.b16 %v2733
        %v3991 = vunpack.c.h.b16 %v2733
        %v3992 = vunpack.c.l.b16 %v2734
        %v3993 = vunpack.c.h.b16 %v2734
        %v3994 = vunpack.c.l.b16 %v2735
        %v3995 = vunpack.c.h.b16 %v2735
        %v3996 = vunpack.c.l.b16 %v2736
        %v3997 = vunpack.c.h.b16 %v2736
        %v3998 = vunpack.c.l.b16 %v2737
        %v3999 = vunpack.c.h.b16 %v2737
        %v4000 = vunpack.c.l.b16 %v2738
        %v4001 = vunpack.c.h.b16 %v2738
        %v4002 = vunpack.c.l.b16 %v2739
        %v4003 = vunpack.c.h.b16 %v2739
        %v4004 = vunpack.c.l.b16 %v2740
        %v4005 = vunpack.c.h.b16 %v2740
        %v4006 = vunpack.c.l.b16 %v2741
        %v4007 = vunpack.c.h.b16 %v2741
        %v4008 = vunpack.c.l.b16 %v2742
        %v4009 = vunpack.c.h.b16 %v2742
        %v4010 = vunpack.c.l.b16 %v2743
        %v4011 = vunpack.c.h.b16 %v2743
        %v4012 = vunpack.c.l.b16 %v2744
        %v4013 = vunpack.c.h.b16 %v2744
        %v4014 = vunpack.c.l.b16 %v2745
        %v4015 = vunpack.c.h.b16 %v2745
        %v4016 = vunpack.c.l.b16 %v2746
        %v4017 = vunpack.c.h.b16 %v2746
        %v4018 = vunpack.c.l.b16 %v2747
        %v4019 = vunpack.c.h.b16 %v2747
        %v4020 = vunpack.c.l.b16 %v2748
        %v4021 = vunpack.c.h.b16 %v2748
        %v4022 = vunpack.c.l.b16 %v2749
        %v4023 = vunpack.c.h.b16 %v2749
        %v4024 = vunpack.c.l.b16 %v2750
        %v4025 = vunpack.c.h.b16 %v2750
        %v4026 = vunpack.c.l.b16 %v2751
        %v4027 = vunpack.c.h.b16 %v2751
        %v4028 = vunpack.c.l.b16 %v2752
        %v4029 = vunpack.c.h.b16 %v2752
        %v4030 = vunpack.c.l.b16 %v2753
        %v4031 = vunpack.c.h.b16 %v2753
        %v4032 = vunpack.c.l.b16 %v2754
        %v4033 = vunpack.c.h.b16 %v2754
        %v4034 = vunpack.c.l.b16 %v2755
        %v4035 = vunpack.c.h.b16 %v2755
        %v4036 = vunpack.c.l.b16 %v2756
        %v4037 = vunpack.c.h.b16 %v2756
        %v4038 = vunpack.c.l.b16 %v2757
        %v4039 = vunpack.c.h.b16 %v2757
        %v4040 = vunpack.c.l.b16 %v2758
        %v4041 = vunpack.c.h.b16 %v2758
        %v4042 = vunpack.c.l.b16 %v2759
        %v4043 = vunpack.c.h.b16 %v2759
        %v4044 = vunpack.c.l.b16 %v2760
        %v4045 = vunpack.c.h.b16 %v2760
        %v4046 = vunpack.c.l.b16 %v2761
        %v4047 = vunpack.c.h.b16 %v2761
        %v4048 = vunpack.c.l.b16 %v2762
        %v4049 = vunpack.c.h.b16 %v2762
        %v4050 = vunpack.c.l.b16 %v2763
        %v4051 = vunpack.c.h.b16 %v2763
        %v4052 = vunpack.c.l.b16 %v2764
        %v4053 = vunpack.c.h.b16 %v2764
        %v4054 = vunpack.c.l.b16 %v2765
        %v4055 = vunpack.c.h.b16 %v2765
        %v4056 = vunpack.c.l.b16 %v2766
        %v4057 = vunpack.c.h.b16 %v2766
        %v4058 = vunpack.c.l.b16 %v2767
        %v4059 = vunpack.c.h.b16 %v2767
        %v4060 = vunpack.c.l.b16 %v2768
        %v4061 = vunpack.c.h.b16 %v2768
        %v4062 = vunpack.c.l.b16 %v2769
        %v4063 = vunpack.c.h.b16 %v2769
        %v4064 = vunpack.c.l.b16 %v2770
        %v4065 = vunpack.c.h.b16 %v2770
        %v4066 = vunpack.c.l.b16 %v2771
        %v4067 = vunpack.c.h.b16 %v2771
        %v4068 = vunpack.c.l.b16 %v2772
        %v4069 = vunpack.c.h.b16 %v2772
        %v4070 = vunpack.c.l.b16 %v2773
        %v4071 = vunpack.c.h.b16 %v2773
        %v4072 = vunpack.c.l.b16 %v2774
        %v4073 = vunpack.c.h.b16 %v2774
        %v4074 = vunpack.c.l.b16 %v2775
        %v4075 = vunpack.c.h.b16 %v2775
        %v4076 = vunpack.c.l.b16 %v2776
        %v4077 = vunpack.c.h.b16 %v2776
        %v4078 = vunpack.c.l.b16 %v2777
        %v4079 = vunpack.c.h.b16 %v2777
        %v4080 = vunpack.c.l.b16 %v2778
        %v4081 = vunpack.c.h.b16 %v2778
        %v4082 = vunpack.c.l.b16 %v2779
        %v4083 = vunpack.c.h.b16 %v2779
        %v4084 = vunpack.c.l.b16 %v2780
        %v4085 = vunpack.c.h.b16 %v2780
        %v4086 = vunpack.c.l.b16 %v2781
        %v4087 = vunpack.c.h.b16 %v2781
        %v4088 = vunpack.c.l.b16 %v2782
        %v4089 = vunpack.c.h.b16 %v2782
        %v4090 = vunpack.c.l.b16 %v2783
        %v4091 = vunpack.c.h.b16 %v2783
        %v4092 = vunpack.c.l.b16 %v2784
        %v4093 = vunpack.c.h.b16 %v2784
        %v4094 = vunpack.c.l.b16 %v2785
        %v4095 = vunpack.c.h.b16 %v2785
        %v4096 = vunpack.c.l.b16 %v2786
        %v4097 = vunpack.c.h.b16 %v2786
        %v4098 = vunpack.c.l.b16 %v2787
        %v4099 = vunpack.c.h.b16 %v2787
        %v4100 = vunpack.c.l.b16 %v2788
        %v4101 = vunpack.c.h.b16 %v2788
        %v4102 = vunpack.c.l.b16 %v2789
        %v4103 = vunpack.c.h.b16 %v2789
        %v4104 = vunpack.c.l.b16 %v2790
        %v4105 = vunpack.c.h.b16 %v2790
        %v4106 = vunpack.c.l.b16 %v2791
        %v4107 = vunpack.c.h.b16 %v2791
        %v4108 = vunpack.c.l.b16 %v2792
        %v4109 = vunpack.c.h.b16 %v2792
        %v4110 = vunpack.c.l.b16 %v2793
        %v4111 = vunpack.c.h.b16 %v2793
        %v4112 = vunpack.c.l.b16 %v2794
        %v4113 = vunpack.c.h.b16 %v2794
        %v4114 = vunpack.c.l.b16 %v2795
        %v4115 = vunpack.c.h.b16 %v2795
        %v4116 = vunpack.c.l.b16 %v2796
        %v4117 = vunpack.c.h.b16 %v2796
        %v4118 = vunpack.c.l.b16 %v2797
        %v4119 = vunpack.c.h.b16 %v2797
        %v4120 = vunpack.c.l.b16 %v2798
        %v4121 = vunpack.c.h.b16 %v2798
        %v4122 = vunpack.c.l.b16 %v2799
        %v4123 = vunpack.c.h.b16 %v2799
        %v4124 = vunpack.c.l.b16 %v2800
        %v4125 = vunpack.c.h.b16 %v2800
        %v4126 = vunpack.c.l.b16 %v2801
        %v4127 = vunpack.c.h.b16 %v2801
        %v4128 = vunpack.c.l.b16 %v2802
        %v4129 = vunpack.c.h.b16 %v2802
        %v4130 = vunpack.c.l.b16 %v2803
        %v4131 = vunpack.c.h.b16 %v2803
        %v4132 = vunpack.c.l.b16 %v2804
        %v4133 = vunpack.c.h.b16 %v2804
        %v4134 = vpack.c.b16 %v3754, %v3750
        %v4135 = vpack.c.b16 %v3755, %v3751
        %v4136 = vpack.c.b16 %v3756, %v3752
        %v4137 = vpack.c.b16 %v3757, %v3753
        %v4138 = vpack.c.b16 %v3762, %v3758
        %v4139 = vpack.c.b16 %v3763, %v3759
        %v4140 = vpack.c.b16 %v3764, %v3760
        %v4141 = vpack.c.b16 %v3765, %v3761
        %v4142 = vpack.c.b16 %v3770, %v3766
        %v4143 = vpack.c.b16 %v3771, %v3767
        %v4144 = vpack.c.b16 %v3772, %v3768
        %v4145 = vpack.c.b16 %v3773, %v3769
        %v4146 = vpack.c.b16 %v3778, %v3774
        %v4147 = vpack.c.b16 %v3779, %v3775
        %v4148 = vpack.c.b16 %v3780, %v3776
        %v4149 = vpack.c.b16 %v3781, %v3777
        %v4150 = vpack.c.b16 %v3786, %v3782
        %v4151 = vpack.c.b16 %v3787, %v3783
        %v4152 = vpack.c.b16 %v3788, %v3784
        %v4153 = vpack.c.b16 %v3789, %v3785
        %v4154 = vpack.c.b16 %v3794, %v3790
        %v4155 = vpack.c.b16 %v3795, %v3791
        %v4156 = vpack.c.b16 %v3796, %v3792
        %v4157 = vpack.c.b16 %v3797, %v3793
        %v4158 = vpack.c.b16 %v3802, %v3798
        %v4159 = vpack.c.b16 %v3803, %v3799
        %v4160 = vpack.c.b16 %v3804, %v3800
        %v4161 = vpack.c.b16 %v3805, %v3801
        %v4162 = vpack.c.b16 %v3810, %v3806
        %v4163 = vpack.c.b16 %v3811, %v3807
        %v4164 = vpack.c.b16 %v3812, %v3808
        %v4165 = vpack.c.b16 %v3813, %v3809
        %v4166 = vpack.c.b16 %v3818, %v3814
        %v4167 = vpack.c.b16 %v3819, %v3815
        %v4168 = vpack.c.b16 %v3820, %v3816
        %v4169 = vpack.c.b16 %v3821, %v3817
        %v4170 = vpack.c.b16 %v3826, %v3822
        %v4171 = vpack.c.b16 %v3827, %v3823
        %v4172 = vpack.c.b16 %v3828, %v3824
        %v4173 = vpack.c.b16 %v3829, %v3825
        %v4174 = vpack.c.b16 %v3834, %v3830
        %v4175 = vpack.c.b16 %v3835, %v3831
        %v4176 = vpack.c.b16 %v3836, %v3832
        %v4177 = vpack.c.b16 %v3837, %v3833
        %v4178 = vpack.c.b16 %v3842, %v3838
        %v4179 = vpack.c.b16 %v3843, %v3839
        %v4180 = vpack.c.b16 %v3844, %v3840
        %v4181 = vpack.c.b16 %v3845, %v3841
        %v4182 = vpack.c.b16 %v3850, %v3846
        %v4183 = vpack.c.b16 %v3851, %v3847
        %v4184 = vpack.c.b16 %v3852, %v3848
        %v4185 = vpack.c.b16 %v3853, %v3849
        %v4186 = vpack.c.b16 %v3858, %v3854
        %v4187 = vpack.c.b16 %v3859, %v3855
        %v4188 = vpack.c.b16 %v3860, %v3856
        %v4189 = vpack.c.b16 %v3861, %v3857
        %v4190 = vpack.c.b16 %v3866, %v3862
        %v4191 = vpack.c.b16 %v3867, %v3863
        %v4192 = vpack.c.b16 %v3868, %v3864
        %v4193 = vpack.c.b16 %v3869, %v3865
        %v4194 = vpack.c.b16 %v3874, %v3870
        %v4195 = vpack.c.b16 %v3875, %v3871
        %v4196 = vpack.c.b16 %v3876, %v3872
        %v4197 = vpack.c.b16 %v3877, %v3873
        %v4198 = vpack.c.b16 %v3882, %v3878
        %v4199 = vpack.c.b16 %v3883, %v3879
        %v4200 = vpack.c.b16 %v3884, %v3880
        %v4201 = vpack.c.b16 %v3885, %v3881
        %v4202 = vpack.c.b16 %v3890, %v3886
        %v4203 = vpack.c.b16 %v3891, %v3887
        %v4204 = vpack.c.b16 %v3892, %v3888
        %v4205 = vpack.c.b16 %v3893, %v3889
        %v4206 = vpack.c.b16 %v3898, %v3894
        %v4207 = vpack.c.b16 %v3899, %v3895
        %v4208 = vpack.c.b16 %v3900, %v3896
        %v4209 = vpack.c.b16 %v3901, %v3897
        %v4210 = vpack.c.b16 %v3906, %v3902
        %v4211 = vpack.c.b16 %v3907, %v3903
        %v4212 = vpack.c.b16 %v3908, %v3904
        %v4213 = vpack.c.b16 %v3909, %v3905
        %v4214 = vpack.c.b16 %v3914, %v3910
        %v4215 = vpack.c.b16 %v3915, %v3911
        %v4216 = vpack.c.b16 %v3916, %v3912
        %v4217 = vpack.c.b16 %v3917, %v3913
        %v4218 = vpack.c.b16 %v3922, %v3918
        %v4219 = vpack.c.b16 %v3923, %v3919
        %v4220 = vpack.c.b16 %v3924, %v3920
        %v4221 = vpack.c.b16 %v3925, %v3921
        %v4222 = vpack.c.b16 %v3930, %v3926
        %v4223 = vpack.c.b16 %v3931, %v3927
        %v4224 = vpack.c.b16 %v3932, %v3928
        %v4225 = vpack.c.b16 %v3933, %v3929
        %v4226 = vpack.c.b16 %v3938, %v3934
        %v4227 = vpack.c.b16 %v3939, %v3935
        %v4228 = vpack.c.b16 %v3940, %v3936
        %v4229 = vpack.c.b16 %v3941, %v3937
        %v4230 = vpack.c.b16 %v3946, %v3942
        %v4231 = vpack.c.b16 %v3947, %v3943
        %v4232 = vpack.c.b16 %v3948, %v3944
        %v4233 = vpack.c.b16 %v3949, %v3945
        %v4234 = vpack.c.b16 %v3954, %v3950
        %v4235 = vpack.c.b16 %v3955, %v3951
        %v4236 = vpack.c.b16 %v3956, %v3952
        %v4237 = vpack.c.b16 %v3957, %v3953
        %v4238 = vpack.c.b16 %v3962, %v3958
        %v4239 = vpack.c.b16 %v3963, %v3959
        %v4240 = vpack.c.b16 %v3964, %v3960
        %v4241 = vpack.c.b16 %v3965, %v3961
        %v4242 = vpack.c.b16 %v3970, %v3966
        %v4243 = vpack.c.b16 %v3971, %v3967
        %v4244 = vpack.c.b16 %v3972, %v3968
        %v4245 = vpack.c.b16 %v3973, %v3969
        %v4246 = vpack.c.b16 %v3978, %v3974
        %v4247 = vpack.c.b16 %v3979, %v3975
        %v4248 = vpack.c.b16 %v3980, %v3976
        %v4249 = vpack.c.b16 %v3981, %v3977
        %v4250 = vpack.c.b16 %v3986, %v3982
        %v4251 = vpack.c.b16 %v3987, %v3983
        %v4252 = vpack.c.b16 %v3988, %v3984
        %v4253 = vpack.c.b16 %v3989, %v3985
        %v4254 = vpack.c.b16 %v3994, %v3990
        %v4255 = vpack.c.b16 %v3995, %v3991
        %v4256 = vpack.c.b16 %v3996, %v3992
        %v4257 = vpack.c.b16 %v3997, %v3993
        %v4258 = vpack.c.b16 %v4002, %v3998
        %v4259 = vpack.c.b16 %v4003, %v3999
        %v4260 = vpack.c.b16 %v4004, %v4000
        %v4261 = vpack.c.b16 %v4005, %v4001
        %v4262 = vpack.c.b16 %v4010, %v4006
        %v4263 = vpack.c.b16 %v4011, %v4007
        %v4264 = vpack.c.b16 %v4012, %v4008
        %v4265 = vpack.c.b16 %v4013, %v4009
        %v4266 = vpack.c.b16 %v4018, %v4014
        %v4267 = vpack.c.b16 %v4019, %v4015
        %v4268 = vpack.c.b16 %v4020, %v4016
        %v4269 = vpack.c.b16 %v4021, %v4017
        %v4270 = vpack.c.b16 %v4026, %v4022
        %v4271 = vpack.c.b16 %v4027, %v4023
        %v4272 = vpack.c.b16 %v4028, %v4024
        %v4273 = vpack.c.b16 %v4029, %v4025
        %v4274 = vpack.c.b16 %v4034, %v4030
        %v4275 = vpack.c.b16 %v4035, %v4031
        %v4276 = vpack.c.b16 %v4036, %v4032
        %v4277 = vpack.c.b16 %v4037, %v4033
        %v4278 = vpack.c.b16 %v4042, %v4038
        %v4279 = vpack.c.b16 %v4043, %v4039
        %v4280 = vpack.c.b16 %v4044, %v4040
        %v4281 = vpack.c.b16 %v4045, %v4041
        %v4282 = vpack.c.b16 %v4050, %v4046
        %v4283 = vpack.c.b16 %v4051, %v4047
        %v4284 = vpack.c.b16 %v4052, %v4048
        %v4285 = vpack.c.b16 %v4053, %v4049
        %v4286 = vpack.c.b16 %v4058, %v4054
        %v4287 = vpack.c.b16 %v4059, %v4055
        %v4288 = vpack.c.b16 %v4060, %v4056
        %v4289 = vpack.c.b16 %v4061, %v4057
        %v4290 = vpack.c.b16 %v4066, %v4062
        %v4291 = vpack.c.b16 %v4067, %v4063
        %v4292 = vpack.c.b16 %v4068, %v4064
        %v4293 = vpack.c.b16 %v4069, %v4065
        %v4294 = vpack.c.b16 %v4074, %v4070
        %v4295 = vpack.c.b16 %v4075, %v4071
        %v4296 = vpack.c.b16 %v4076, %v4072
        %v4297 = vpack.c.b16 %v4077, %v4073
        %v4298 = vpack.c.b16 %v4082, %v4078
        %v4299 = vpack.c.b16 %v4083, %v4079
        %v4300 = vpack.c.b16 %v4084, %v4080
        %v4301 = vpack.c.b16 %v4085, %v4081
        %v4302 = vpack.c.b16 %v4090, %v4086
        %v4303 = vpack.c.b16 %v4091, %v4087
        %v4304 = vpack.c.b16 %v4092, %v4088
        %v4305 = vpack.c.b16 %v4093, %v4089
        %v4306 = vpack.c.b16 %v4098, %v4094
        %v4307 = vpack.c.b16 %v4099, %v4095
        %v4308 = vpack.c.b16 %v4100, %v4096
        %v4309 = vpack.c.b16 %v4101, %v4097
        %v4310 = vpack.c.b16 %v4106, %v4102
        %v4311 = vpack.c.b16 %v4107, %v4103
        %v4312 = vpack.c.b16 %v4108, %v4104
        %v4313 = vpack.c.b16 %v4109, %v4105
        %v4314 = vpack.c.b16 %v4114, %v4110
        %v4315 = vpack.c.b16 %v4115, %v4111
        %v4316 = vpack.c.b16 %v4116, %v4112
        %v4317 = vpack.c.b16 %v4117, %v4113
        %v4318 = vpack.c.b16 %v4122, %v4118
        %v4319 = vpack.c.b16 %v4123, %v4119
        %v4320 = vpack.c.b16 %v4124, %v4120
        %v4321 = vpack.c.b16 %v4125, %v4121
        %v4322 = vpack.c.b16 %v4130, %v4126
        %v4323 = vpack.c.b16 %v4131, %v4127
        %v4324 = vpack.c.b16 %v4132, %v4128
        %v4325 = vpack.c.b16 %v4133, %v4129
        %4518 = vmatprep.subr.bf16.mxu0 %v4135
        %4519 = vmatpush1.bf16.msra.mxu0 %v4134
        %4520 = vmatprep.subr.bf16.mxu0 %v4139
        %4521 = vmatpush1.bf16.msra.mxu0 %v4138
        %4522 = vmatprep.subr.bf16.mxu0 %v4143
        %4523 = vmatpush1.bf16.msra.mxu0 %v4142
        %4524 = vmatprep.subr.bf16.mxu0 %v4147
        %4525 = vmatpush1.bf16.msra.mxu0 %v4146
        %4526 = vmatprep.subr.bf16.mxu0 %v4151
        %4527 = vmatpush1.bf16.msra.mxu0 %v4150
        %4528 = vmatprep.subr.bf16.mxu0 %v4155
        %4529 = vmatpush1.bf16.msra.mxu0 %v4154
        %4530 = vmatprep.subr.bf16.mxu0 %v4159
        %4531 = vmatpush1.bf16.msra.mxu0 %v4158
        %4532 = vmatprep.subr.bf16.mxu0 %v4163
        %4533 = vmatpush1.bf16.msra.mxu0 %v4162
        %4534 = vmatprep.subr.bf16.mxu0 %v4167
        %4535 = vmatpush1.bf16.msra.mxu0 %v4166
        %4536 = vmatprep.subr.bf16.mxu0 %v4171
        %4537 = vmatpush1.bf16.msra.mxu0 %v4170
        %4538 = vmatprep.subr.bf16.mxu0 %v4175
        %4539 = vmatpush1.bf16.msra.mxu0 %v4174
        %4540 = vmatprep.subr.bf16.mxu0 %v4179
        %4541 = vmatpush1.bf16.msra.mxu0 %v4178
        %4542 = vmatprep.subr.bf16.mxu0 %v4183
        %4543 = vmatpush1.bf16.msra.mxu0 %v4182
        %4544 = vmatprep.subr.bf16.mxu0 %v4187
        %4545 = vmatpush1.bf16.msra.mxu0 %v4186
        %4546 = vmatprep.subr.bf16.mxu0 %v4191
        %4547 = vmatpush1.bf16.msra.mxu0 %v4190
        %4548 = vmatprep.subr.bf16.mxu0 %v4195
        %4549 = vmatpush1.bf16.msra.mxu0 %v4194
        %4550 = vmatprep.mubr.bf16.mxu0 %v2608
        %4551 = vmatmul.mubr.bf16.gmra.mrb[0].mxu0 %v2607
        %v4552 = vpop.f32.mrb[0].mxu0
        %v4553 = vadd.f32 %v3470, %v4552
        %v4554 = vpop.f32.mrb[0].mxu0
        %v4555 = vadd.f32 %v3472, %v4554
        %v4556 = vpop.f32.mrb[0].mxu0
        %v4557 = vpop.f32.mrb[0].mxu0
        %4558 = vdwg.mxu0
        %4559 = vmatprep.subr.bf16.mxu0 %v4199
        %4560 = vmatpush1.bf16.msra.mxu0 %v4198
        %4561 = vmatprep.subr.bf16.mxu0 %v4203
        %4562 = vmatpush1.bf16.msra.mxu0 %v4202
        %4563 = vmatprep.subr.bf16.mxu0 %v4207
        %4564 = vmatpush1.bf16.msra.mxu0 %v4206
        %4565 = vmatprep.subr.bf16.mxu0 %v4211
        %4566 = vmatpush1.bf16.msra.mxu0 %v4210
        %4567 = vmatprep.subr.bf16.mxu0 %v4215
        %4568 = vmatpush1.bf16.msra.mxu0 %v4214
        %4569 = vmatprep.subr.bf16.mxu0 %v4219
        %4570 = vmatpush1.bf16.msra.mxu0 %v4218
        %4571 = vmatprep.subr.bf16.mxu0 %v4223
        %4572 = vmatpush1.bf16.msra.mxu0 %v4222
        %4573 = vmatprep.subr.bf16.mxu0 %v4227
        %4574 = vmatpush1.bf16.msra.mxu0 %v4226
        %4575 = vmatprep.subr.bf16.mxu0 %v4231
        %4576 = vmatpush1.bf16.msra.mxu0 %v4230
        %4577 = vmatprep.subr.bf16.mxu0 %v4235
        %4578 = vmatpush1.bf16.msra.mxu0 %v4234
        %4579 = vmatprep.subr.bf16.mxu0 %v4239
        %4580 = vmatpush1.bf16.msra.mxu0 %v4238
        %4581 = vmatprep.subr.bf16.mxu0 %v4243
        %4582 = vmatpush1.bf16.msra.mxu0 %v4242
        %4583 = vmatprep.subr.bf16.mxu0 %v4247
        %4584 = vmatpush1.bf16.msra.mxu0 %v4246
        %4585 = vmatprep.subr.bf16.mxu0 %v4251
        %4586 = vmatpush1.bf16.msra.mxu0 %v4250
        %4587 = vmatprep.subr.bf16.mxu0 %v4255
        %4588 = vmatpush1.bf16.msra.mxu0 %v4254
        %4589 = vmatprep.subr.bf16.mxu0 %v4259
        %4590 = vmatpush1.bf16.msra.mxu0 %v4258
        %4591 = vmatprep.mubr.bf16.mxu0 %v2610
        %4592 = vmatmul.mubr.bf16.gmra.mrb[0].mxu0 %v2609
        %v4593 = vpop.f32.mrb[0].mxu0
        %v4594 = vadd.f32 %v4553, %v4593
        %v4595 = vpop.f32.mrb[0].mxu0
        %v4596 = vadd.f32 %v4555, %v4595
        %v4597 = vpop.f32.mrb[0].mxu0
        %v4598 = vpop.f32.mrb[0].mxu0
        %4599 = vdwg.mxu0
        %4600 = vmatprep.subr.bf16.mxu0 %v4263
        %4601 = vmatpush1.bf16.msra.mxu0 %v4262
        %4602 = vmatprep.subr.bf16.mxu0 %v4267
        %4603 = vmatpush1.bf16.msra.mxu0 %v4266
        %4604 = vmatprep.subr.bf16.mxu0 %v4271
        %4605 = vmatpush1.bf16.msra.mxu0 %v4270
        %4606 = vmatprep.subr.bf16.mxu0 %v4275
        %4607 = vmatpush1.bf16.msra.mxu0 %v4274
        %4608 = vmatprep.subr.bf16.mxu0 %v4279
        %4609 = vmatpush1.bf16.msra.mxu0 %v4278
        %4610 = vmatprep.subr.bf16.mxu0 %v4283
        %4611 = vmatpush1.bf16.msra.mxu0 %v4282
        %4612 = vmatprep.subr.bf16.mxu0 %v4287
        %4613 = vmatpush1.bf16.msra.mxu0 %v4286
        %4614 = vmatprep.subr.bf16.mxu0 %v4291
        %4615 = vmatpush1.bf16.msra.mxu0 %v4290
        %4616 = vmatprep.subr.bf16.mxu0 %v4295
        %4617 = vmatpush1.bf16.msra.mxu0 %v4294
        %4618 = vmatprep.subr.bf16.mxu0 %v4299
        %4619 = vmatpush1.bf16.msra.mxu0 %v4298
        %4620 = vmatprep.subr.bf16.mxu0 %v4303
        %4621 = vmatpush1.bf16.msra.mxu0 %v4302
        %4622 = vmatprep.subr.bf16.mxu0 %v4307
        %4623 = vmatpush1.bf16.msra.mxu0 %v4306
        %4624 = vmatprep.subr.bf16.mxu0 %v4311
        %4625 = vmatpush1.bf16.msra.mxu0 %v4310
        %4626 = vmatprep.subr.bf16.mxu0 %v4315
        %4627 = vmatpush1.bf16.msra.mxu0 %v4314
        %4628 = vmatprep.subr.bf16.mxu0 %v4319
        %4629 = vmatpush1.bf16.msra.mxu0 %v4318
        %4630 = vmatprep.subr.bf16.mxu0 %v4323
        %4631 = vmatpush1.bf16.msra.mxu0 %v4322
        %4632 = vmatprep.mubr.bf16.mxu0 %v2612
        %4633 = vmatmul.mubr.bf16.gmra.mrb[0].mxu0 %v2611
        %v4634 = vpop.f32.mrb[0].mxu0
        %v4635 = vadd.f32 %v4594, %v4634
        %v4636 = vpop.f32.mrb[0].mxu0
        %v4637 = vadd.f32 %v4596, %v4636
        %v4638 = vpop.f32.mrb[0].mxu0
        %v4639 = vpop.f32.mrb[0].mxu0
        %4640 = vdwg.mxu0
        %4641 = vmatprep.subr.bf16.mxu0 %v4137
        %4642 = vmatpush1.bf16.msra.mxu0 %v4136
        %4643 = vmatprep.subr.bf16.mxu0 %v4141
        %4644 = vmatpush1.bf16.msra.mxu0 %v4140
        %4645 = vmatprep.subr.bf16.mxu0 %v4145
        %4646 = vmatpush1.bf16.msra.mxu0 %v4144
        %4647 = vmatprep.subr.bf16.mxu0 %v4149
        %4648 = vmatpush1.bf16.msra.mxu0 %v4148
        %4649 = vmatprep.subr.bf16.mxu0 %v4153
        %4650 = vmatpush1.bf16.msra.mxu0 %v4152
        %4651 = vmatprep.subr.bf16.mxu0 %v4157
        %4652 = vmatpush1.bf16.msra.mxu0 %v4156
        %4653 = vmatprep.subr.bf16.mxu0 %v4161
        %4654 = vmatpush1.bf16.msra.mxu0 %v4160
        %4655 = vmatprep.subr.bf16.mxu0 %v4165
        %4656 = vmatpush1.bf16.msra.mxu0 %v4164
        %4657 = vmatprep.subr.bf16.mxu0 %v4169
        %4658 = vmatpush1.bf16.msra.mxu0 %v4168
        %4659 = vmatprep.subr.bf16.mxu0 %v4173
        %4660 = vmatpush1.bf16.msra.mxu0 %v4172
        %4661 = vmatprep.subr.bf16.mxu0 %v4177
        %4662 = vmatpush1.bf16.msra.mxu0 %v4176
        %4663 = vmatprep.subr.bf16.mxu0 %v4181
        %4664 = vmatpush1.bf16.msra.mxu0 %v4180
        %4665 = vmatprep.subr.bf16.mxu0 %v4185
        %4666 = vmatpush1.bf16.msra.mxu0 %v4184
        %4667 = vmatprep.subr.bf16.mxu0 %v4189
        %4668 = vmatpush1.bf16.msra.mxu0 %v4188
        %4669 = vmatprep.subr.bf16.mxu0 %v4193
        %4670 = vmatpush1.bf16.msra.mxu0 %v4192
        %4671 = vmatprep.subr.bf16.mxu0 %v4197
        %4672 = vmatpush1.bf16.msra.mxu0 %v4196
        %4673 = vmatprep.mubr.bf16.mxu0 %v2608
        %4674 = vmatmul.mubr.bf16.gmra.mrb[0].mxu0 %v2607
        %v4675 = vpop.f32.mrb[0].mxu0
        %v4676 = vadd.f32 %v3552, %v4675
        %v4677 = vpop.f32.mrb[0].mxu0
        %v4678 = vadd.f32 %v3554, %v4677
        %v4679 = vpop.f32.mrb[0].mxu0
        %v4680 = vpop.f32.mrb[0].mxu0
        %4681 = vdwg.mxu0
        %4682 = vmatprep.subr.bf16.mxu0 %v4201
        %4683 = vmatpush1.bf16.msra.mxu0 %v4200
        %4684 = vmatprep.subr.bf16.mxu0 %v4205
        %4685 = vmatpush1.bf16.msra.mxu0 %v4204
        %4686 = vmatprep.subr.bf16.mxu0 %v4209
        %4687 = vmatpush1.bf16.msra.mxu0 %v4208
        %4688 = vmatprep.subr.bf16.mxu0 %v4213
        %4689 = vmatpush1.bf16.msra.mxu0 %v4212
        %4690 = vmatprep.subr.bf16.mxu0 %v4217
        %4691 = vmatpush1.bf16.msra.mxu0 %v4216
        %4692 = vmatprep.subr.bf16.mxu0 %v4221
        %4693 = vmatpush1.bf16.msra.mxu0 %v4220
        %4694 = vmatprep.subr.bf16.mxu0 %v4225
        %4695 = vmatpush1.bf16.msra.mxu0 %v4224
        %4696 = vmatprep.subr.bf16.mxu0 %v4229
        %4697 = vmatpush1.bf16.msra.mxu0 %v4228
        %4698 = vmatprep.subr.bf16.mxu0 %v4233
        %4699 = vmatpush1.bf16.msra.mxu0 %v4232
        %4700 = vmatprep.subr.bf16.mxu0 %v4237
        %4701 = vmatpush1.bf16.msra.mxu0 %v4236
        %4702 = vmatprep.subr.bf16.mxu0 %v4241
        %4703 = vmatpush1.bf16.msra.mxu0 %v4240
        %4704 = vmatprep.subr.bf16.mxu0 %v4245
        %4705 = vmatpush1.bf16.msra.mxu0 %v4244
        %4706 = vmatprep.subr.bf16.mxu0 %v4249
        %4707 = vmatpush1.bf16.msra.mxu0 %v4248
        %4708 = vmatprep.subr.bf16.mxu0 %v4253
        %4709 = vmatpush1.bf16.msra.mxu0 %v4252
        %4710 = vmatprep.subr.bf16.mxu0 %v4257
        %4711 = vmatpush1.bf16.msra.mxu0 %v4256
        %4712 = vmatprep.subr.bf16.mxu0 %v4261
        %4713 = vmatpush1.bf16.msra.mxu0 %v4260
        %4714 = vmatprep.mubr.bf16.mxu0 %v2610
        %4715 = vmatmul.mubr.bf16.gmra.mrb[0].mxu0 %v2609
        %v4716 = vpop.f32.mrb[0].mxu0
        %v4717 = vadd.f32 %v4676, %v4716
        %v4718 = vpop.f32.mrb[0].mxu0
        %v4719 = vadd.f32 %v4678, %v4718
        %v4720 = vpop.f32.mrb[0].mxu0
        %v4721 = vpop.f32.mrb[0].mxu0
        %4722 = vdwg.mxu0
        %4723 = vmatprep.subr.bf16.mxu0 %v4265
        %4724 = vmatpush1.bf16.msra.mxu0 %v4264
        %4725 = vmatprep.subr.bf16.mxu0 %v4269
        %4726 = vmatpush1.bf16.msra.mxu0 %v4268
        %4727 = vmatprep.subr.bf16.mxu0 %v4273
        %4728 = vmatpush1.bf16.msra.mxu0 %v4272
        %4729 = vmatprep.subr.bf16.mxu0 %v4277
        %4730 = vmatpush1.bf16.msra.mxu0 %v4276
        %4731 = vmatprep.subr.bf16.mxu0 %v4281
        %4732 = vmatpush1.bf16.msra.mxu0 %v4280
        %4733 = vmatprep.subr.bf16.mxu0 %v4285
        %4734 = vmatpush1.bf16.msra.mxu0 %v4284
        %4735 = vmatprep.subr.bf16.mxu0 %v4289
        %4736 = vmatpush1.bf16.msra.mxu0 %v4288
        %4737 = vmatprep.subr.bf16.mxu0 %v4293
        %4738 = vmatpush1.bf16.msra.mxu0 %v4292
        %4739 = vmatprep.subr.bf16.mxu0 %v4297
        %4740 = vmatpush1.bf16.msra.mxu0 %v4296
        %4741 = vmatprep.subr.bf16.mxu0 %v4301
        %4742 = vmatpush1.bf16.msra.mxu0 %v4300
        %4743 = vmatprep.subr.bf16.mxu0 %v4305
        %4744 = vmatpush1.bf16.msra.mxu0 %v4304
        %4745 = vmatprep.subr.bf16.mxu0 %v4309
        %4746 = vmatpush1.bf16.msra.mxu0 %v4308
        %4747 = vmatprep.subr.bf16.mxu0 %v4313
        %4748 = vmatpush1.bf16.msra.mxu0 %v4312
        %4749 = vmatprep.subr.bf16.mxu0 %v4317
        %4750 = vmatpush1.bf16.msra.mxu0 %v4316
        %4751 = vmatprep.subr.bf16.mxu0 %v4321
        %4752 = vmatpush1.bf16.msra.mxu0 %v4320
        %4753 = vmatprep.subr.bf16.mxu0 %v4325
        %4754 = vmatpush1.bf16.msra.mxu0 %v4324
        %4755 = vmatprep.mubr.bf16.mxu0 %v2612
        %4756 = vmatmul.mubr.bf16.gmra.mrb[0].mxu0 %v2611
        %v4757 = vpop.f32.mrb[0].mxu0
        %v4758 = vadd.f32 %v4717, %v4757
        %v4759 = vpop.f32.mrb[0].mxu0
        %v4760 = vadd.f32 %v4719, %v4759
        %v4761 = vpop.f32.mrb[0].mxu0
        %v4762 = vpop.f32.mrb[0].mxu0
        %4763 = vdwg.mxu0
        %v4764 = vld [vmem:[#allocation9] sm:$0xf]
        %v4766 = vlaneseq
        %v4767 = vshrl.u32 %v4766, 7
        %v4768 = vsub.s32 0, %v4767
        %v4769 = vrot.slane %v4764, %v4768
        %v4770 = vlaneseq
        %v4771 = vshrl.u32 %v4770, 7
        %v4772 = vsub.s32 1, %v4771
        %v4773 = vrot.slane %v4764, %v4772
        %v4774 = vlaneseq
        %v4775 = vshrl.u32 %v4774, 7
        %v4776 = vsub.s32 2, %v4775
        %v4777 = vrot.slane %v4764, %v4776
        %v4778 = vlaneseq
        %v4779 = vshrl.u32 %v4778, 7
        %v4780 = vsub.s32 3, %v4779
        %v4781 = vrot.slane %v4764, %v4780
        %v4786 = vadd.f32 %v4635, %v4769
        %v4787 = vadd.f32 %v4637, %v4773
        %v4788 = vadd.f32 %v4758, %v4777
        %v4789 = vadd.f32 %v4760, %v4781
        %v4790 = vmax.f32 %v4786, 0.0
        %v4791 = vmax.f32 %v4787, 0.0
        %v4792 = vmax.f32 %v4788, 0.0
        %v4793 = vmax.f32 %v4789, 0.0
        %v4794 = vpack.c.bf16 %v4790, %v4790
        %v4795 = vpack.c.bf16 %v4791, %v4791
        %v4796 = vpack.c.bf16 %v4792, %v4792
        %v4797 = vpack.c.bf16 %v4793, %v4793
        %v4798 = vld [vmem:[#allocation10] sm:$0xf]
        %v4799 = vld [vmem:[#allocation10 + $0x4] sm:$0xf]
        %v4800 = vld [vmem:[#allocation10 + $0x8] sm:$0xf]
        %v4801 = vld [vmem:[#allocation10 + $0xc] sm:$0xf]
        %v4802 = vld [vmem:[#allocation10 + $0x10] sm:$0xf]
        %v4803 = vld [vmem:[#allocation10 + $0x14] sm:$0xf]
        %v4804 = vld [vmem:[#allocation10 + $0x18] sm:$0xf]
        %v4805 = vld [vmem:[#allocation10 + $0x1c] sm:$0xf]
        %v4806 = vld [vmem:[#allocation10 + $0x20] sm:$0xf]
        %v4807 = vld [vmem:[#allocation10 + $0x24] sm:$0xf]
        %v4808 = vld [vmem:[#allocation10 + $0x28] sm:$0xf]
        %v4809 = vld [vmem:[#allocation10 + $0x2c] sm:$0xf]
        %v4810 = vld [vmem:[#allocation10 + $0x30] sm:$0xf]
        %v4811 = vld [vmem:[#allocation10 + $0x34] sm:$0xf]
        %v4812 = vld [vmem:[#allocation10 + $0x38] sm:$0xf]
        %v4813 = vld [vmem:[#allocation10 + $0x3c] sm:$0xf]
        %v4814 = vld [vmem:[#allocation10 + $0x40] sm:$0xf]
        %v4815 = vld [vmem:[#allocation10 + $0x44] sm:$0xf]
        %v4816 = vld [vmem:[#allocation10 + $0x48] sm:$0xf]
        %v4817 = vld [vmem:[#allocation10 + $0x4c] sm:$0xf]
        %v4818 = vld [vmem:[#allocation10 + $0x50] sm:$0xf]
        %v4819 = vld [vmem:[#allocation10 + $0x54] sm:$0xf]
        %v4820 = vld [vmem:[#allocation10 + $0x58] sm:$0xf]
        %v4821 = vld [vmem:[#allocation10 + $0x5c] sm:$0xf]
        %v4822 = vld [vmem:[#allocation10 + $0x60] sm:$0xf]
        %v4823 = vld [vmem:[#allocation10 + $0x64] sm:$0xf]
        %v4824 = vld [vmem:[#allocation10 + $0x68] sm:$0xf]
        %v4825 = vld [vmem:[#allocation10 + $0x6c] sm:$0xf]
        %v4826 = vld [vmem:[#allocation10 + $0x70] sm:$0xf]
        %v4827 = vld [vmem:[#allocation10 + $0x74] sm:$0xf]
        %v4828 = vld [vmem:[#allocation10 + $0x78] sm:$0xf]
        %v4829 = vld [vmem:[#allocation10 + $0x7c] sm:$0xf]
        %v4830 = vld [vmem:[#allocation10 + $0x80] sm:$0xf]
        %v4831 = vld [vmem:[#allocation10 + $0x84] sm:$0xf]
        %v4832 = vld [vmem:[#allocation10 + $0x88] sm:$0xf]
        %v4833 = vld [vmem:[#allocation10 + $0x8c] sm:$0xf]
        %v4834 = vld [vmem:[#allocation10 + $0x90] sm:$0xf]
        %v4835 = vld [vmem:[#allocation10 + $0x94] sm:$0xf]
        %v4836 = vld [vmem:[#allocation10 + $0x98] sm:$0xf]
        %v4837 = vld [vmem:[#allocation10 + $0x9c] sm:$0xf]
        %v4838 = vld [vmem:[#allocation10 + $0xa0] sm:$0xf]
        %v4839 = vld [vmem:[#allocation10 + $0xa4] sm:$0xf]
        %v4840 = vld [vmem:[#allocation10 + $0xa8] sm:$0xf]
        %v4841 = vld [vmem:[#allocation10 + $0xac] sm:$0xf]
        %v4842 = vld [vmem:[#allocation10 + $0xb0] sm:$0xf]
        %v4843 = vld [vmem:[#allocation10 + $0xb4] sm:$0xf]
        %v4844 = vld [vmem:[#allocation10 + $0xb8] sm:$0xf]
        %v4845 = vld [vmem:[#allocation10 + $0xbc] sm:$0xf]
        %v4846 = vld [vmem:[#allocation10 + $0xc0] sm:$0xf]
        %v4847 = vld [vmem:[#allocation10 + $0xc4] sm:$0xf]
        %v4848 = vld [vmem:[#allocation10 + $0xc8] sm:$0xf]
        %v4849 = vld [vmem:[#allocation10 + $0xcc] sm:$0xf]
        %v4850 = vld [vmem:[#allocation10 + $0xd0] sm:$0xf]
        %v4851 = vld [vmem:[#allocation10 + $0xd4] sm:$0xf]
        %v4852 = vld [vmem:[#allocation10 + $0xd8] sm:$0xf]
        %v4853 = vld [vmem:[#allocation10 + $0xdc] sm:$0xf]
        %v4854 = vld [vmem:[#allocation10 + $0xe0] sm:$0xf]
        %v4855 = vld [vmem:[#allocation10 + $0xe4] sm:$0xf]
        %v4856 = vld [vmem:[#allocation10 + $0xe8] sm:$0xf]
        %v4857 = vld [vmem:[#allocation10 + $0xec] sm:$0xf]
        %v4858 = vld [vmem:[#allocation10 + $0xf0] sm:$0xf]
        %v4859 = vld [vmem:[#allocation10 + $0xf4] sm:$0xf]
        %v4860 = vld [vmem:[#allocation10 + $0xf8] sm:$0xf]
        %v4861 = vld [vmem:[#allocation10 + $0xfc] sm:$0xf]
        %v4862 = vld [vmem:[#allocation12] sm:$0x1]
        %v4864 = vlaneseq
        %v4865 = vshrl.u32 %v4864, 7
        %v4866 = vsub.s32 0, %v4865
        %v4867 = vrot.slane %v4862, %v4866
        %v4933 = vunpack.c.l.b16 %v4798
        %v4934 = vunpack.c.l.b16 %v4799
        %v4935 = vunpack.c.l.b16 %v4800
        %v4936 = vunpack.c.l.b16 %v4801
        %v4937 = vunpack.c.l.b16 %v4802
        %v4938 = vunpack.c.l.b16 %v4803
        %v4939 = vunpack.c.l.b16 %v4804
        %v4940 = vunpack.c.l.b16 %v4805
        %v4941 = vunpack.c.l.b16 %v4806
        %v4942 = vunpack.c.l.b16 %v4807
        %v4943 = vunpack.c.l.b16 %v4808
        %v4944 = vunpack.c.l.b16 %v4809
        %v4945 = vunpack.c.l.b16 %v4810
        %v4946 = vunpack.c.l.b16 %v4811
        %v4947 = vunpack.c.l.b16 %v4812
        %v4948 = vunpack.c.l.b16 %v4813
        %v4949 = vunpack.c.l.b16 %v4814
        %v4950 = vunpack.c.l.b16 %v4815
        %v4951 = vunpack.c.l.b16 %v4816
        %v4952 = vunpack.c.l.b16 %v4817
        %v4953 = vunpack.c.l.b16 %v4818
        %v4954 = vunpack.c.l.b16 %v4819
        %v4955 = vunpack.c.l.b16 %v4820
        %v4956 = vunpack.c.l.b16 %v4821
        %v4957 = vunpack.c.l.b16 %v4822
        %v4958 = vunpack.c.l.b16 %v4823
        %v4959 = vunpack.c.l.b16 %v4824
        %v4960 = vunpack.c.l.b16 %v4825
        %v4961 = vunpack.c.l.b16 %v4826
        %v4962 = vunpack.c.l.b16 %v4827
        %v4963 = vunpack.c.l.b16 %v4828
        %v4964 = vunpack.c.l.b16 %v4829
        %v4965 = vunpack.c.l.b16 %v4830
        %v4966 = vunpack.c.l.b16 %v4831
        %v4967 = vunpack.c.l.b16 %v4832
        %v4968 = vunpack.c.l.b16 %v4833
        %v4969 = vunpack.c.l.b16 %v4834
        %v4970 = vunpack.c.l.b16 %v4835
        %v4971 = vunpack.c.l.b16 %v4836
        %v4972 = vunpack.c.l.b16 %v4837
        %v4973 = vunpack.c.l.b16 %v4838
        %v4974 = vunpack.c.l.b16 %v4839
        %v4975 = vunpack.c.l.b16 %v4840
        %v4976 = vunpack.c.l.b16 %v4841
        %v4977 = vunpack.c.l.b16 %v4842
        %v4978 = vunpack.c.l.b16 %v4843
        %v4979 = vunpack.c.l.b16 %v4844
        %v4980 = vunpack.c.l.b16 %v4845
        %v4981 = vunpack.c.l.b16 %v4846
        %v4982 = vunpack.c.l.b16 %v4847
        %v4983 = vunpack.c.l.b16 %v4848
        %v4984 = vunpack.c.l.b16 %v4849
        %v4985 = vunpack.c.l.b16 %v4850
        %v4986 = vunpack.c.l.b16 %v4851
        %v4987 = vunpack.c.l.b16 %v4852
        %v4988 = vunpack.c.l.b16 %v4853
        %v4989 = vunpack.c.l.b16 %v4854
        %v4990 = vunpack.c.l.b16 %v4855
        %v4991 = vunpack.c.l.b16 %v4856
        %v4992 = vunpack.c.l.b16 %v4857
        %v4993 = vunpack.c.l.b16 %v4858
        %v4994 = vunpack.c.l.b16 %v4859
        %v4995 = vunpack.c.l.b16 %v4860
        %v4996 = vunpack.c.l.b16 %v4861
        %v4997 = vpack.c.b16 %v4934, %v4933
        %v4998 = vpack.c.b16 %v4936, %v4935
        %v4999 = vpack.c.b16 %v4938, %v4937
        %v5000 = vpack.c.b16 %v4940, %v4939
        %v5001 = vpack.c.b16 %v4942, %v4941
        %v5002 = vpack.c.b16 %v4944, %v4943
        %v5003 = vpack.c.b16 %v4946, %v4945
        %v5004 = vpack.c.b16 %v4948, %v4947
        %v5005 = vpack.c.b16 %v4950, %v4949
        %v5006 = vpack.c.b16 %v4952, %v4951
        %v5007 = vpack.c.b16 %v4954, %v4953
        %v5008 = vpack.c.b16 %v4956, %v4955
        %v5009 = vpack.c.b16 %v4958, %v4957
        %v5010 = vpack.c.b16 %v4960, %v4959
        %v5011 = vpack.c.b16 %v4962, %v4961
        %v5012 = vpack.c.b16 %v4964, %v4963
        %v5013 = vpack.c.b16 %v4966, %v4965
        %v5014 = vpack.c.b16 %v4968, %v4967
        %v5015 = vpack.c.b16 %v4970, %v4969
        %v5016 = vpack.c.b16 %v4972, %v4971
        %v5017 = vpack.c.b16 %v4974, %v4973
        %v5018 = vpack.c.b16 %v4976, %v4975
        %v5019 = vpack.c.b16 %v4978, %v4977
        %v5020 = vpack.c.b16 %v4980, %v4979
        %v5021 = vpack.c.b16 %v4982, %v4981
        %v5022 = vpack.c.b16 %v4984, %v4983
        %v5023 = vpack.c.b16 %v4986, %v4985
        %v5024 = vpack.c.b16 %v4988, %v4987
        %v5025 = vpack.c.b16 %v4990, %v4989
        %v5026 = vpack.c.b16 %v4992, %v4991
        %v5027 = vpack.c.b16 %v4994, %v4993
        %v5028 = vpack.c.b16 %v4996, %v4995
        %5061 = vmatprep.subr.bf16.mxu0 0
        %5062 = vmatpush1.bf16.msra.mxu0 %v4997
        %5063 = vmatprep.subr.bf16.mxu0 0
        %5064 = vmatpush1.bf16.msra.mxu0 %v4998
        %5065 = vmatprep.subr.bf16.mxu0 0
        %5066 = vmatpush1.bf16.msra.mxu0 %v4999
        %5067 = vmatprep.subr.bf16.mxu0 0
        %5068 = vmatpush1.bf16.msra.mxu0 %v5000
        %5069 = vmatprep.subr.bf16.mxu0 0
        %5070 = vmatpush1.bf16.msra.mxu0 %v5001
        %5071 = vmatprep.subr.bf16.mxu0 0
        %5072 = vmatpush1.bf16.msra.mxu0 %v5002
        %5073 = vmatprep.subr.bf16.mxu0 0
        %5074 = vmatpush1.bf16.msra.mxu0 %v5003
        %5075 = vmatprep.subr.bf16.mxu0 0
        %5076 = vmatpush1.bf16.msra.mxu0 %v5004
        %5077 = vmatprep.subr.bf16.mxu0 0
        %5078 = vmatpush1.bf16.msra.mxu0 %v5005
        %5079 = vmatprep.subr.bf16.mxu0 0
        %5080 = vmatpush1.bf16.msra.mxu0 %v5006
        %5081 = vmatprep.subr.bf16.mxu0 0
        %5082 = vmatpush1.bf16.msra.mxu0 %v5007
        %5083 = vmatprep.subr.bf16.mxu0 0
        %5084 = vmatpush1.bf16.msra.mxu0 %v5008
        %5085 = vmatprep.subr.bf16.mxu0 0
        %5086 = vmatpush1.bf16.msra.mxu0 %v5009
        %5087 = vmatprep.subr.bf16.mxu0 0
        %5088 = vmatpush1.bf16.msra.mxu0 %v5010
        %5089 = vmatprep.subr.bf16.mxu0 0
        %5090 = vmatpush1.bf16.msra.mxu0 %v5011
        %5091 = vmatprep.subr.bf16.mxu0 0
        %5092 = vmatpush1.bf16.msra.mxu0 %v5012
        %5093 = vmatprep.mubr.bf16.mxu0 %v4795
        %5094 = vmatmul.mubr.bf16.gmra.mrb[0].mxu0 %v4794
        %v5095 = vpop.f32.mrb[0].mxu0
        %v5096 = vadd.f32 %v4867, %v5095
        %v5097 = vpop.f32.mrb[0].mxu0
        %v5098 = vpop.f32.mrb[0].mxu0
        %v5099 = vpop.f32.mrb[0].mxu0
        %5100 = vdwg.mxu0
        %5101 = vmatprep.subr.bf16.mxu0 0
        %5102 = vmatpush1.bf16.msra.mxu0 %v5013
        %5103 = vmatprep.subr.bf16.mxu0 0
        %5104 = vmatpush1.bf16.msra.mxu0 %v5014
        %5105 = vmatprep.subr.bf16.mxu0 0
        %5106 = vmatpush1.bf16.msra.mxu0 %v5015
        %5107 = vmatprep.subr.bf16.mxu0 0
        %5108 = vmatpush1.bf16.msra.mxu0 %v5016
        %5109 = vmatprep.subr.bf16.mxu0 0
        %5110 = vmatpush1.bf16.msra.mxu0 %v5017
        %5111 = vmatprep.subr.bf16.mxu0 0
        %5112 = vmatpush1.bf16.msra.mxu0 %v5018
        %5113 = vmatprep.subr.bf16.mxu0 0
        %5114 = vmatpush1.bf16.msra.mxu0 %v5019
        %5115 = vmatprep.subr.bf16.mxu0 0
        %5116 = vmatpush1.bf16.msra.mxu0 %v5020
        %5117 = vmatprep.subr.bf16.mxu0 0
        %5118 = vmatpush1.bf16.msra.mxu0 %v5021
        %5119 = vmatprep.subr.bf16.mxu0 0
        %5120 = vmatpush1.bf16.msra.mxu0 %v5022
        %5121 = vmatprep.subr.bf16.mxu0 0
        %5122 = vmatpush1.bf16.msra.mxu0 %v5023
        %5123 = vmatprep.subr.bf16.mxu0 0
        %5124 = vmatpush1.bf16.msra.mxu0 %v5024
        %5125 = vmatprep.subr.bf16.mxu0 0
        %5126 = vmatpush1.bf16.msra.mxu0 %v5025
        %5127 = vmatprep.subr.bf16.mxu0 0
        %5128 = vmatpush1.bf16.msra.mxu0 %v5026
        %5129 = vmatprep.subr.bf16.mxu0 0
        %5130 = vmatpush1.bf16.msra.mxu0 %v5027
        %5131 = vmatprep.subr.bf16.mxu0 0
        %5132 = vmatpush1.bf16.msra.mxu0 %v5028
        %5133 = vmatprep.mubr.bf16.mxu0 %v4797
        %5134 = vmatmul.mubr.bf16.gmra.mrb[0].mxu0 %v4796
        %v5135 = vpop.f32.mrb[0].mxu0
        %v5136 = vadd.f32 %v5096, %v5135
        %v5137 = vpop.f32.mrb[0].mxu0
        %v5138 = vpop.f32.mrb[0].mxu0
        %v5139 = vpop.f32.mrb[0].mxu0
        %5140 = vdwg.mxu0
        %5141 = vmax.xlane.f32.xlu0 %v5136
        %v5142 = vpop.xlane.xlu0 %5141
        %v5143 = vsub.f32 %v5136, %v5142
        %v5144 = vmul.f32 %v5143, 1.442695
        %v5145 = vpow.pop %v5144
        %5146 = vadd.xlane.f32.xlu0 %v5145
        %v5147 = vpop.xlane.xlu0 %5146
        %v5148 = vlog2.pop %v5147
        %v5149 = vmul.f32 %v5148, 0.6931472
        %v5150 = vadd.f32 %v5142, %v5149
        %v5151 = vsub.f32 %v5136, %v5150
        %5152 = vst [vmem:[%s446] sm:$0xff] %v5151
        %p5153 = scmp.lt.s32.totalorder %s24, 1
        %s5154 = scalar_select %p5153, %s24, 1
        %s5155 = smul.addr %s5154, 8
        %s5156 = scalar_lea.vmem %s9, %s5155
        // Predicated region
        $region85: #{bert_arch_forward.1} parent=55 // pred_check
          %p5157 = pneg %p241
        $region86: #{bert_arch_forward.1} parent=55 // pred_check_branch
          %5159 = sbr.rel (%p5157) target = $region88
        $region87: #{bert_arch_forward.1} parent=55 // pred_region
          _
        $region88: #{bert_arch_forward.1} parent=55 // pred_fallthru
          _
      $region56: #{bert_arch_forward.1} parent=5 // pred_fallthru
        _
      %p5160 = scmp.le.s32.totalorder 2, %s19
      // Predicated region
      $region89: #{bert_arch_forward.1} parent=5 // pred_check
        %p5161 = pneg %p5160
      $region90: #{bert_arch_forward.1} parent=5 // pred_check_branch
        %5163 = sbr.rel (%p5161) target = $region92
      $region91: #{bert_arch_forward.1} parent=5 // pred_region
        %s5164 = ssub.s32 %s19, 2
        // Predicated region
        $region93: #{bert_arch_forward.1} parent=91 // pred_check
          %p5165 = pneg %p247
        $region94: #{bert_arch_forward.1} parent=91 // pred_check_branch
          %5167 = sbr.rel (%p5165) target = $region96
        $region95: #{bert_arch_forward.1} parent=91 // pred_region
          %p5168 = scmp.lt.s32.totalorder %s25, 1
          %s5169 = scalar_select %p5168, %s25, 1
          %s5170 = smul.addr %s5169, 8
          %s5171 = scalar_lea.vmem %s9, %s5170
        $region96: #{bert_arch_forward.1} parent=91 // pred_fallthru
          _
      $region92: #{bert_arch_forward.1} parent=5 // pred_fallthru
        _
    $region6: #{bert_arch_forward.1} parent=1 // loop_footer
      %s23 = sadd.s32 1, %s19
    $region7: #{bert_arch_forward.1} parent=1 // loop_footer_branch
      %18 = sbr.rel target = $region3
    $region8: #{bert_arch_forward.1} parent=1 // loop_exit
      _
    %5172 = vsyncpa [#allocation3], 1
    %s5173 = scalar_lea.sflag [#allocation3], 1
    %5174 = vsyncpa %s5173, 1
    %5175 = vsyncpa [#allocation5], 1
    %5176 = vsyncpa [#allocation8], 1
    %5177 = vsyncpa [#allocation11], 1

</llo_original>
